<compile_context>
chip_gen: v5e
topology: v5e:2x2
jax: 0.10.0
libtpu: 0.0.40
codegen_flags: <defaults>
</compile_context>

<pallas_src>
import math

import jax
import jax.numpy as jnp
import numpy as np
from jax.experimental import pallas as pl
from jax.experimental.pallas import tpu as pltpu


# --------------------------------------------------------------------------- model config
def build_layers(tensor_height, ndf=4, mdf=2, input_nc=1, sigmoid=False):
    """Replicates TimbralClassifier.__init__ layer construction."""
    layers = []
    mult = ndf
    layers.append(dict(cin=input_nc, cout=mult, k=4, stride=(1, 1),
                       bias=False, relu=True, gain=math.sqrt(2.0)))
    height = tensor_height - 3
    while height > 4:
        next_mult = mult * mdf
        conv_size = 4 if height % 2 == 0 else 3
        layers.append(dict(cin=mult, cout=next_mult, k=conv_size, stride=(2, 1),
                           bias=False, relu=True, gain=math.sqrt(2.0)))
        height = int((height - conv_size) / 2 + 1)
        mult = next_mult
    # calculate_gain('linear') == calculate_gain('sigmoid') == 1.0
    layers.append(dict(cin=mult, cout=1, k=height, stride=(1, 1),
                       bias=True, relu=False, gain=1.0))
    return layers


def init_params(key, layers):
    """Deterministic xavier_uniform weights (PyTorch-style fan computation)."""
    params = []
    for layer in layers:
        cin, cout, k = layer["cin"], layer["cout"], layer["k"]
        key, wk, bk = jax.random.split(key, 3)
        fan_in = cin * k * k
        fan_out = cout * k * k
        bound = layer["gain"] * math.sqrt(6.0 / (fan_in + fan_out))
        w = jax.random.uniform(wk, (cout, cin, k, k), jnp.float32, -bound, bound)
        if layer["bias"]:
            bb = 1.0 / math.sqrt(fan_in)
            b = jax.random.uniform(bk, (cout,), jnp.float32, -bb, bb)
        else:
            b = jnp.zeros((cout,), jnp.float32)
        params.append((w, b))
    return params


def compute_geometry(layers, height, width):
    geom = []
    h, w = height, width
    for layer in layers:
        k = layer["k"]
        sh, sw = layer["stride"]
        ho = (h - k) // sh + 1
        wo = (w - k) // sw + 1
        geom.append(dict(H_in=h, W_in=w, Ho=ho, Wo=wo))
        h, w = ho, wo
    return geom


def packing_info(layers):
    """Static row offsets of each (k*k*cin, cout) weight slab in the packed buffer."""
    conv_layers = layers[:-1]
    max_cout = max(l["cout"] for l in conv_layers)
    offsets, off = [], 0
    for l in conv_layers:
        offsets.append(off)
        kkc = l["k"] * l["k"] * l["cin"]
        off += ((kkc + 15) // 16) * 16          # 16-row aligned blocks (bf16/f32 friendly)
    return offsets, off, max_cout


def prepare_params(params, layers, mxu_dtype=jnp.bfloat16):
    """One-time host-side weight re-layout + packing.

    All layers but the last are packed as (k*k*cin, cout) slabs (tap order dh, dw, ci;
    zero padded to a common max_cout, 16-row-aligned offsets) into a SINGLE buffer,
    pre-cast to the MXU operand dtype.  The last layer (cout == 1) is kept as a
    lane-major (1, 1, k*k*cin) f32 vector, its bias as an SMEM (1, 1) scalar.
    """
    offsets, total_rows, max_cout = packing_info(layers)
    w_packed = np.zeros((total_rows, max_cout), np.float32)
    for (w, _b), layer, off in zip(params[:-1], layers[:-1], offsets):
        k, cin, cout = layer["k"], layer["cin"], layer["cout"]
        slab = np.transpose(np.asarray(w), (2, 3, 1, 0)).reshape(k * k * cin, cout)
        w_packed[off:off + k * k * cin, :cout] = slab
    w_last, b_last = params[-1]
    kl, cinl = layers[-1]["k"], layers[-1]["cin"]
    w_last = np.transpose(np.asarray(w_last), (2, 3, 1, 0)).reshape(1, 1, kl * kl * cinl)
    return (jnp.asarray(w_packed, dtype=mxu_dtype),
            jnp.asarray(w_last, dtype=jnp.float32),
            jnp.asarray(np.asarray(b_last).reshape(1, 1), dtype=jnp.float32))


# --------------------------------------------------------------------------- in-kernel im2col
def _im2col(act, layer, g):
    """(H_in, W_in, cin) -> (Ho, Wo, k*k*cin) patch slab, tap order (dh, dw, ci).

    Uses only leading-dim slices/reshapes, sublane slices and a lane-axis concat.
    Stride-2 row selection is a ONE-TIME even/odd split reused by every row tap
    (replaces the k per-tap reshape+index relayouts of the previous version).
    """
    k = layer["k"]
    sh, sw = layer["stride"]
    cin = layer["cin"]
    assert sw == 1, "TimbralClassifier only uses width-stride 1"
    assert sh in (1, 2), "row selection implemented for height-stride 1 or 2"
    ho, wo, h_in, w_in = g["Ho"], g["Wo"], g["H_in"], g["W_in"]

    if sh == 2:
        h_pairs = (h_in + 1) // 2
        # Pad one (never-selected) row when H_in is odd so the even/odd split is exact.
        act_p = act if h_in % 2 == 0 else jnp.concatenate([act, act[-1:]], axis=0)
        act_p = act_p.reshape(h_pairs, 2, w_in, cin)
        parity = (act_p[:, 0], act_p[:, 1])              # even rows / odd rows

    taps = []
    for dh in range(k):
        if sh == 1:
            rows = act[dh:dh + ho]                       # (ho, W_in, cin)
        else:
            rows = parity[dh % 2][dh // 2:dh // 2 + ho]  # rows dh, dh+2, ...
        for dw in range(k):
            taps.append(rows[:, dw:dw + wo, :])          # (ho, wo, cin)
    return jnp.concatenate(taps, axis=-1)                # (ho, wo, k*k*cin)


# --------------------------------------------------------------------------- fused forward
def make_forward(layers, batch, height, width, mxu_dtype=jnp.bfloat16):
    """Builds a jitted forward: ONE pallas_call runs the whole network per batch element."""
    geom = compute_geometry(layers, height, width)
    offsets, total_rows, max_cout = packing_info(layers)
    ho_f, wo_f = geom[-1]["Ho"], geom[-1]["Wo"]
    cin0 = layers[0]["cin"]
    k_last = layers[-1]["k"]
    kkc_last = k_last * k_last * layers[-1]["cin"]

    # Structural assumptions baked into the kernel (guaranteed by build_layers).
    assert layers[-1]["cout"] == 1 and layers[-1]["bias"] and not layers[-1]["relu"]
    assert ho_f == 1                                     # last conv spans the full height
    for l in layers[:-1]:
        assert l["relu"] and not l["bias"]

    conv_layers = list(zip(layers[:-1], geom[:-1], offsets))
    last_layer, last_geom = layers[-1], geom[-1]

    def kernel(x_ref, w_ref, wlast_ref, b_ref, o_ref):
        act = x_ref[0]                                   # (H, W, cin0) f32, stays on-chip

        # --- conv + ReLU layers: im2col slab + ONE MXU matmul per layer ----------------
        for layer, g, off in conv_layers:
            k, cin, cout = layer["k"], layer["cin"], layer["cout"]
            ho, wo = g["Ho"], g["Wo"]
            kkc = k * k * cin
            # Cast hoisted: once per layer, before the tap loop.
            patches = _im2col(act.astype(mxu_dtype), layer, g)       # (ho, wo, kkc)
            lhs = patches.reshape(ho * wo, kkc)                      # fold (ho, wo) -> M
            rhs = w_ref[off:off + kkc, :cout]                        # pre-packed slab
            out2d = jnp.dot(lhs, rhs, preferred_element_type=jnp.float32)
            out2d = jnp.maximum(out2d, 0.0)                          # ReLU in f32 (VPU)
            act = out2d.reshape(ho, wo, cout)                        # VMEM/vreg resident

        # --- last layer (cout == 1, Ho == 1): f32 multiply + lane reduce + bias --------
        patches = _im2col(act, last_layer, last_geom)                # (1, Wo_f, kkc_last)
        out_hw = jnp.sum(patches * wlast_ref[...], axis=-1)          # (1, Wo_f) lane-dense
        out_hw = out_hw + b_ref[0, 0]                                # scalar bias (SMEM)
        o_ref[0] = out_hw.astype(o_ref.dtype)                        # unmasked lane store

    # TODO(synk): for input_nc == 1 the (1, H, W, 1) input block is lane-sparse; for the
    # real 1025-wide config pass a lane-dense (B, H, W) layout + width tiling instead.
    in_specs = [
        pl.BlockSpec((1, height, width, cin0), lambda b: (b, 0, 0, 0)),
        pl.BlockSpec((total_rows, max_cout), lambda b: (0, 0)),      # packed conv weights
        pl.BlockSpec((1, 1, kkc_last), lambda b: (0, 0, 0)),         # last-layer weight row
        pl.BlockSpec(memory_space=pltpu.MemorySpace.SMEM),           # (1, 1) bias scalar
    ]

    pallas_fn = pl.pallas_call(
        kernel,
        out_shape=jax.ShapeDtypeStruct((batch, ho_f, wo_f), jnp.float32),
        grid=(batch,),
        in_specs=in_specs,
        out_specs=pl.BlockSpec((1, ho_f, wo_f), lambda b: (b, 0, 0)),
        compiler_params=pltpu.CompilerParams(dimension_semantics=("parallel",)),
    )

    def forward(x, w_packed, w_last, bias_last):
        if x.ndim < 4:
            x = x[:, None, :, :]
        x_nhwc = jnp.transpose(x, (0, 2, 3, 1)).astype(jnp.float32)  # NCHW -> NHWC
        out_bhw = pallas_fn(x_nhwc, w_packed, w_last, bias_last)     # (B, Ho_f, Wo_f)
        # sigmoid=False, flatten=False module defaults -> only the NCHW reshape remains.
        return out_bhw[:, None, :, :]                                # (B, 1, Ho_f, Wo_f)

    return jax.jit(forward)


# --------------------------------------------------------------------------- pure-JAX reference
def reference_forward(x, params, layers):
    if x.ndim < 4:
        x = x[:, None, :, :]
    for layer, (w, b) in zip(layers, params):
        x = jax.lax.conv_general_dilated(
            x, w, window_strides=layer["stride"], padding="VALID",
            dimension_numbers=("NCHW", "OIHW", "NCHW"),
            precision=jax.lax.Precision.HIGHEST)
        x = x + b.reshape(1, -1, 1, 1)
        if layer["relu"]:
            x = jnp.maximum(x, 0.0)
    return x


# --------------------------------------------------------------------------- main
if __name__ == "__main__":
    TENSOR_HEIGHT = 16
    TENSOR_WIDTH = 16
    N_BATCH = 2

    layers = build_layers(TENSOR_HEIGHT)   # 1->4 (k4) / 4->8 (k3,s(2,1)) / 8->16 (k4,s(2,1)) / 16->1 (k2)
    key = jax.random.PRNGKey(0)
    key, pkey = jax.random.split(key)
    params = init_params(pkey, layers)
    x = jax.random.normal(key, (N_BATCH, 1, TENSOR_HEIGHT, TENSOR_WIDTH), jnp.float32)

    ref = jax.block_until_ready(reference_forward(x, params, layers))

    # f32 MXU-operand path: tight check against the Precision.HIGHEST XLA conv reference.
    w32, wl32, b32 = prepare_params(params, layers, mxu_dtype=jnp.float32)
    fwd_f32 = make_forward(layers, N_BATCH, TENSOR_HEIGHT, TENSOR_WIDTH, mxu_dtype=jnp.float32)
    out_f32 = jax.block_until_ready(fwd_f32(x, w32, wl32, b32))
    assert out_f32.shape == ref.shape, (out_f32.shape, ref.shape)
    np.testing.assert_allclose(np.asarray(out_f32), np.asarray(ref), atol=1e-4, rtol=1e-4)

    # bf16 MXU-operand path (f32 accumulate) -- the recommended default on v6e/v7x --
    # now accuracy-checked against the reference (not just a finiteness check).
    wb16, wlb16, bb16 = prepare_params(params, layers, mxu_dtype=jnp.bfloat16)
    fwd_bf16 = make_forward(layers, N_BATCH, TENSOR_HEIGHT, TENSOR_WIDTH, mxu_dtype=jnp.bfloat16)
    out_bf16 = jax.block_until_ready(fwd_bf16(x, wb16, wlb16, bb16))
    assert out_bf16.shape == ref.shape
    np.testing.assert_allclose(np.asarray(out_bf16), np.asarray(ref), atol=5e-2, rtol=5e-2)

    print("KERNEL_OK")
</pallas_src>

<mosaic_0001>
module attributes {stable_mosaic.version = 11 : i64} {
  func.func @kernel(%arg0: i32, %arg1: memref<1x16x16x1xf32, #tpu.memory_space<vmem>>, %arg2: memref<192x16xf32, #tpu.memory_space<vmem>>, %arg3: memref<1x1x64xf32, #tpu.memory_space<vmem>>, %arg4: memref<1x1xf32, #tpu.memory_space<smem>>, %arg5: memref<1x1x7xf32, #tpu.memory_space<vmem>>) attributes {dimension_semantics = [#tpu.dimension_semantics<parallel>], iteration_bounds = array<i64: 2>, scalar_prefetch = 0 : i64, scratch_operands = 0 : i64, tpu.core_type = #tpu.core_type<tc>, window_params = [{transform_indices = @transform_0, window_bounds = array<i64: 1, 16, 16, 1>}, {pipeline_mode = #tpu.pipeline_mode<synchronous>, transform_indices = @transform_1, window_bounds = array<i64: 192, 16>}, {pipeline_mode = #tpu.pipeline_mode<synchronous>, transform_indices = @transform_2, window_bounds = array<i64: 1, 1, 64>}, {transform_indices = @transform_3, window_bounds = array<i64: 1, 1>}, {transform_indices = @transform_4, window_bounds = array<i64: 1, 1, 7>}]} {
    %c0 = arith.constant 0 : index
    %c0_0 = arith.constant 0 : index
    %c0_1 = arith.constant 0 : index
    %c0_2 = arith.constant 0 : index
    %0 = vector.load %arg1[%c0, %c0_0, %c0_1, %c0_2] : memref<1x16x16x1xf32, #tpu.memory_space<vmem>>, vector<1x16x16x1xf32>
    %1 = vector.shape_cast %0 : vector<1x16x16x1xf32> to vector<16x16x1xf32>
    %2 = vector.extract_strided_slice %1 {offsets = [0, 0, 0], sizes = [13, 16, 1], strides = [1, 1, 1]} : vector<16x16x1xf32> to vector<13x16x1xf32>
    %3 = vector.extract_strided_slice %2 {offsets = [0, 0, 0], sizes = [13, 13, 1], strides = [1, 1, 1]} : vector<13x16x1xf32> to vector<13x13x1xf32>
    %4 = vector.extract_strided_slice %2 {offsets = [0, 1, 0], sizes = [13, 13, 1], strides = [1, 1, 1]} : vector<13x16x1xf32> to vector<13x13x1xf32>
    %5 = vector.extract_strided_slice %2 {offsets = [0, 2, 0], sizes = [13, 13, 1], strides = [1, 1, 1]} : vector<13x16x1xf32> to vector<13x13x1xf32>
    %6 = vector.extract_strided_slice %2 {offsets = [0, 3, 0], sizes = [13, 13, 1], strides = [1, 1, 1]} : vector<13x16x1xf32> to vector<13x13x1xf32>
    %7 = vector.extract_strided_slice %1 {offsets = [1, 0, 0], sizes = [13, 16, 1], strides = [1, 1, 1]} : vector<16x16x1xf32> to vector<13x16x1xf32>
    %8 = vector.extract_strided_slice %7 {offsets = [0, 0, 0], sizes = [13, 13, 1], strides = [1, 1, 1]} : vector<13x16x1xf32> to vector<13x13x1xf32>
    %9 = vector.extract_strided_slice %7 {offsets = [0, 1, 0], sizes = [13, 13, 1], strides = [1, 1, 1]} : vector<13x16x1xf32> to vector<13x13x1xf32>
    %10 = vector.extract_strided_slice %7 {offsets = [0, 2, 0], sizes = [13, 13, 1], strides = [1, 1, 1]} : vector<13x16x1xf32> to vector<13x13x1xf32>
    %11 = vector.extract_strided_slice %7 {offsets = [0, 3, 0], sizes = [13, 13, 1], strides = [1, 1, 1]} : vector<13x16x1xf32> to vector<13x13x1xf32>
    %12 = vector.extract_strided_slice %1 {offsets = [2, 0, 0], sizes = [13, 16, 1], strides = [1, 1, 1]} : vector<16x16x1xf32> to vector<13x16x1xf32>
    %13 = vector.extract_strided_slice %12 {offsets = [0, 0, 0], sizes = [13, 13, 1], strides = [1, 1, 1]} : vector<13x16x1xf32> to vector<13x13x1xf32>
    %14 = vector.extract_strided_slice %12 {offsets = [0, 1, 0], sizes = [13, 13, 1], strides = [1, 1, 1]} : vector<13x16x1xf32> to vector<13x13x1xf32>
    %15 = vector.extract_strided_slice %12 {offsets = [0, 2, 0], sizes = [13, 13, 1], strides = [1, 1, 1]} : vector<13x16x1xf32> to vector<13x13x1xf32>
    %16 = vector.extract_strided_slice %12 {offsets = [0, 3, 0], sizes = [13, 13, 1], strides = [1, 1, 1]} : vector<13x16x1xf32> to vector<13x13x1xf32>
    %17 = vector.extract_strided_slice %1 {offsets = [3, 0, 0], sizes = [13, 16, 1], strides = [1, 1, 1]} : vector<16x16x1xf32> to vector<13x16x1xf32>
    %18 = vector.extract_strided_slice %17 {offsets = [0, 0, 0], sizes = [13, 13, 1], strides = [1, 1, 1]} : vector<13x16x1xf32> to vector<13x13x1xf32>
    %19 = vector.extract_strided_slice %17 {offsets = [0, 1, 0], sizes = [13, 13, 1], strides = [1, 1, 1]} : vector<13x16x1xf32> to vector<13x13x1xf32>
    %20 = vector.extract_strided_slice %17 {offsets = [0, 2, 0], sizes = [13, 13, 1], strides = [1, 1, 1]} : vector<13x16x1xf32> to vector<13x13x1xf32>
    %21 = vector.extract_strided_slice %17 {offsets = [0, 3, 0], sizes = [13, 13, 1], strides = [1, 1, 1]} : vector<13x16x1xf32> to vector<13x13x1xf32>
    %22 = tpu.concatenate %3, %4, %5, %6, %8, %9, %10, %11, %13, %14, %15, %16, %18, %19, %20, %21 in 2 : vector<13x13x1xf32>, vector<13x13x1xf32>, vector<13x13x1xf32>, vector<13x13x1xf32>, vector<13x13x1xf32>, vector<13x13x1xf32>, vector<13x13x1xf32>, vector<13x13x1xf32>, vector<13x13x1xf32>, vector<13x13x1xf32>, vector<13x13x1xf32>, vector<13x13x1xf32>, vector<13x13x1xf32>, vector<13x13x1xf32>, vector<13x13x1xf32>, vector<13x13x1xf32> -> vector<13x13x16xf32>
    %23 = vector.shape_cast %22 : vector<13x13x16xf32> to vector<169x16xf32>
    %c0_3 = arith.constant 0 : index
    %c0_4 = arith.constant 0 : index
    %24 = vector.load %arg2[%c0_3, %c0_4] : memref<192x16xf32, #tpu.memory_space<vmem>>, vector<16x4xf32>
    %cst = arith.constant dense<0.000000e+00> : vector<169x4xf32>
    %25 = tpu.matmul %23, %24, %cst {dimension_numbers = #tpu.dot_dimension_numbers<[1], [0], [0], [1], [0, 0, 1, 1], [], []>} : vector<169x16xf32>, vector<16x4xf32>, vector<169x4xf32> -> vector<169x4xf32>
    %cst_5 = arith.constant 0.000000e+00 : f32
    %26 = vector.broadcast %cst_5 : f32 to vector<169x4xf32>
    %27 = arith.maximumf %25, %26 : vector<169x4xf32>
    %28 = vector.shape_cast %27 : vector<169x4xf32> to vector<13x13x4xf32>
    %29 = vector.extract_strided_slice %28 {offsets = [12, 0, 0], sizes = [1, 13, 4], strides = [1, 1, 1]} : vector<13x13x4xf32> to vector<1x13x4xf32>
    %30 = tpu.concatenate %28, %29 in 0 : vector<13x13x4xf32>, vector<1x13x4xf32> -> vector<14x13x4xf32>
    %31 = vector.shape_cast %30 : vector<14x13x4xf32> to vector<7x2x13x4xf32>
    %32 = vector.extract_strided_slice %31 {offsets = [0, 0, 0, 0], sizes = [7, 1, 13, 4], strides = [1, 1, 1, 1]} : vector<7x2x13x4xf32> to vector<7x1x13x4xf32>
    %33 = vector.shape_cast %32 : vector<7x1x13x4xf32> to vector<7x13x4xf32>
    %34 = vector.extract_strided_slice %31 {offsets = [0, 1, 0, 0], sizes = [7, 1, 13, 4], strides = [1, 1, 1, 1]} : vector<7x2x13x4xf32> to vector<7x1x13x4xf32>
    %35 = vector.shape_cast %34 : vector<7x1x13x4xf32> to vector<7x13x4xf32>
    %36 = vector.extract_strided_slice %33 {offsets = [0, 0, 0], sizes = [6, 13, 4], strides = [1, 1, 1]} : vector<7x13x4xf32> to vector<6x13x4xf32>
    %37 = vector.extract_strided_slice %36 {offsets = [0, 0, 0], sizes = [6, 11, 4], strides = [1, 1, 1]} : vector<6x13x4xf32> to vector<6x11x4xf32>
    %38 = vector.extract_strided_slice %36 {offsets = [0, 1, 0], sizes = [6, 11, 4], strides = [1, 1, 1]} : vector<6x13x4xf32> to vector<6x11x4xf32>
    %39 = vector.extract_strided_slice %36 {offsets = [0, 2, 0], sizes = [6, 11, 4], strides = [1, 1, 1]} : vector<6x13x4xf32> to vector<6x11x4xf32>
    %40 = vector.extract_strided_slice %35 {offsets = [0, 0, 0], sizes = [6, 13, 4], strides = [1, 1, 1]} : vector<7x13x4xf32> to vector<6x13x4xf32>
    %41 = vector.extract_strided_slice %40 {offsets = [0, 0, 0], sizes = [6, 11, 4], strides = [1, 1, 1]} : vector<6x13x4xf32> to vector<6x11x4xf32>
    %42 = vector.extract_strided_slice %40 {offsets = [0, 1, 0], sizes = [6, 11, 4], strides = [1, 1, 1]} : vector<6x13x4xf32> to vector<6x11x4xf32>
    %43 = vector.extract_strided_slice %40 {offsets = [0, 2, 0], sizes = [6, 11, 4], strides = [1, 1, 1]} : vector<6x13x4xf32> to vector<6x11x4xf32>
    %44 = vector.extract_strided_slice %33 {offsets = [1, 0, 0], sizes = [6, 13, 4], strides = [1, 1, 1]} : vector<7x13x4xf32> to vector<6x13x4xf32>
    %45 = vector.extract_strided_slice %44 {offsets = [0, 0, 0], sizes = [6, 11, 4], strides = [1, 1, 1]} : vector<6x13x4xf32> to vector<6x11x4xf32>
    %46 = vector.extract_strided_slice %44 {offsets = [0, 1, 0], sizes = [6, 11, 4], strides = [1, 1, 1]} : vector<6x13x4xf32> to vector<6x11x4xf32>
    %47 = vector.extract_strided_slice %44 {offsets = [0, 2, 0], sizes = [6, 11, 4], strides = [1, 1, 1]} : vector<6x13x4xf32> to vector<6x11x4xf32>
    %48 = tpu.concatenate %37, %38, %39, %41, %42, %43, %45, %46, %47 in 2 : vector<6x11x4xf32>, vector<6x11x4xf32>, vector<6x11x4xf32>, vector<6x11x4xf32>, vector<6x11x4xf32>, vector<6x11x4xf32>, vector<6x11x4xf32>, vector<6x11x4xf32>, vector<6x11x4xf32> -> vector<6x11x36xf32>
    %49 = vector.shape_cast %48 : vector<6x11x36xf32> to vector<66x36xf32>
    %c16 = arith.constant 16 : index
    %c0_6 = arith.constant 0 : index
    %50 = vector.load %arg2[%c16, %c0_6] : memref<192x16xf32, #tpu.memory_space<vmem>>, vector<36x8xf32>
    %cst_7 = arith.constant dense<0.000000e+00> : vector<66x8xf32>
    %51 = tpu.matmul %49, %50, %cst_7 {dimension_numbers = #tpu.dot_dimension_numbers<[1], [0], [0], [1], [0, 0, 1, 1], [], []>} : vector<66x36xf32>, vector<36x8xf32>, vector<66x8xf32> -> vector<66x8xf32>
    %cst_8 = arith.constant 0.000000e+00 : f32
    %52 = vector.broadcast %cst_8 : f32 to vector<66x8xf32>
    %53 = arith.maximumf %51, %52 : vector<66x8xf32>
    %54 = vector.shape_cast %53 : vector<66x8xf32> to vector<6x11x8xf32>
    %55 = vector.shape_cast %54 : vector<6x11x8xf32> to vector<3x2x11x8xf32>
    %56 = vector.extract_strided_slice %55 {offsets = [0, 0, 0, 0], sizes = [3, 1, 11, 8], strides = [1, 1, 1, 1]} : vector<3x2x11x8xf32> to vector<3x1x11x8xf32>
    %57 = vector.shape_cast %56 : vector<3x1x11x8xf32> to vector<3x11x8xf32>
    %58 = vector.extract_strided_slice %55 {offsets = [0, 1, 0, 0], sizes = [3, 1, 11, 8], strides = [1, 1, 1, 1]} : vector<3x2x11x8xf32> to vector<3x1x11x8xf32>
    %59 = vector.shape_cast %58 : vector<3x1x11x8xf32> to vector<3x11x8xf32>
    %60 = vector.extract_strided_slice %57 {offsets = [0, 0, 0], sizes = [2, 11, 8], strides = [1, 1, 1]} : vector<3x11x8xf32> to vector<2x11x8xf32>
    %61 = vector.extract_strided_slice %60 {offsets = [0, 0, 0], sizes = [2, 8, 8], strides = [1, 1, 1]} : vector<2x11x8xf32> to vector<2x8x8xf32>
    %62 = vector.extract_strided_slice %60 {offsets = [0, 1, 0], sizes = [2, 8, 8], strides = [1, 1, 1]} : vector<2x11x8xf32> to vector<2x8x8xf32>
    %63 = vector.extract_strided_slice %60 {offsets = [0, 2, 0], sizes = [2, 8, 8], strides = [1, 1, 1]} : vector<2x11x8xf32> to vector<2x8x8xf32>
    %64 = vector.extract_strided_slice %60 {offsets = [0, 3, 0], sizes = [2, 8, 8], strides = [1, 1, 1]} : vector<2x11x8xf32> to vector<2x8x8xf32>
    %65 = vector.extract_strided_slice %59 {offsets = [0, 0, 0], sizes = [2, 11, 8], strides = [1, 1, 1]} : vector<3x11x8xf32> to vector<2x11x8xf32>
    %66 = vector.extract_strided_slice %65 {offsets = [0, 0, 0], sizes = [2, 8, 8], strides = [1, 1, 1]} : vector<2x11x8xf32> to vector<2x8x8xf32>
    %67 = vector.extract_strided_slice %65 {offsets = [0, 1, 0], sizes = [2, 8, 8], strides = [1, 1, 1]} : vector<2x11x8xf32> to vector<2x8x8xf32>
    %68 = vector.extract_strided_slice %65 {offsets = [0, 2, 0], sizes = [2, 8, 8], strides = [1, 1, 1]} : vector<2x11x8xf32> to vector<2x8x8xf32>
    %69 = vector.extract_strided_slice %65 {offsets = [0, 3, 0], sizes = [2, 8, 8], strides = [1, 1, 1]} : vector<2x11x8xf32> to vector<2x8x8xf32>
    %70 = vector.extract_strided_slice %57 {offsets = [1, 0, 0], sizes = [2, 11, 8], strides = [1, 1, 1]} : vector<3x11x8xf32> to vector<2x11x8xf32>
    %71 = vector.extract_strided_slice %70 {offsets = [0, 0, 0], sizes = [2, 8, 8], strides = [1, 1, 1]} : vector<2x11x8xf32> to vector<2x8x8xf32>
    %72 = vector.extract_strided_slice %70 {offsets = [0, 1, 0], sizes = [2, 8, 8], strides = [1, 1, 1]} : vector<2x11x8xf32> to vector<2x8x8xf32>
    %73 = vector.extract_strided_slice %70 {offsets = [0, 2, 0], sizes = [2, 8, 8], strides = [1, 1, 1]} : vector<2x11x8xf32> to vector<2x8x8xf32>
    %74 = vector.extract_strided_slice %70 {offsets = [0, 3, 0], sizes = [2, 8, 8], strides = [1, 1, 1]} : vector<2x11x8xf32> to vector<2x8x8xf32>
    %75 = vector.extract_strided_slice %59 {offsets = [1, 0, 0], sizes = [2, 11, 8], strides = [1, 1, 1]} : vector<3x11x8xf32> to vector<2x11x8xf32>
    %76 = vector.extract_strided_slice %75 {offsets = [0, 0, 0], sizes = [2, 8, 8], strides = [1, 1, 1]} : vector<2x11x8xf32> to vector<2x8x8xf32>
    %77 = vector.extract_strided_slice %75 {offsets = [0, 1, 0], sizes = [2, 8, 8], strides = [1, 1, 1]} : vector<2x11x8xf32> to vector<2x8x8xf32>
    %78 = vector.extract_strided_slice %75 {offsets = [0, 2, 0], sizes = [2, 8, 8], strides = [1, 1, 1]} : vector<2x11x8xf32> to vector<2x8x8xf32>
    %79 = vector.extract_strided_slice %75 {offsets = [0, 3, 0], sizes = [2, 8, 8], strides = [1, 1, 1]} : vector<2x11x8xf32> to vector<2x8x8xf32>
    %80 = tpu.concatenate %61, %62, %63, %64, %66, %67, %68, %69, %71, %72, %73, %74, %76, %77, %78, %79 in 2 : vector<2x8x8xf32>, vector<2x8x8xf32>, vector<2x8x8xf32>, vector<2x8x8xf32>, vector<2x8x8xf32>, vector<2x8x8xf32>, vector<2x8x8xf32>, vector<2x8x8xf32>, vector<2x8x8xf32>, vector<2x8x8xf32>, vector<2x8x8xf32>, vector<2x8x8xf32>, vector<2x8x8xf32>, vector<2x8x8xf32>, vector<2x8x8xf32>, vector<2x8x8xf32> -> vector<2x8x128xf32>
    %81 = vector.shape_cast %80 : vector<2x8x128xf32> to vector<16x128xf32>
    %c64 = arith.constant 64 : index
    %c0_9 = arith.constant 0 : index
    %82 = vector.load %arg2[%c64, %c0_9] : memref<192x16xf32, #tpu.memory_space<vmem>>, vector<128x16xf32>
    %cst_10 = arith.constant dense<0.000000e+00> : vector<16x16xf32>
    %83 = tpu.matmul %81, %82, %cst_10 {dimension_numbers = #tpu.dot_dimension_numbers<[1], [0], [0], [1], [0, 0, 1, 1], [], []>} : vector<16x128xf32>, vector<128x16xf32>, vector<16x16xf32> -> vector<16x16xf32>
    %cst_11 = arith.constant 0.000000e+00 : f32
    %84 = vector.broadcast %cst_11 : f32 to vector<16x16xf32>
    %85 = arith.maximumf %83, %84 : vector<16x16xf32>
    %86 = vector.shape_cast %85 : vector<16x16xf32> to vector<2x8x16xf32>
    %87 = vector.extract_strided_slice %86 {offsets = [0, 0, 0], sizes = [1, 8, 16], strides = [1, 1, 1]} : vector<2x8x16xf32> to vector<1x8x16xf32>
    %88 = vector.extract_strided_slice %87 {offsets = [0, 0, 0], sizes = [1, 7, 16], strides = [1, 1, 1]} : vector<1x8x16xf32> to vector<1x7x16xf32>
    %89 = vector.extract_strided_slice %87 {offsets = [0, 1, 0], sizes = [1, 7, 16], strides = [1, 1, 1]} : vector<1x8x16xf32> to vector<1x7x16xf32>
    %90 = vector.extract_strided_slice %86 {offsets = [1, 0, 0], sizes = [1, 8, 16], strides = [1, 1, 1]} : vector<2x8x16xf32> to vector<1x8x16xf32>
    %91 = vector.extract_strided_slice %90 {offsets = [0, 0, 0], sizes = [1, 7, 16], strides = [1, 1, 1]} : vector<1x8x16xf32> to vector<1x7x16xf32>
    %92 = vector.extract_strided_slice %90 {offsets = [0, 1, 0], sizes = [1, 7, 16], strides = [1, 1, 1]} : vector<1x8x16xf32> to vector<1x7x16xf32>
    %93 = tpu.concatenate %88, %89, %91, %92 in 2 : vector<1x7x16xf32>, vector<1x7x16xf32>, vector<1x7x16xf32>, vector<1x7x16xf32> -> vector<1x7x64xf32>
    %c0_12 = arith.constant 0 : index
    %c0_13 = arith.constant 0 : index
    %c0_14 = arith.constant 0 : index
    %94 = vector.load %arg3[%c0_12, %c0_13, %c0_14] : memref<1x1x64xf32, #tpu.memory_space<vmem>>, vector<1x1x64xf32>
    %95 = vector.broadcast %94 : vector<1x1x64xf32> to vector<1x7x64xf32>
    %96 = arith.mulf %93, %95 : vector<1x7x64xf32>
    %cst_15 = arith.constant dense<0.000000e+00> : vector<1x7xf32>
    %97 = vector.multi_reduction <add>, %96, %cst_15 [2] : vector<1x7x64xf32> to vector<1x7xf32>
    %c0_16 = arith.constant 0 : index
    %c0_17 = arith.constant 0 : index
    %98 = memref.load %arg4[%c0_16, %c0_17] : memref<1x1xf32, #tpu.memory_space<smem>>
    %99 = vector.broadcast %98 : f32 to vector<1x7xf32>
    %100 = arith.addf %97, %99 : vector<1x7xf32>
    %c0_18 = arith.constant 0 : index
    %c0_19 = arith.constant 0 : index
    %c0_20 = arith.constant 0 : index
    %101 = vector.load %arg5[%c0_18, %c0_19, %c0_20] : memref<1x1x7xf32, #tpu.memory_space<vmem>>, vector<1x1x7xf32>
    %102 = vector.shape_cast %101 : vector<1x1x7xf32> to vector<1x7xf32>
    %103 = vector.shape_cast %100 : vector<1x7xf32> to vector<1x1x7xf32>
    tpu.vector_store %arg5[%c0_18, %c0_19, %c0_20], %103 {strides = array<i32>} : memref<1x1x7xf32, #tpu.memory_space<vmem>>, vector<1x1x7xf32>,
    return
  }
  func.func @transform_0(%arg0: i32) -> (i32, i32, i32, i32) {
    %c0_i32 = arith.constant 0 : i32
    %c0_i32_0 = arith.constant 0 : i32
    %c0_i32_1 = arith.constant 0 : i32
    %c0_i32_2 = arith.constant 0 : i32
    return %arg0, %c0_i32, %c0_i32_0, %c0_i32_1 : i32, i32, i32, i32
  }
  func.func @transform_1(%arg0: i32) -> (i32, i32) {
    %c0_i32 = arith.constant 0 : i32
    %c0_i32_0 = arith.constant 0 : i32
    %c0_i32_1 = arith.constant 0 : i32
    return %c0_i32, %c0_i32_0 : i32, i32
  }
  func.func @transform_2(%arg0: i32) -> (i32, i32, i32) {
    %c0_i32 = arith.constant 0 : i32
    %c0_i32_0 = arith.constant 0 : i32
    %c0_i32_1 = arith.constant 0 : i32
    %c0_i32_2 = arith.constant 0 : i32
    return %c0_i32, %c0_i32_0, %c0_i32_1 : i32, i32, i32
  }
  func.func @transform_3(%arg0: i32) -> (i32, i32) {
    %c0_i32 = arith.constant 0 : i32
    %c0_i32_0 = arith.constant 0 : i32
    %c0_i32_1 = arith.constant 0 : i32
    return %c0_i32, %c0_i32_0 : i32, i32
  }
  func.func @transform_4(%arg0: i32) -> (i32, i32, i32) {
    %c0_i32 = arith.constant 0 : i32
    %c0_i32_0 = arith.constant 0 : i32
    %c0_i32_1 = arith.constant 0 : i32
    return %arg0, %c0_i32, %c0_i32_0 : i32, i32, i32
  }
}

</mosaic_0001>

<llo_original>
// kernel: forward.1
$region0: #{forward.1}
  #allocation0 [shape = 'u32[]', space=smem, size = 0x4, offset = 0x4, fixed_abs, tag = 'smem constant byte address 0x4 - core index']
  #allocation1 [shape = 'u32[72,128]{1,0:T(1,128)}', space=vmem, size = 0x9000, scoped, tag = 'internal scratch']
  #allocation2 [shape = 'f32[1,1]{1,0:T(1,128)S(6)}', space=smem, size = 0x200, scoped, tag = 'scoped memory for forward.1']
  %s0 = inlined_call_operand.vmem [shape: f32[2,16,16,1], index: 0, kind: input, shape index: {}]
  %s1 = inlined_call_operand.vmem [shape: f32[192,16], index: 1, kind: input, shape index: {}]
  %s2 = inlined_call_operand.vmem [shape: f32[1,1,64], index: 2, kind: input, shape index: {}]
  %s3 = inlined_call_operand.<no memory space> [shape: f32[1,1], index: 3, kind: input, shape index: {}]
  %s4 = inlined_call_operand.hbm [shape: f32[2,1,7], index: 4, kind: output, shape index: {}]
  %s5 = sld [smem:[#allocation0]]
  $region49: #{forward.1} parent=0
    _
  %s7 = ssub.s32 1, %s5
  %s8 = scalar_select 0, %s7, %s5
  %9 = sst [smem:[#allocation2]] %s3
  $region1: #{forward.1} parent=0
    #allocation3 [shape = 'u8[1024]{0}', space=vmem, size = 0x400, scoped, tag = 'output window, operand 0']
    #allocation4 [shape = 's32[2]{0}', space=sflag, size = 0x8, scoped, tag = 'scoped memory for forward.1']
    %10 = vsyncpa [#allocation4], 0
    %s11 = scalar_lea.sflag [#allocation4], 1
    %12 = vsyncpa %s11, 0
    loop: start=0, step=1, limit=4
    $region2: #{forward.1} parent=1 // loop_pre_header
      _
    $region3: #{forward.1} parent=1 // loop_header
      %s14 = sphi 0, %s18
      %p15 = scmp.ge.s32.totalorder %s14, 4
      %s24 = sphi 0, %s26
      %s27 = sphi 0, %s24
      %s28 = sphi 0, %s27
      %s44 = sphi 0, %s28
      %s48 = sphi 0, %s48
      %s50 = sphi 0, %s48
      %s51 = sphi 0, %s50
      %s65 = sphi 0, %s51
      %s69 = sphi 0, %s69
      %s71 = sphi 0, %s69
      %s72 = sphi 0, %s71
      %s86 = sphi 0, %s72
      %s90 = sphi 0, %s90
      %s92 = sphi 0, %s90
      %s93 = sphi 0, %s92
      %s107 = sphi 0, %s93
      %s113 = sphi 0, %s115
      %s116 = sphi 0, %s113
      %s117 = sphi 0, %s116
      %s133 = sphi 0, %s117
    $region4: #{forward.1} parent=1 // loop_header_branch
      %17 = sbr.rel (%p15) target = $region8
    $region5: #{forward.1} parent=1 // loop_body
      %s19 = ssub.s32 %s14, 1
      %s20 = ssub.s32 %s14, 2
      %s21 = sadd.s32 %s14, 1
      %s22 = ssub.s32 %s14, %s21
      %p23 = scmp.eq.s32.totalorder %s22, 0
      %s25 = sadd.s32 %s24, 1
      %s26 = scalar_select %p23, %s24, %s25
      %p29 = pneg %p23
      %p30 = scmp.eq.s32.totalorder %s14, 1
      %p31 = por %p29, %p30
      %p32 = scmp.ne.s32.totalorder %s24, %s27
      %p33 = scmp.eq.s32.totalorder %s14, 0
      %p34 = por %p32, %p33
      %p35 = scmp.ne.s32.totalorder %s24, %s27
      %p36 = scmp.eq.s32.totalorder %s19, 1
      %p37 = por %p35, %p36
      %p38 = scmp.ne.s32.totalorder %s27, %s28
      %p39 = scmp.eq.s32.totalorder %s19, 0
      %p40 = por %p38, %p39
      %p41 = scmp.ne.s32.totalorder %s27, %s28
      %p42 = scmp.eq.s32.totalorder %s20, 1
      %p43 = por %p41, %p42
      %p45 = scmp.ne.s32.totalorder %s28, %s44
      %p46 = scmp.eq.s32.totalorder %s20, 0
      %p47 = por %p45, %p46
      %s49 = sadd.s32 %s48, 1
      %p52 = scmp.eq.s32.totalorder %s14, 1
      %p53 = scmp.ne.s32.totalorder %s48, %s50
      %p54 = scmp.eq.s32.totalorder %s14, 0
      %p55 = por %p53, %p54
      %p56 = scmp.ne.s32.totalorder %s48, %s50
      %p57 = scmp.eq.s32.totalorder %s19, 1
      %p58 = por %p56, %p57
      %p59 = scmp.ne.s32.totalorder %s50, %s51
      %p60 = scmp.eq.s32.totalorder %s19, 0
      %p61 = por %p59, %p60
      %p62 = scmp.ne.s32.totalorder %s50, %s51
      %p63 = scmp.eq.s32.totalorder %s20, 1
      %p64 = por %p62, %p63
      %p66 = scmp.ne.s32.totalorder %s51, %s65
      %p67 = scmp.eq.s32.totalorder %s20, 0
      %p68 = por %p66, %p67
      %s70 = sadd.s32 %s69, 1
      %p73 = scmp.eq.s32.totalorder %s14, 1
      %p74 = scmp.ne.s32.totalorder %s69, %s71
      %p75 = scmp.eq.s32.totalorder %s14, 0
      %p76 = por %p74, %p75
      %p77 = scmp.ne.s32.totalorder %s69, %s71
      %p78 = scmp.eq.s32.totalorder %s19, 1
      %p79 = por %p77, %p78
      %p80 = scmp.ne.s32.totalorder %s71, %s72
      %p81 = scmp.eq.s32.totalorder %s19, 0
      %p82 = por %p80, %p81
      %p83 = scmp.ne.s32.totalorder %s71, %s72
      %p84 = scmp.eq.s32.totalorder %s20, 1
      %p85 = por %p83, %p84
      %p87 = scmp.ne.s32.totalorder %s72, %s86
      %p88 = scmp.eq.s32.totalorder %s20, 0
      %p89 = por %p87, %p88
      %s91 = sadd.s32 %s90, 1
      %p94 = scmp.eq.s32.totalorder %s14, 1
      %p95 = scmp.ne.s32.totalorder %s90, %s92
      %p96 = scmp.eq.s32.totalorder %s14, 0
      %p97 = por %p95, %p96
      %p98 = scmp.ne.s32.totalorder %s90, %s92
      %p99 = scmp.eq.s32.totalorder %s19, 1
      %p100 = por %p98, %p99
      %p101 = scmp.ne.s32.totalorder %s92, %s93
      %p102 = scmp.eq.s32.totalorder %s19, 0
      %p103 = por %p101, %p102
      %p104 = scmp.ne.s32.totalorder %s92, %s93
      %p105 = scmp.eq.s32.totalorder %s20, 1
      %p106 = por %p104, %p105
      %p108 = scmp.ne.s32.totalorder %s93, %s107
      %p109 = scmp.eq.s32.totalorder %s20, 0
      %p110 = por %p108, %p109
      %s111 = ssub.s32 %s14, %s21
      %p112 = scmp.eq.s32.totalorder %s111, 0
      %s114 = sadd.s32 %s113, 1
      %s115 = scalar_select %p112, %s113, %s114
      %p118 = pneg %p112
      %p119 = scmp.eq.s32.totalorder %s14, 1
      %p120 = por %p118, %p119
      %p121 = scmp.ne.s32.totalorder %s113, %s116
      %p122 = scmp.eq.s32.totalorder %s14, 0
      %p123 = por %p121, %p122
      %p124 = scmp.ne.s32.totalorder %s113, %s116
      %p125 = scmp.eq.s32.totalorder %s19, 1
      %p126 = por %p124, %p125
      %p127 = scmp.ne.s32.totalorder %s116, %s117
      %p128 = scmp.eq.s32.totalorder %s19, 0
      %p129 = por %p127, %p128
      %p130 = scmp.ne.s32.totalorder %s116, %s117
      %p131 = scmp.eq.s32.totalorder %s20, 1
      %p132 = por %p130, %p131
      %p134 = scmp.ne.s32.totalorder %s117, %s133
      %p135 = scmp.eq.s32.totalorder %s20, 0
      %p136 = por %p134, %p135
      %p137 = scmp.le.s32.totalorder 1, %s14
      %p138 = scmp.lt.s32.totalorder %s14, 3
      %p139 = pnand %p137, %p138
      %p140 = pneg %p139
      // Predicated region
      $region9: #{forward.1} parent=5 // pred_check
        _
      $region10: #{forward.1} parent=5 // pred_check_branch
        %142 = sbr.rel (%p139) target = $region12
      $region11: #{forward.1} parent=5 // pred_region
        %s143 = ssub.s32 %s14, 1
        // Predicated region
        $region13: #{forward.1} parent=11 // pred_check
          %p144 = pneg %p61
        $region14: #{forward.1} parent=11 // pred_check_branch
          %146 = sbr.rel (%p144) target = $region16
        $region15: #{forward.1} parent=11 // pred_region
          _
        $region16: #{forward.1} parent=11 // pred_fallthru
          _
        // Predicated region
        $region17: #{forward.1} parent=11 // pred_check
          %p147 = pneg %p82
        $region18: #{forward.1} parent=11 // pred_check_branch
          %149 = sbr.rel (%p147) target = $region20
        $region19: #{forward.1} parent=11 // pred_region
          _
        $region20: #{forward.1} parent=11 // pred_fallthru
          _
        // Predicated region
        $region21: #{forward.1} parent=11 // pred_check
          %p150 = pneg %p103
        $region22: #{forward.1} parent=11 // pred_check_branch
          %152 = sbr.rel (%p150) target = $region24
        $region23: #{forward.1} parent=11 // pred_region
          _
        $region24: #{forward.1} parent=11 // pred_fallthru
          _
      $region12: #{forward.1} parent=5 // pred_fallthru
        _
      %p153 = scmp.lt.s32.totalorder %s14, 2
      // Predicated region
      $region25: #{forward.1} parent=5 // pred_check
        %p154 = pneg %p153
      $region26: #{forward.1} parent=5 // pred_check_branch
        %156 = sbr.rel (%p154) target = $region28
      $region27: #{forward.1} parent=5 // pred_region
        // Predicated region
        $region29: #{forward.1} parent=27 // pred_check
          %p157 = pneg %p34
        $region30: #{forward.1} parent=27 // pred_check_branch
          %159 = sbr.rel (%p157) target = $region32
        $region31: #{forward.1} parent=27 // pred_region
          %p160 = scmp.lt.s32.totalorder %s14, 1
          %s161 = scalar_select %p160, %s14, 1
          %s162 = smul.addr %s161, 32
          %s163 = smul.addr %s162, 8
          %s164 = scalar_lea.vmem %s0, %s163
        $region32: #{forward.1} parent=27 // pred_fallthru
          _
      $region28: #{forward.1} parent=5 // pred_fallthru
        _
      %p165 = scmp.le.s32.totalorder 1, %s14
      %p166 = scmp.lt.s32.totalorder %s14, 3
      %p167 = pnand %p165, %p166
      %p168 = pneg %p167
      // Predicated region
      $region33: #{forward.1} parent=5 // pred_check
        _
      $region34: #{forward.1} parent=5 // pred_check_branch
        %170 = sbr.rel (%p167) target = $region36
      $region35: #{forward.1} parent=5 // pred_region
        %s171 = ssub.s32 %s14, 1
        %p172 = scmp.lt.s32.totalorder %s19, 1
        %s173 = scalar_select %p172, %s19, 1
        %s174 = smul.addr %s173, 32
        %s175 = smul.addr %s174, 8
        %s176 = scalar_lea.vmem %s0, %s175
        %p177 = pneg %p40
        %p178 = pneg %p37
        %p179 = pneg %p61
        %p180 = pneg %p58
        %p181 = pneg %p82
        %p182 = pneg %p79
        %p183 = pneg %p103
        %p184 = pneg %p100
        %p185 = pneg %p129
        %p186 = pneg %p126
        %s187 = sand.u32 %s116, 1
        %s188 = scalar_lea.sflag [#allocation4], %s187
        %s189 = sand.u32 %s116, 1
        %s190 = scalar_lea.vmem [#allocation3], %s189
        %p191 = scmp.lt.s32.totalorder %s19, 1
        %s192 = scalar_select %p191, %s19, 1
        %s193 = smul.addr %s192, 32
        %s194 = smul.addr %s193, 8
        %s195 = scalar_lea.vmem %s0, %s194
        %v196 = vld [vmem:[%s195] sm:$0xff]
        %v197 = vld [vmem:[%s195 + $0x8] sm:$0xff]
        %v198 = vld [vmem:[%s195 + $0x10] sm:$0xff]
        %v199 = vld [vmem:[%s195 + $0x18] sm:$0xff]
        %v200 = vld [vmem:[%s195 + $0x20] sm:$0xff]
        %v201 = vld [vmem:[%s195 + $0x28] sm:$0xff]
        %v202 = vld [vmem:[%s195 + $0x30] sm:$0xff]
        %v203 = vld [vmem:[%s195 + $0x38] sm:$0xff]
        %v204 = vld [vmem:[%s195 + $0x40] sm:$0xff]
        %v205 = vld [vmem:[%s195 + $0x48] sm:$0xff]
        %v206 = vld [vmem:[%s195 + $0x50] sm:$0xff]
        %v207 = vld [vmem:[%s195 + $0x58] sm:$0xff]
        %v208 = vld [vmem:[%s195 + $0x60] sm:$0xff]
        %v209 = vld [vmem:[%s195 + $0x68] sm:$0xff]
        %v210 = vld [vmem:[%s195 + $0x70] sm:$0xff]
        %v211 = vld [vmem:[%s195 + $0x78] sm:$0xff]
        %v212 = vld [vmem:[%s195 + $0x80] sm:$0xff]
        %v213 = vld [vmem:[%s195 + $0x88] sm:$0xff]
        %v214 = vld [vmem:[%s195 + $0x90] sm:$0xff]
        %v215 = vld [vmem:[%s195 + $0x98] sm:$0xff]
        %v216 = vld [vmem:[%s195 + $0xa0] sm:$0xff]
        %v217 = vld [vmem:[%s195 + $0xa8] sm:$0xff]
        %v218 = vld [vmem:[%s195 + $0xb0] sm:$0xff]
        %v219 = vld [vmem:[%s195 + $0xb8] sm:$0xff]
        %v220 = vld [vmem:[%s195 + $0xc0] sm:$0xff]
        %v221 = vld [vmem:[%s195 + $0xc8] sm:$0xff]
        %v222 = vld [vmem:[%s195 + $0xd0] sm:$0xff]
        %v223 = vld [vmem:[%s195 + $0xd8] sm:$0xff]
        %v224 = vld [vmem:[%s195 + $0xe0] sm:$0xff]
        %v225 = vld [vmem:[%s195 + $0xe8] sm:$0xff]
        %v226 = vld [vmem:[%s195 + $0xf0] sm:$0xff]
        %v227 = vld [vmem:[%s195 + $0xf8] sm:$0xff]
        %vm254 = vcmask 1046528
        %v255 = vrot.slane %v196, 1
        %v256 = vrot.slane %v197, 1
        %v257 = vsel %vm254, %v255, %v256
        %v258 = vrot.slane %v198, 1
        %v259 = vrot.slane %v199, 1
        %v260 = vsel %vm254, %v258, %v259
        %v261 = vrot.slane %v200, 1
        %v262 = vrot.slane %v201, 1
        %v263 = vsel %vm254, %v261, %v262
        %v264 = vrot.slane %v202, 1
        %v265 = vrot.slane %v203, 1
        %v266 = vsel %vm254, %v264, %v265
        %v267 = vrot.slane %v204, 1
        %v268 = vrot.slane %v205, 1
        %v269 = vsel %vm254, %v267, %v268
        %v270 = vrot.slane %v206, 1
        %v271 = vrot.slane %v207, 1
        %v272 = vsel %vm254, %v270, %v271
        %v273 = vrot.slane %v208, 1
        %v274 = vrot.slane %v209, 1
        %v275 = vsel %vm254, %v273, %v274
        %v276 = vrot.slane %v210, 1
        %v277 = vrot.slane %v211, 1
        %v278 = vsel %vm254, %v276, %v277
        %v279 = vrot.slane %v212, 1
        %v280 = vrot.slane %v213, 1
        %v281 = vsel %vm254, %v279, %v280
        %v282 = vrot.slane %v214, 1
        %v283 = vrot.slane %v215, 1
        %v284 = vsel %vm254, %v282, %v283
        %v285 = vrot.slane %v216, 1
        %v286 = vrot.slane %v217, 1
        %v287 = vsel %vm254, %v285, %v286
        %v288 = vrot.slane %v218, 1
        %v289 = vrot.slane %v219, 1
        %v290 = vsel %vm254, %v288, %v289
        %v291 = vrot.slane %v220, 1
        %v292 = vrot.slane %v221, 1
        %v293 = vsel %vm254, %v291, %v292
        %294 = vrot.lane.b32.xlu0 %v257, 1
        %v295 = vpop.permute.xlu0 %294
        %296 = vrot.lane.b32.xlu0 %v256, 1
        %v297 = vpop.permute.xlu0 %296
        %298 = vrot.lane.b32.xlu0 %v260, 1
        %v299 = vpop.permute.xlu0 %298
        %300 = vrot.lane.b32.xlu0 %v259, 1
        %v301 = vpop.permute.xlu0 %300
        %302 = vrot.lane.b32.xlu0 %v263, 1
        %v303 = vpop.permute.xlu0 %302
        %304 = vrot.lane.b32.xlu0 %v262, 1
        %v305 = vpop.permute.xlu0 %304
        %306 = vrot.lane.b32.xlu0 %v266, 1
        %v307 = vpop.permute.xlu0 %306
        %308 = vrot.lane.b32.xlu0 %v265, 1
        %v309 = vpop.permute.xlu0 %308
        %310 = vrot.lane.b32.xlu0 %v269, 1
        %v311 = vpop.permute.xlu0 %310
        %312 = vrot.lane.b32.xlu0 %v268, 1
        %v313 = vpop.permute.xlu0 %312
        %314 = vrot.lane.b32.xlu0 %v272, 1
        %v315 = vpop.permute.xlu0 %314
        %316 = vrot.lane.b32.xlu0 %v271, 1
        %v317 = vpop.permute.xlu0 %316
        %318 = vrot.lane.b32.xlu0 %v275, 1
        %v319 = vpop.permute.xlu0 %318
        %320 = vrot.lane.b32.xlu0 %v274, 1
        %v321 = vpop.permute.xlu0 %320
        %322 = vrot.lane.b32.xlu0 %v278, 1
        %v323 = vpop.permute.xlu0 %322
        %324 = vrot.lane.b32.xlu0 %v277, 1
        %v325 = vpop.permute.xlu0 %324
        %326 = vrot.lane.b32.xlu0 %v281, 1
        %v327 = vpop.permute.xlu0 %326
        %328 = vrot.lane.b32.xlu0 %v280, 1
        %v329 = vpop.permute.xlu0 %328
        %330 = vrot.lane.b32.xlu0 %v284, 1
        %v331 = vpop.permute.xlu0 %330
        %332 = vrot.lane.b32.xlu0 %v283, 1
        %v333 = vpop.permute.xlu0 %332
        %334 = vrot.lane.b32.xlu0 %v287, 1
        %v335 = vpop.permute.xlu0 %334
        %336 = vrot.lane.b32.xlu0 %v286, 1
        %v337 = vpop.permute.xlu0 %336
        %338 = vrot.lane.b32.xlu0 %v290, 1
        %v339 = vpop.permute.xlu0 %338
        %340 = vrot.lane.b32.xlu0 %v289, 1
        %v341 = vpop.permute.xlu0 %340
        %342 = vrot.lane.b32.xlu0 %v293, 1
        %v343 = vpop.permute.xlu0 %342
        %344 = vrot.lane.b32.xlu0 %v292, 1
        %v345 = vpop.permute.xlu0 %344
        %vm372 = vcmask 1045504
        %v373 = vrot.slane %v196, 2
        %v374 = vrot.slane %v197, 2
        %v375 = vsel %vm372, %v373, %v374
        %v376 = vrot.slane %v198, 2
        %v377 = vrot.slane %v199, 2
        %v378 = vsel %vm372, %v376, %v377
        %v379 = vrot.slane %v200, 2
        %v380 = vrot.slane %v201, 2
        %v381 = vsel %vm372, %v379, %v380
        %v382 = vrot.slane %v202, 2
        %v383 = vrot.slane %v203, 2
        %v384 = vsel %vm372, %v382, %v383
        %v385 = vrot.slane %v204, 2
        %v386 = vrot.slane %v205, 2
        %v387 = vsel %vm372, %v385, %v386
        %v388 = vrot.slane %v206, 2
        %v389 = vrot.slane %v207, 2
        %v390 = vsel %vm372, %v388, %v389
        %v391 = vrot.slane %v208, 2
        %v392 = vrot.slane %v209, 2
        %v393 = vsel %vm372, %v391, %v392
        %v394 = vrot.slane %v210, 2
        %v395 = vrot.slane %v211, 2
        %v396 = vsel %vm372, %v394, %v395
        %v397 = vrot.slane %v212, 2
        %v398 = vrot.slane %v213, 2
        %v399 = vsel %vm372, %v397, %v398
        %v400 = vrot.slane %v214, 2
        %v401 = vrot.slane %v215, 2
        %v402 = vsel %vm372, %v400, %v401
        %v403 = vrot.slane %v216, 2
        %v404 = vrot.slane %v217, 2
        %v405 = vsel %vm372, %v403, %v404
        %v406 = vrot.slane %v218, 2
        %v407 = vrot.slane %v219, 2
        %v408 = vsel %vm372, %v406, %v407
        %v409 = vrot.slane %v220, 2
        %v410 = vrot.slane %v221, 2
        %v411 = vsel %vm372, %v409, %v410
        %412 = vrot.lane.b32.xlu0 %v375, 2
        %v413 = vpop.permute.xlu0 %412
        %414 = vrot.lane.b32.xlu0 %v374, 2
        %v415 = vpop.permute.xlu0 %414
        %416 = vrot.lane.b32.xlu0 %v378, 2
        %v417 = vpop.permute.xlu0 %416
        %418 = vrot.lane.b32.xlu0 %v377, 2
        %v419 = vpop.permute.xlu0 %418
        %420 = vrot.lane.b32.xlu0 %v381, 2
        %v421 = vpop.permute.xlu0 %420
        %422 = vrot.lane.b32.xlu0 %v380, 2
        %v423 = vpop.permute.xlu0 %422
        %424 = vrot.lane.b32.xlu0 %v384, 2
        %v425 = vpop.permute.xlu0 %424
        %426 = vrot.lane.b32.xlu0 %v383, 2
        %v427 = vpop.permute.xlu0 %426
        %428 = vrot.lane.b32.xlu0 %v387, 2
        %v429 = vpop.permute.xlu0 %428
        %430 = vrot.lane.b32.xlu0 %v386, 2
        %v431 = vpop.permute.xlu0 %430
        %432 = vrot.lane.b32.xlu0 %v390, 2
        %v433 = vpop.permute.xlu0 %432
        %434 = vrot.lane.b32.xlu0 %v389, 2
        %v435 = vpop.permute.xlu0 %434
        %436 = vrot.lane.b32.xlu0 %v393, 2
        %v437 = vpop.permute.xlu0 %436
        %438 = vrot.lane.b32.xlu0 %v392, 2
        %v439 = vpop.permute.xlu0 %438
        %440 = vrot.lane.b32.xlu0 %v396, 2
        %v441 = vpop.permute.xlu0 %440
        %442 = vrot.lane.b32.xlu0 %v395, 2
        %v443 = vpop.permute.xlu0 %442
        %444 = vrot.lane.b32.xlu0 %v399, 2
        %v445 = vpop.permute.xlu0 %444
        %446 = vrot.lane.b32.xlu0 %v398, 2
        %v447 = vpop.permute.xlu0 %446
        %448 = vrot.lane.b32.xlu0 %v402, 2
        %v449 = vpop.permute.xlu0 %448
        %450 = vrot.lane.b32.xlu0 %v401, 2
        %v451 = vpop.permute.xlu0 %450
        %452 = vrot.lane.b32.xlu0 %v405, 2
        %v453 = vpop.permute.xlu0 %452
        %454 = vrot.lane.b32.xlu0 %v404, 2
        %v455 = vpop.permute.xlu0 %454
        %456 = vrot.lane.b32.xlu0 %v408, 2
        %v457 = vpop.permute.xlu0 %456
        %458 = vrot.lane.b32.xlu0 %v407, 2
        %v459 = vpop.permute.xlu0 %458
        %460 = vrot.lane.b32.xlu0 %v411, 2
        %v461 = vpop.permute.xlu0 %460
        %462 = vrot.lane.b32.xlu0 %v410, 2
        %v463 = vpop.permute.xlu0 %462
        %vm490 = vcmask 1044480
        %v491 = vrot.slane %v196, 3
        %v492 = vrot.slane %v197, 3
        %v493 = vsel %vm490, %v491, %v492
        %v494 = vrot.slane %v198, 3
        %v495 = vrot.slane %v199, 3
        %v496 = vsel %vm490, %v494, %v495
        %v497 = vrot.slane %v200, 3
        %v498 = vrot.slane %v201, 3
        %v499 = vsel %vm490, %v497, %v498
        %v500 = vrot.slane %v202, 3
        %v501 = vrot.slane %v203, 3
        %v502 = vsel %vm490, %v500, %v501
        %v503 = vrot.slane %v204, 3
        %v504 = vrot.slane %v205, 3
        %v505 = vsel %vm490, %v503, %v504
        %v506 = vrot.slane %v206, 3
        %v507 = vrot.slane %v207, 3
        %v508 = vsel %vm490, %v506, %v507
        %v509 = vrot.slane %v208, 3
        %v510 = vrot.slane %v209, 3
        %v511 = vsel %vm490, %v509, %v510
        %v512 = vrot.slane %v210, 3
        %v513 = vrot.slane %v211, 3
        %v514 = vsel %vm490, %v512, %v513
        %v515 = vrot.slane %v212, 3
        %v516 = vrot.slane %v213, 3
        %v517 = vsel %vm490, %v515, %v516
        %v518 = vrot.slane %v214, 3
        %v519 = vrot.slane %v215, 3
        %v520 = vsel %vm490, %v518, %v519
        %v521 = vrot.slane %v216, 3
        %v522 = vrot.slane %v217, 3
        %v523 = vsel %vm490, %v521, %v522
        %v524 = vrot.slane %v218, 3
        %v525 = vrot.slane %v219, 3
        %v526 = vsel %vm490, %v524, %v525
        %v527 = vrot.slane %v220, 3
        %v528 = vrot.slane %v221, 3
        %v529 = vsel %vm490, %v527, %v528
        %530 = vrot.lane.b32.xlu0 %v493, 3
        %v531 = vpop.permute.xlu0 %530
        %532 = vrot.lane.b32.xlu0 %v492, 3
        %v533 = vpop.permute.xlu0 %532
        %534 = vrot.lane.b32.xlu0 %v496, 3
        %v535 = vpop.permute.xlu0 %534
        %536 = vrot.lane.b32.xlu0 %v495, 3
        %v537 = vpop.permute.xlu0 %536
        %538 = vrot.lane.b32.xlu0 %v499, 3
        %v539 = vpop.permute.xlu0 %538
        %540 = vrot.lane.b32.xlu0 %v498, 3
        %v541 = vpop.permute.xlu0 %540
        %542 = vrot.lane.b32.xlu0 %v502, 3
        %v543 = vpop.permute.xlu0 %542
        %544 = vrot.lane.b32.xlu0 %v501, 3
        %v545 = vpop.permute.xlu0 %544
        %546 = vrot.lane.b32.xlu0 %v505, 3
        %v547 = vpop.permute.xlu0 %546
        %548 = vrot.lane.b32.xlu0 %v504, 3
        %v549 = vpop.permute.xlu0 %548
        %550 = vrot.lane.b32.xlu0 %v508, 3
        %v551 = vpop.permute.xlu0 %550
        %552 = vrot.lane.b32.xlu0 %v507, 3
        %v553 = vpop.permute.xlu0 %552
        %554 = vrot.lane.b32.xlu0 %v511, 3
        %v555 = vpop.permute.xlu0 %554
        %556 = vrot.lane.b32.xlu0 %v510, 3
        %v557 = vpop.permute.xlu0 %556
        %558 = vrot.lane.b32.xlu0 %v514, 3
        %v559 = vpop.permute.xlu0 %558
        %560 = vrot.lane.b32.xlu0 %v513, 3
        %v561 = vpop.permute.xlu0 %560
        %562 = vrot.lane.b32.xlu0 %v517, 3
        %v563 = vpop.permute.xlu0 %562
        %564 = vrot.lane.b32.xlu0 %v516, 3
        %v565 = vpop.permute.xlu0 %564
        %566 = vrot.lane.b32.xlu0 %v520, 3
        %v567 = vpop.permute.xlu0 %566
        %568 = vrot.lane.b32.xlu0 %v519, 3
        %v569 = vpop.permute.xlu0 %568
        %570 = vrot.lane.b32.xlu0 %v523, 3
        %v571 = vpop.permute.xlu0 %570
        %572 = vrot.lane.b32.xlu0 %v522, 3
        %v573 = vpop.permute.xlu0 %572
        %574 = vrot.lane.b32.xlu0 %v526, 3
        %v575 = vpop.permute.xlu0 %574
        %576 = vrot.lane.b32.xlu0 %v525, 3
        %v577 = vpop.permute.xlu0 %576
        %578 = vrot.lane.b32.xlu0 %v529, 3
        %v579 = vpop.permute.xlu0 %578
        %580 = vrot.lane.b32.xlu0 %v528, 3
        %v581 = vpop.permute.xlu0 %580
        %610 = vrot.lane.b32.xlu0 %v198, 4
        %v611 = vpop.permute.xlu0 %610
        %612 = vrot.lane.b32.xlu0 %v199, 4
        %v613 = vpop.permute.xlu0 %612
        %614 = vrot.lane.b32.xlu0 %v200, 4
        %v615 = vpop.permute.xlu0 %614
        %616 = vrot.lane.b32.xlu0 %v201, 4
        %v617 = vpop.permute.xlu0 %616
        %618 = vrot.lane.b32.xlu0 %v202, 4
        %v619 = vpop.permute.xlu0 %618
        %620 = vrot.lane.b32.xlu0 %v203, 4
        %v621 = vpop.permute.xlu0 %620
        %622 = vrot.lane.b32.xlu0 %v204, 4
        %v623 = vpop.permute.xlu0 %622
        %624 = vrot.lane.b32.xlu0 %v205, 4
        %v625 = vpop.permute.xlu0 %624
        %626 = vrot.lane.b32.xlu0 %v206, 4
        %v627 = vpop.permute.xlu0 %626
        %628 = vrot.lane.b32.xlu0 %v207, 4
        %v629 = vpop.permute.xlu0 %628
        %630 = vrot.lane.b32.xlu0 %v208, 4
        %v631 = vpop.permute.xlu0 %630
        %632 = vrot.lane.b32.xlu0 %v209, 4
        %v633 = vpop.permute.xlu0 %632
        %634 = vrot.lane.b32.xlu0 %v210, 4
        %v635 = vpop.permute.xlu0 %634
        %636 = vrot.lane.b32.xlu0 %v211, 4
        %v637 = vpop.permute.xlu0 %636
        %638 = vrot.lane.b32.xlu0 %v212, 4
        %v639 = vpop.permute.xlu0 %638
        %640 = vrot.lane.b32.xlu0 %v213, 4
        %v641 = vpop.permute.xlu0 %640
        %642 = vrot.lane.b32.xlu0 %v214, 4
        %v643 = vpop.permute.xlu0 %642
        %644 = vrot.lane.b32.xlu0 %v215, 4
        %v645 = vpop.permute.xlu0 %644
        %646 = vrot.lane.b32.xlu0 %v216, 4
        %v647 = vpop.permute.xlu0 %646
        %648 = vrot.lane.b32.xlu0 %v217, 4
        %v649 = vpop.permute.xlu0 %648
        %650 = vrot.lane.b32.xlu0 %v218, 4
        %v651 = vpop.permute.xlu0 %650
        %652 = vrot.lane.b32.xlu0 %v219, 4
        %v653 = vpop.permute.xlu0 %652
        %654 = vrot.lane.b32.xlu0 %v220, 4
        %v655 = vpop.permute.xlu0 %654
        %656 = vrot.lane.b32.xlu0 %v221, 4
        %v657 = vpop.permute.xlu0 %656
        %658 = vrot.lane.b32.xlu0 %v222, 4
        %v659 = vpop.permute.xlu0 %658
        %660 = vrot.lane.b32.xlu0 %v223, 4
        %v661 = vpop.permute.xlu0 %660
        %v688 = vrot.slane %v222, 1
        %v689 = vrot.slane %v223, 1
        %v690 = vsel %vm254, %v688, %v689
        %691 = vrot.lane.b32.xlu0 %v260, 5
        %v692 = vpop.permute.xlu0 %691
        %693 = vrot.lane.b32.xlu0 %v259, 5
        %v694 = vpop.permute.xlu0 %693
        %695 = vrot.lane.b32.xlu0 %v263, 5
        %v696 = vpop.permute.xlu0 %695
        %697 = vrot.lane.b32.xlu0 %v262, 5
        %v698 = vpop.permute.xlu0 %697
        %699 = vrot.lane.b32.xlu0 %v266, 5
        %v700 = vpop.permute.xlu0 %699
        %701 = vrot.lane.b32.xlu0 %v265, 5
        %v702 = vpop.permute.xlu0 %701
        %703 = vrot.lane.b32.xlu0 %v269, 5
        %v704 = vpop.permute.xlu0 %703
        %705 = vrot.lane.b32.xlu0 %v268, 5
        %v706 = vpop.permute.xlu0 %705
        %707 = vrot.lane.b32.xlu0 %v272, 5
        %v708 = vpop.permute.xlu0 %707
        %709 = vrot.lane.b32.xlu0 %v271, 5
        %v710 = vpop.permute.xlu0 %709
        %711 = vrot.lane.b32.xlu0 %v275, 5
        %v712 = vpop.permute.xlu0 %711
        %713 = vrot.lane.b32.xlu0 %v274, 5
        %v714 = vpop.permute.xlu0 %713
        %715 = vrot.lane.b32.xlu0 %v278, 5
        %v716 = vpop.permute.xlu0 %715
        %717 = vrot.lane.b32.xlu0 %v277, 5
        %v718 = vpop.permute.xlu0 %717
        %719 = vrot.lane.b32.xlu0 %v281, 5
        %v720 = vpop.permute.xlu0 %719
        %721 = vrot.lane.b32.xlu0 %v280, 5
        %v722 = vpop.permute.xlu0 %721
        %723 = vrot.lane.b32.xlu0 %v284, 5
        %v724 = vpop.permute.xlu0 %723
        %725 = vrot.lane.b32.xlu0 %v283, 5
        %v726 = vpop.permute.xlu0 %725
        %727 = vrot.lane.b32.xlu0 %v287, 5
        %v728 = vpop.permute.xlu0 %727
        %729 = vrot.lane.b32.xlu0 %v286, 5
        %v730 = vpop.permute.xlu0 %729
        %731 = vrot.lane.b32.xlu0 %v290, 5
        %v732 = vpop.permute.xlu0 %731
        %733 = vrot.lane.b32.xlu0 %v289, 5
        %v734 = vpop.permute.xlu0 %733
        %735 = vrot.lane.b32.xlu0 %v293, 5
        %v736 = vpop.permute.xlu0 %735
        %737 = vrot.lane.b32.xlu0 %v292, 5
        %v738 = vpop.permute.xlu0 %737
        %739 = vrot.lane.b32.xlu0 %v690, 5
        %v740 = vpop.permute.xlu0 %739
        %741 = vrot.lane.b32.xlu0 %v689, 5
        %v742 = vpop.permute.xlu0 %741
        %v769 = vrot.slane %v222, 2
        %v770 = vrot.slane %v223, 2
        %v771 = vsel %vm372, %v769, %v770
        %772 = vrot.lane.b32.xlu0 %v378, 6
        %v773 = vpop.permute.xlu0 %772
        %774 = vrot.lane.b32.xlu0 %v377, 6
        %v775 = vpop.permute.xlu0 %774
        %776 = vrot.lane.b32.xlu0 %v381, 6
        %v777 = vpop.permute.xlu0 %776
        %778 = vrot.lane.b32.xlu0 %v380, 6
        %v779 = vpop.permute.xlu0 %778
        %780 = vrot.lane.b32.xlu0 %v384, 6
        %v781 = vpop.permute.xlu0 %780
        %782 = vrot.lane.b32.xlu0 %v383, 6
        %v783 = vpop.permute.xlu0 %782
        %784 = vrot.lane.b32.xlu0 %v387, 6
        %v785 = vpop.permute.xlu0 %784
        %786 = vrot.lane.b32.xlu0 %v386, 6
        %v787 = vpop.permute.xlu0 %786
        %788 = vrot.lane.b32.xlu0 %v390, 6
        %v789 = vpop.permute.xlu0 %788
        %790 = vrot.lane.b32.xlu0 %v389, 6
        %v791 = vpop.permute.xlu0 %790
        %792 = vrot.lane.b32.xlu0 %v393, 6
        %v793 = vpop.permute.xlu0 %792
        %794 = vrot.lane.b32.xlu0 %v392, 6
        %v795 = vpop.permute.xlu0 %794
        %796 = vrot.lane.b32.xlu0 %v396, 6
        %v797 = vpop.permute.xlu0 %796
        %798 = vrot.lane.b32.xlu0 %v395, 6
        %v799 = vpop.permute.xlu0 %798
        %800 = vrot.lane.b32.xlu0 %v399, 6
        %v801 = vpop.permute.xlu0 %800
        %802 = vrot.lane.b32.xlu0 %v398, 6
        %v803 = vpop.permute.xlu0 %802
        %804 = vrot.lane.b32.xlu0 %v402, 6
        %v805 = vpop.permute.xlu0 %804
        %806 = vrot.lane.b32.xlu0 %v401, 6
        %v807 = vpop.permute.xlu0 %806
        %808 = vrot.lane.b32.xlu0 %v405, 6
        %v809 = vpop.permute.xlu0 %808
        %810 = vrot.lane.b32.xlu0 %v404, 6
        %v811 = vpop.permute.xlu0 %810
        %812 = vrot.lane.b32.xlu0 %v408, 6
        %v813 = vpop.permute.xlu0 %812
        %814 = vrot.lane.b32.xlu0 %v407, 6
        %v815 = vpop.permute.xlu0 %814
        %816 = vrot.lane.b32.xlu0 %v411, 6
        %v817 = vpop.permute.xlu0 %816
        %818 = vrot.lane.b32.xlu0 %v410, 6
        %v819 = vpop.permute.xlu0 %818
        %820 = vrot.lane.b32.xlu0 %v771, 6
        %v821 = vpop.permute.xlu0 %820
        %822 = vrot.lane.b32.xlu0 %v770, 6
        %v823 = vpop.permute.xlu0 %822
        %v850 = vrot.slane %v222, 3
        %v851 = vrot.slane %v223, 3
        %v852 = vsel %vm490, %v850, %v851
        %853 = vrot.lane.b32.xlu0 %v496, 7
        %v854 = vpop.permute.xlu0 %853
        %855 = vrot.lane.b32.xlu0 %v495, 7
        %v856 = vpop.permute.xlu0 %855
        %857 = vrot.lane.b32.xlu0 %v499, 7
        %v858 = vpop.permute.xlu0 %857
        %859 = vrot.lane.b32.xlu0 %v498, 7
        %v860 = vpop.permute.xlu0 %859
        %861 = vrot.lane.b32.xlu0 %v502, 7
        %v862 = vpop.permute.xlu0 %861
        %863 = vrot.lane.b32.xlu0 %v501, 7
        %v864 = vpop.permute.xlu0 %863
        %865 = vrot.lane.b32.xlu0 %v505, 7
        %v866 = vpop.permute.xlu0 %865
        %867 = vrot.lane.b32.xlu0 %v504, 7
        %v868 = vpop.permute.xlu0 %867
        %869 = vrot.lane.b32.xlu0 %v508, 7
        %v870 = vpop.permute.xlu0 %869
        %871 = vrot.lane.b32.xlu0 %v507, 7
        %v872 = vpop.permute.xlu0 %871
        %873 = vrot.lane.b32.xlu0 %v511, 7
        %v874 = vpop.permute.xlu0 %873
        %875 = vrot.lane.b32.xlu0 %v510, 7
        %v876 = vpop.permute.xlu0 %875
        %877 = vrot.lane.b32.xlu0 %v514, 7
        %v878 = vpop.permute.xlu0 %877
        %879 = vrot.lane.b32.xlu0 %v513, 7
        %v880 = vpop.permute.xlu0 %879
        %881 = vrot.lane.b32.xlu0 %v517, 7
        %v882 = vpop.permute.xlu0 %881
        %883 = vrot.lane.b32.xlu0 %v516, 7
        %v884 = vpop.permute.xlu0 %883
        %885 = vrot.lane.b32.xlu0 %v520, 7
        %v886 = vpop.permute.xlu0 %885
        %887 = vrot.lane.b32.xlu0 %v519, 7
        %v888 = vpop.permute.xlu0 %887
        %889 = vrot.lane.b32.xlu0 %v523, 7
        %v890 = vpop.permute.xlu0 %889
        %891 = vrot.lane.b32.xlu0 %v522, 7
        %v892 = vpop.permute.xlu0 %891
        %893 = vrot.lane.b32.xlu0 %v526, 7
        %v894 = vpop.permute.xlu0 %893
        %895 = vrot.lane.b32.xlu0 %v525, 7
        %v896 = vpop.permute.xlu0 %895
        %897 = vrot.lane.b32.xlu0 %v529, 7
        %v898 = vpop.permute.xlu0 %897
        %899 = vrot.lane.b32.xlu0 %v528, 7
        %v900 = vpop.permute.xlu0 %899
        %901 = vrot.lane.b32.xlu0 %v852, 7
        %v902 = vpop.permute.xlu0 %901
        %903 = vrot.lane.b32.xlu0 %v851, 7
        %v904 = vpop.permute.xlu0 %903
        %933 = vrot.lane.b32.xlu0 %v200, 8
        %v934 = vpop.permute.xlu0 %933
        %935 = vrot.lane.b32.xlu0 %v201, 8
        %v936 = vpop.permute.xlu0 %935
        %937 = vrot.lane.b32.xlu0 %v202, 8
        %v938 = vpop.permute.xlu0 %937
        %939 = vrot.lane.b32.xlu0 %v203, 8
        %v940 = vpop.permute.xlu0 %939
        %941 = vrot.lane.b32.xlu0 %v204, 8
        %v942 = vpop.permute.xlu0 %941
        %943 = vrot.lane.b32.xlu0 %v205, 8
        %v944 = vpop.permute.xlu0 %943
        %945 = vrot.lane.b32.xlu0 %v206, 8
        %v946 = vpop.permute.xlu0 %945
        %947 = vrot.lane.b32.xlu0 %v207, 8
        %v948 = vpop.permute.xlu0 %947
        %949 = vrot.lane.b32.xlu0 %v208, 8
        %v950 = vpop.permute.xlu0 %949
        %951 = vrot.lane.b32.xlu0 %v209, 8
        %v952 = vpop.permute.xlu0 %951
        %953 = vrot.lane.b32.xlu0 %v210, 8
        %v954 = vpop.permute.xlu0 %953
        %955 = vrot.lane.b32.xlu0 %v211, 8
        %v956 = vpop.permute.xlu0 %955
        %957 = vrot.lane.b32.xlu0 %v212, 8
        %v958 = vpop.permute.xlu0 %957
        %959 = vrot.lane.b32.xlu0 %v213, 8
        %v960 = vpop.permute.xlu0 %959
        %961 = vrot.lane.b32.xlu0 %v214, 8
        %v962 = vpop.permute.xlu0 %961
        %963 = vrot.lane.b32.xlu0 %v215, 8
        %v964 = vpop.permute.xlu0 %963
        %965 = vrot.lane.b32.xlu0 %v216, 8
        %v966 = vpop.permute.xlu0 %965
        %967 = vrot.lane.b32.xlu0 %v217, 8
        %v968 = vpop.permute.xlu0 %967
        %969 = vrot.lane.b32.xlu0 %v218, 8
        %v970 = vpop.permute.xlu0 %969
        %971 = vrot.lane.b32.xlu0 %v219, 8
        %v972 = vpop.permute.xlu0 %971
        %973 = vrot.lane.b32.xlu0 %v220, 8
        %v974 = vpop.permute.xlu0 %973
        %975 = vrot.lane.b32.xlu0 %v221, 8
        %v976 = vpop.permute.xlu0 %975
        %977 = vrot.lane.b32.xlu0 %v222, 8
        %v978 = vpop.permute.xlu0 %977
        %979 = vrot.lane.b32.xlu0 %v223, 8
        %v980 = vpop.permute.xlu0 %979
        %981 = vrot.lane.b32.xlu0 %v224, 8
        %v982 = vpop.permute.xlu0 %981
        %983 = vrot.lane.b32.xlu0 %v225, 8
        %v984 = vpop.permute.xlu0 %983
        %v1011 = vrot.slane %v224, 1
        %v1012 = vrot.slane %v225, 1
        %v1013 = vsel %vm254, %v1011, %v1012
        %1014 = vrot.lane.b32.xlu0 %v263, 9
        %v1015 = vpop.permute.xlu0 %1014
        %1016 = vrot.lane.b32.xlu0 %v262, 9
        %v1017 = vpop.permute.xlu0 %1016
        %1018 = vrot.lane.b32.xlu0 %v266, 9
        %v1019 = vpop.permute.xlu0 %1018
        %1020 = vrot.lane.b32.xlu0 %v265, 9
        %v1021 = vpop.permute.xlu0 %1020
        %1022 = vrot.lane.b32.xlu0 %v269, 9
        %v1023 = vpop.permute.xlu0 %1022
        %1024 = vrot.lane.b32.xlu0 %v268, 9
        %v1025 = vpop.permute.xlu0 %1024
        %1026 = vrot.lane.b32.xlu0 %v272, 9
        %v1027 = vpop.permute.xlu0 %1026
        %1028 = vrot.lane.b32.xlu0 %v271, 9
        %v1029 = vpop.permute.xlu0 %1028
        %1030 = vrot.lane.b32.xlu0 %v275, 9
        %v1031 = vpop.permute.xlu0 %1030
        %1032 = vrot.lane.b32.xlu0 %v274, 9
        %v1033 = vpop.permute.xlu0 %1032
        %1034 = vrot.lane.b32.xlu0 %v278, 9
        %v1035 = vpop.permute.xlu0 %1034
        %1036 = vrot.lane.b32.xlu0 %v277, 9
        %v1037 = vpop.permute.xlu0 %1036
        %1038 = vrot.lane.b32.xlu0 %v281, 9
        %v1039 = vpop.permute.xlu0 %1038
        %1040 = vrot.lane.b32.xlu0 %v280, 9
        %v1041 = vpop.permute.xlu0 %1040
        %1042 = vrot.lane.b32.xlu0 %v284, 9
        %v1043 = vpop.permute.xlu0 %1042
        %1044 = vrot.lane.b32.xlu0 %v283, 9
        %v1045 = vpop.permute.xlu0 %1044
        %1046 = vrot.lane.b32.xlu0 %v287, 9
        %v1047 = vpop.permute.xlu0 %1046
        %1048 = vrot.lane.b32.xlu0 %v286, 9
        %v1049 = vpop.permute.xlu0 %1048
        %1050 = vrot.lane.b32.xlu0 %v290, 9
        %v1051 = vpop.permute.xlu0 %1050
        %1052 = vrot.lane.b32.xlu0 %v289, 9
        %v1053 = vpop.permute.xlu0 %1052
        %1054 = vrot.lane.b32.xlu0 %v293, 9
        %v1055 = vpop.permute.xlu0 %1054
        %1056 = vrot.lane.b32.xlu0 %v292, 9
        %v1057 = vpop.permute.xlu0 %1056
        %1058 = vrot.lane.b32.xlu0 %v690, 9
        %v1059 = vpop.permute.xlu0 %1058
        %1060 = vrot.lane.b32.xlu0 %v689, 9
        %v1061 = vpop.permute.xlu0 %1060
        %1062 = vrot.lane.b32.xlu0 %v1013, 9
        %v1063 = vpop.permute.xlu0 %1062
        %1064 = vrot.lane.b32.xlu0 %v1012, 9
        %v1065 = vpop.permute.xlu0 %1064
        %v1092 = vrot.slane %v224, 2
        %v1093 = vrot.slane %v225, 2
        %v1094 = vsel %vm372, %v1092, %v1093
        %1095 = vrot.lane.b32.xlu0 %v381, 10
        %v1096 = vpop.permute.xlu0 %1095
        %1097 = vrot.lane.b32.xlu0 %v380, 10
        %v1098 = vpop.permute.xlu0 %1097
        %1099 = vrot.lane.b32.xlu0 %v384, 10
        %v1100 = vpop.permute.xlu0 %1099
        %1101 = vrot.lane.b32.xlu0 %v383, 10
        %v1102 = vpop.permute.xlu0 %1101
        %1103 = vrot.lane.b32.xlu0 %v387, 10
        %v1104 = vpop.permute.xlu0 %1103
        %1105 = vrot.lane.b32.xlu0 %v386, 10
        %v1106 = vpop.permute.xlu0 %1105
        %1107 = vrot.lane.b32.xlu0 %v390, 10
        %v1108 = vpop.permute.xlu0 %1107
        %1109 = vrot.lane.b32.xlu0 %v389, 10
        %v1110 = vpop.permute.xlu0 %1109
        %1111 = vrot.lane.b32.xlu0 %v393, 10
        %v1112 = vpop.permute.xlu0 %1111
        %1113 = vrot.lane.b32.xlu0 %v392, 10
        %v1114 = vpop.permute.xlu0 %1113
        %1115 = vrot.lane.b32.xlu0 %v396, 10
        %v1116 = vpop.permute.xlu0 %1115
        %1117 = vrot.lane.b32.xlu0 %v395, 10
        %v1118 = vpop.permute.xlu0 %1117
        %1119 = vrot.lane.b32.xlu0 %v399, 10
        %v1120 = vpop.permute.xlu0 %1119
        %1121 = vrot.lane.b32.xlu0 %v398, 10
        %v1122 = vpop.permute.xlu0 %1121
        %1123 = vrot.lane.b32.xlu0 %v402, 10
        %v1124 = vpop.permute.xlu0 %1123
        %1125 = vrot.lane.b32.xlu0 %v401, 10
        %v1126 = vpop.permute.xlu0 %1125
        %1127 = vrot.lane.b32.xlu0 %v405, 10
        %v1128 = vpop.permute.xlu0 %1127
        %1129 = vrot.lane.b32.xlu0 %v404, 10
        %v1130 = vpop.permute.xlu0 %1129
        %1131 = vrot.lane.b32.xlu0 %v408, 10
        %v1132 = vpop.permute.xlu0 %1131
        %1133 = vrot.lane.b32.xlu0 %v407, 10
        %v1134 = vpop.permute.xlu0 %1133
        %1135 = vrot.lane.b32.xlu0 %v411, 10
        %v1136 = vpop.permute.xlu0 %1135
        %1137 = vrot.lane.b32.xlu0 %v410, 10
        %v1138 = vpop.permute.xlu0 %1137
        %1139 = vrot.lane.b32.xlu0 %v771, 10
        %v1140 = vpop.permute.xlu0 %1139
        %1141 = vrot.lane.b32.xlu0 %v770, 10
        %v1142 = vpop.permute.xlu0 %1141
        %1143 = vrot.lane.b32.xlu0 %v1094, 10
        %v1144 = vpop.permute.xlu0 %1143
        %1145 = vrot.lane.b32.xlu0 %v1093, 10
        %v1146 = vpop.permute.xlu0 %1145
        %v1173 = vrot.slane %v224, 3
        %v1174 = vrot.slane %v225, 3
        %v1175 = vsel %vm490, %v1173, %v1174
        %1176 = vrot.lane.b32.xlu0 %v499, 11
        %v1177 = vpop.permute.xlu0 %1176
        %1178 = vrot.lane.b32.xlu0 %v498, 11
        %v1179 = vpop.permute.xlu0 %1178
        %1180 = vrot.lane.b32.xlu0 %v502, 11
        %v1181 = vpop.permute.xlu0 %1180
        %1182 = vrot.lane.b32.xlu0 %v501, 11
        %v1183 = vpop.permute.xlu0 %1182
        %1184 = vrot.lane.b32.xlu0 %v505, 11
        %v1185 = vpop.permute.xlu0 %1184
        %1186 = vrot.lane.b32.xlu0 %v504, 11
        %v1187 = vpop.permute.xlu0 %1186
        %1188 = vrot.lane.b32.xlu0 %v508, 11
        %v1189 = vpop.permute.xlu0 %1188
        %1190 = vrot.lane.b32.xlu0 %v507, 11
        %v1191 = vpop.permute.xlu0 %1190
        %1192 = vrot.lane.b32.xlu0 %v511, 11
        %v1193 = vpop.permute.xlu0 %1192
        %1194 = vrot.lane.b32.xlu0 %v510, 11
        %v1195 = vpop.permute.xlu0 %1194
        %1196 = vrot.lane.b32.xlu0 %v514, 11
        %v1197 = vpop.permute.xlu0 %1196
        %1198 = vrot.lane.b32.xlu0 %v513, 11
        %v1199 = vpop.permute.xlu0 %1198
        %1200 = vrot.lane.b32.xlu0 %v517, 11
        %v1201 = vpop.permute.xlu0 %1200
        %1202 = vrot.lane.b32.xlu0 %v516, 11
        %v1203 = vpop.permute.xlu0 %1202
        %1204 = vrot.lane.b32.xlu0 %v520, 11
        %v1205 = vpop.permute.xlu0 %1204
        %1206 = vrot.lane.b32.xlu0 %v519, 11
        %v1207 = vpop.permute.xlu0 %1206
        %1208 = vrot.lane.b32.xlu0 %v523, 11
        %v1209 = vpop.permute.xlu0 %1208
        %1210 = vrot.lane.b32.xlu0 %v522, 11
        %v1211 = vpop.permute.xlu0 %1210
        %1212 = vrot.lane.b32.xlu0 %v526, 11
        %v1213 = vpop.permute.xlu0 %1212
        %1214 = vrot.lane.b32.xlu0 %v525, 11
        %v1215 = vpop.permute.xlu0 %1214
        %1216 = vrot.lane.b32.xlu0 %v529, 11
        %v1217 = vpop.permute.xlu0 %1216
        %1218 = vrot.lane.b32.xlu0 %v528, 11
        %v1219 = vpop.permute.xlu0 %1218
        %1220 = vrot.lane.b32.xlu0 %v852, 11
        %v1221 = vpop.permute.xlu0 %1220
        %1222 = vrot.lane.b32.xlu0 %v851, 11
        %v1223 = vpop.permute.xlu0 %1222
        %1224 = vrot.lane.b32.xlu0 %v1175, 11
        %v1225 = vpop.permute.xlu0 %1224
        %1226 = vrot.lane.b32.xlu0 %v1174, 11
        %v1227 = vpop.permute.xlu0 %1226
        %1256 = vrot.lane.b32.xlu0 %v202, 12
        %v1257 = vpop.permute.xlu0 %1256
        %1258 = vrot.lane.b32.xlu0 %v203, 12
        %v1259 = vpop.permute.xlu0 %1258
        %1260 = vrot.lane.b32.xlu0 %v204, 12
        %v1261 = vpop.permute.xlu0 %1260
        %1262 = vrot.lane.b32.xlu0 %v205, 12
        %v1263 = vpop.permute.xlu0 %1262
        %1264 = vrot.lane.b32.xlu0 %v206, 12
        %v1265 = vpop.permute.xlu0 %1264
        %1266 = vrot.lane.b32.xlu0 %v207, 12
        %v1267 = vpop.permute.xlu0 %1266
        %1268 = vrot.lane.b32.xlu0 %v208, 12
        %v1269 = vpop.permute.xlu0 %1268
        %1270 = vrot.lane.b32.xlu0 %v209, 12
        %v1271 = vpop.permute.xlu0 %1270
        %1272 = vrot.lane.b32.xlu0 %v210, 12
        %v1273 = vpop.permute.xlu0 %1272
        %1274 = vrot.lane.b32.xlu0 %v211, 12
        %v1275 = vpop.permute.xlu0 %1274
        %1276 = vrot.lane.b32.xlu0 %v212, 12
        %v1277 = vpop.permute.xlu0 %1276
        %1278 = vrot.lane.b32.xlu0 %v213, 12
        %v1279 = vpop.permute.xlu0 %1278
        %1280 = vrot.lane.b32.xlu0 %v214, 12
        %v1281 = vpop.permute.xlu0 %1280
        %1282 = vrot.lane.b32.xlu0 %v215, 12
        %v1283 = vpop.permute.xlu0 %1282
        %1284 = vrot.lane.b32.xlu0 %v216, 12
        %v1285 = vpop.permute.xlu0 %1284
        %1286 = vrot.lane.b32.xlu0 %v217, 12
        %v1287 = vpop.permute.xlu0 %1286
        %1288 = vrot.lane.b32.xlu0 %v218, 12
        %v1289 = vpop.permute.xlu0 %1288
        %1290 = vrot.lane.b32.xlu0 %v219, 12
        %v1291 = vpop.permute.xlu0 %1290
        %1292 = vrot.lane.b32.xlu0 %v220, 12
        %v1293 = vpop.permute.xlu0 %1292
        %1294 = vrot.lane.b32.xlu0 %v221, 12
        %v1295 = vpop.permute.xlu0 %1294
        %1296 = vrot.lane.b32.xlu0 %v222, 12
        %v1297 = vpop.permute.xlu0 %1296
        %1298 = vrot.lane.b32.xlu0 %v223, 12
        %v1299 = vpop.permute.xlu0 %1298
        %1300 = vrot.lane.b32.xlu0 %v224, 12
        %v1301 = vpop.permute.xlu0 %1300
        %1302 = vrot.lane.b32.xlu0 %v225, 12
        %v1303 = vpop.permute.xlu0 %1302
        %1304 = vrot.lane.b32.xlu0 %v226, 12
        %v1305 = vpop.permute.xlu0 %1304
        %1306 = vrot.lane.b32.xlu0 %v227, 12
        %v1307 = vpop.permute.xlu0 %1306
        %v1334 = vrot.slane %v226, 1
        %v1335 = vrot.slane %v227, 1
        %v1336 = vsel %vm254, %v1334, %v1335
        %1337 = vrot.lane.b32.xlu0 %v266, 13
        %v1338 = vpop.permute.xlu0 %1337
        %1339 = vrot.lane.b32.xlu0 %v265, 13
        %v1340 = vpop.permute.xlu0 %1339
        %1341 = vrot.lane.b32.xlu0 %v269, 13
        %v1342 = vpop.permute.xlu0 %1341
        %1343 = vrot.lane.b32.xlu0 %v268, 13
        %v1344 = vpop.permute.xlu0 %1343
        %1345 = vrot.lane.b32.xlu0 %v272, 13
        %v1346 = vpop.permute.xlu0 %1345
        %1347 = vrot.lane.b32.xlu0 %v271, 13
        %v1348 = vpop.permute.xlu0 %1347
        %1349 = vrot.lane.b32.xlu0 %v275, 13
        %v1350 = vpop.permute.xlu0 %1349
        %1351 = vrot.lane.b32.xlu0 %v274, 13
        %v1352 = vpop.permute.xlu0 %1351
        %1353 = vrot.lane.b32.xlu0 %v278, 13
        %v1354 = vpop.permute.xlu0 %1353
        %1355 = vrot.lane.b32.xlu0 %v277, 13
        %v1356 = vpop.permute.xlu0 %1355
        %1357 = vrot.lane.b32.xlu0 %v281, 13
        %v1358 = vpop.permute.xlu0 %1357
        %1359 = vrot.lane.b32.xlu0 %v280, 13
        %v1360 = vpop.permute.xlu0 %1359
        %1361 = vrot.lane.b32.xlu0 %v284, 13
        %v1362 = vpop.permute.xlu0 %1361
        %1363 = vrot.lane.b32.xlu0 %v283, 13
        %v1364 = vpop.permute.xlu0 %1363
        %1365 = vrot.lane.b32.xlu0 %v287, 13
        %v1366 = vpop.permute.xlu0 %1365
        %1367 = vrot.lane.b32.xlu0 %v286, 13
        %v1368 = vpop.permute.xlu0 %1367
        %1369 = vrot.lane.b32.xlu0 %v290, 13
        %v1370 = vpop.permute.xlu0 %1369
        %1371 = vrot.lane.b32.xlu0 %v289, 13
        %v1372 = vpop.permute.xlu0 %1371
        %1373 = vrot.lane.b32.xlu0 %v293, 13
        %v1374 = vpop.permute.xlu0 %1373
        %1375 = vrot.lane.b32.xlu0 %v292, 13
        %v1376 = vpop.permute.xlu0 %1375
        %1377 = vrot.lane.b32.xlu0 %v690, 13
        %v1378 = vpop.permute.xlu0 %1377
        %1379 = vrot.lane.b32.xlu0 %v689, 13
        %v1380 = vpop.permute.xlu0 %1379
        %1381 = vrot.lane.b32.xlu0 %v1013, 13
        %v1382 = vpop.permute.xlu0 %1381
        %1383 = vrot.lane.b32.xlu0 %v1012, 13
        %v1384 = vpop.permute.xlu0 %1383
        %1385 = vrot.lane.b32.xlu0 %v1336, 13
        %v1386 = vpop.permute.xlu0 %1385
        %1387 = vrot.lane.b32.xlu0 %v1335, 13
        %v1388 = vpop.permute.xlu0 %1387
        %v1415 = vrot.slane %v226, 2
        %v1416 = vrot.slane %v227, 2
        %v1417 = vsel %vm372, %v1415, %v1416
        %1418 = vrot.lane.b32.xlu0 %v384, 14
        %v1419 = vpop.permute.xlu0 %1418
        %1420 = vrot.lane.b32.xlu0 %v383, 14
        %v1421 = vpop.permute.xlu0 %1420
        %1422 = vrot.lane.b32.xlu0 %v387, 14
        %v1423 = vpop.permute.xlu0 %1422
        %1424 = vrot.lane.b32.xlu0 %v386, 14
        %v1425 = vpop.permute.xlu0 %1424
        %1426 = vrot.lane.b32.xlu0 %v390, 14
        %v1427 = vpop.permute.xlu0 %1426
        %1428 = vrot.lane.b32.xlu0 %v389, 14
        %v1429 = vpop.permute.xlu0 %1428
        %1430 = vrot.lane.b32.xlu0 %v393, 14
        %v1431 = vpop.permute.xlu0 %1430
        %1432 = vrot.lane.b32.xlu0 %v392, 14
        %v1433 = vpop.permute.xlu0 %1432
        %1434 = vrot.lane.b32.xlu0 %v396, 14
        %v1435 = vpop.permute.xlu0 %1434
        %1436 = vrot.lane.b32.xlu0 %v395, 14
        %v1437 = vpop.permute.xlu0 %1436
        %1438 = vrot.lane.b32.xlu0 %v399, 14
        %v1439 = vpop.permute.xlu0 %1438
        %1440 = vrot.lane.b32.xlu0 %v398, 14
        %v1441 = vpop.permute.xlu0 %1440
        %1442 = vrot.lane.b32.xlu0 %v402, 14
        %v1443 = vpop.permute.xlu0 %1442
        %1444 = vrot.lane.b32.xlu0 %v401, 14
        %v1445 = vpop.permute.xlu0 %1444
        %1446 = vrot.lane.b32.xlu0 %v405, 14
        %v1447 = vpop.permute.xlu0 %1446
        %1448 = vrot.lane.b32.xlu0 %v404, 14
        %v1449 = vpop.permute.xlu0 %1448
        %1450 = vrot.lane.b32.xlu0 %v408, 14
        %v1451 = vpop.permute.xlu0 %1450
        %1452 = vrot.lane.b32.xlu0 %v407, 14
        %v1453 = vpop.permute.xlu0 %1452
        %1454 = vrot.lane.b32.xlu0 %v411, 14
        %v1455 = vpop.permute.xlu0 %1454
        %1456 = vrot.lane.b32.xlu0 %v410, 14
        %v1457 = vpop.permute.xlu0 %1456
        %1458 = vrot.lane.b32.xlu0 %v771, 14
        %v1459 = vpop.permute.xlu0 %1458
        %1460 = vrot.lane.b32.xlu0 %v770, 14
        %v1461 = vpop.permute.xlu0 %1460
        %1462 = vrot.lane.b32.xlu0 %v1094, 14
        %v1463 = vpop.permute.xlu0 %1462
        %1464 = vrot.lane.b32.xlu0 %v1093, 14
        %v1465 = vpop.permute.xlu0 %1464
        %1466 = vrot.lane.b32.xlu0 %v1417, 14
        %v1467 = vpop.permute.xlu0 %1466
        %1468 = vrot.lane.b32.xlu0 %v1416, 14
        %v1469 = vpop.permute.xlu0 %1468
        %v1496 = vrot.slane %v226, 3
        %v1497 = vrot.slane %v227, 3
        %v1498 = vsel %vm490, %v1496, %v1497
        %1499 = vrot.lane.b32.xlu0 %v502, 15
        %v1500 = vpop.permute.xlu0 %1499
        %1501 = vrot.lane.b32.xlu0 %v501, 15
        %v1502 = vpop.permute.xlu0 %1501
        %1503 = vrot.lane.b32.xlu0 %v505, 15
        %v1504 = vpop.permute.xlu0 %1503
        %1505 = vrot.lane.b32.xlu0 %v504, 15
        %v1506 = vpop.permute.xlu0 %1505
        %1507 = vrot.lane.b32.xlu0 %v508, 15
        %v1508 = vpop.permute.xlu0 %1507
        %1509 = vrot.lane.b32.xlu0 %v507, 15
        %v1510 = vpop.permute.xlu0 %1509
        %1511 = vrot.lane.b32.xlu0 %v511, 15
        %v1512 = vpop.permute.xlu0 %1511
        %1513 = vrot.lane.b32.xlu0 %v510, 15
        %v1514 = vpop.permute.xlu0 %1513
        %1515 = vrot.lane.b32.xlu0 %v514, 15
        %v1516 = vpop.permute.xlu0 %1515
        %1517 = vrot.lane.b32.xlu0 %v513, 15
        %v1518 = vpop.permute.xlu0 %1517
        %1519 = vrot.lane.b32.xlu0 %v517, 15
        %v1520 = vpop.permute.xlu0 %1519
        %1521 = vrot.lane.b32.xlu0 %v516, 15
        %v1522 = vpop.permute.xlu0 %1521
        %1523 = vrot.lane.b32.xlu0 %v520, 15
        %v1524 = vpop.permute.xlu0 %1523
        %1525 = vrot.lane.b32.xlu0 %v519, 15
        %v1526 = vpop.permute.xlu0 %1525
        %1527 = vrot.lane.b32.xlu0 %v523, 15
        %v1528 = vpop.permute.xlu0 %1527
        %1529 = vrot.lane.b32.xlu0 %v522, 15
        %v1530 = vpop.permute.xlu0 %1529
        %1531 = vrot.lane.b32.xlu0 %v526, 15
        %v1532 = vpop.permute.xlu0 %1531
        %1533 = vrot.lane.b32.xlu0 %v525, 15
        %v1534 = vpop.permute.xlu0 %1533
        %1535 = vrot.lane.b32.xlu0 %v529, 15
        %v1536 = vpop.permute.xlu0 %1535
        %1537 = vrot.lane.b32.xlu0 %v528, 15
        %v1538 = vpop.permute.xlu0 %1537
        %1539 = vrot.lane.b32.xlu0 %v852, 15
        %v1540 = vpop.permute.xlu0 %1539
        %1541 = vrot.lane.b32.xlu0 %v851, 15
        %v1542 = vpop.permute.xlu0 %1541
        %1543 = vrot.lane.b32.xlu0 %v1175, 15
        %v1544 = vpop.permute.xlu0 %1543
        %1545 = vrot.lane.b32.xlu0 %v1174, 15
        %v1546 = vpop.permute.xlu0 %1545
        %1547 = vrot.lane.b32.xlu0 %v1498, 15
        %v1548 = vpop.permute.xlu0 %1547
        %1549 = vrot.lane.b32.xlu0 %v1497, 15
        %v1550 = vpop.permute.xlu0 %1549
        %vm1577 = vcmask 7168
        %v1578 = vsel %vm1577, %v196, %v295
        %v1579 = vsel %vm1577, %v197, %v297
        %v1580 = vsel %vm1577, %v198, %v299
        %v1581 = vsel %vm1577, %v199, %v301
        %v1582 = vsel %vm1577, %v200, %v303
        %v1583 = vsel %vm1577, %v201, %v305
        %v1584 = vsel %vm1577, %v202, %v307
        %v1585 = vsel %vm1577, %v203, %v309
        %v1586 = vsel %vm1577, %v204, %v311
        %v1587 = vsel %vm1577, %v205, %v313
        %v1588 = vsel %vm1577, %v206, %v315
        %v1589 = vsel %vm1577, %v207, %v317
        %v1590 = vsel %vm1577, %v208, %v319
        %v1591 = vsel %vm1577, %v209, %v321
        %v1592 = vsel %vm1577, %v210, %v323
        %v1593 = vsel %vm1577, %v211, %v325
        %v1594 = vsel %vm1577, %v212, %v327
        %v1595 = vsel %vm1577, %v213, %v329
        %v1596 = vsel %vm1577, %v214, %v331
        %v1597 = vsel %vm1577, %v215, %v333
        %v1598 = vsel %vm1577, %v216, %v335
        %v1599 = vsel %vm1577, %v217, %v337
        %v1600 = vsel %vm1577, %v218, %v339
        %v1601 = vsel %vm1577, %v219, %v341
        %v1602 = vsel %vm1577, %v220, %v343
        %v1603 = vsel %vm1577, %v221, %v345
        %vm1604 = vcmask 15360
        %v1605 = vsel %vm1604, %v1578, %v413
        %v1606 = vsel %vm1604, %v1579, %v415
        %v1607 = vsel %vm1604, %v1580, %v417
        %v1608 = vsel %vm1604, %v1581, %v419
        %v1609 = vsel %vm1604, %v1582, %v421
        %v1610 = vsel %vm1604, %v1583, %v423
        %v1611 = vsel %vm1604, %v1584, %v425
        %v1612 = vsel %vm1604, %v1585, %v427
        %v1613 = vsel %vm1604, %v1586, %v429
        %v1614 = vsel %vm1604, %v1587, %v431
        %v1615 = vsel %vm1604, %v1588, %v433
        %v1616 = vsel %vm1604, %v1589, %v435
        %v1617 = vsel %vm1604, %v1590, %v437
        %v1618 = vsel %vm1604, %v1591, %v439
        %v1619 = vsel %vm1604, %v1592, %v441
        %v1620 = vsel %vm1604, %v1593, %v443
        %v1621 = vsel %vm1604, %v1594, %v445
        %v1622 = vsel %vm1604, %v1595, %v447
        %v1623 = vsel %vm1604, %v1596, %v449
        %v1624 = vsel %vm1604, %v1597, %v451
        %v1625 = vsel %vm1604, %v1598, %v453
        %v1626 = vsel %vm1604, %v1599, %v455
        %v1627 = vsel %vm1604, %v1600, %v457
        %v1628 = vsel %vm1604, %v1601, %v459
        %v1629 = vsel %vm1604, %v1602, %v461
        %v1630 = vsel %vm1604, %v1603, %v463
        %vm1631 = vcmask 23552
        %v1632 = vsel %vm1631, %v1605, %v531
        %v1633 = vsel %vm1631, %v1606, %v533
        %v1634 = vsel %vm1631, %v1607, %v535
        %v1635 = vsel %vm1631, %v1608, %v537
        %v1636 = vsel %vm1631, %v1609, %v539
        %v1637 = vsel %vm1631, %v1610, %v541
        %v1638 = vsel %vm1631, %v1611, %v543
        %v1639 = vsel %vm1631, %v1612, %v545
        %v1640 = vsel %vm1631, %v1613, %v547
        %v1641 = vsel %vm1631, %v1614, %v549
        %v1642 = vsel %vm1631, %v1615, %v551
        %v1643 = vsel %vm1631, %v1616, %v553
        %v1644 = vsel %vm1631, %v1617, %v555
        %v1645 = vsel %vm1631, %v1618, %v557
        %v1646 = vsel %vm1631, %v1619, %v559
        %v1647 = vsel %vm1631, %v1620, %v561
        %v1648 = vsel %vm1631, %v1621, %v563
        %v1649 = vsel %vm1631, %v1622, %v565
        %v1650 = vsel %vm1631, %v1623, %v567
        %v1651 = vsel %vm1631, %v1624, %v569
        %v1652 = vsel %vm1631, %v1625, %v571
        %v1653 = vsel %vm1631, %v1626, %v573
        %v1654 = vsel %vm1631, %v1627, %v575
        %v1655 = vsel %vm1631, %v1628, %v577
        %v1656 = vsel %vm1631, %v1629, %v579
        %v1657 = vsel %vm1631, %v1630, %v581
        %vm1658 = vcmask 31744
        %v1659 = vsel %vm1658, %v1632, %v611
        %v1660 = vsel %vm1658, %v1633, %v613
        %v1661 = vsel %vm1658, %v1634, %v615
        %v1662 = vsel %vm1658, %v1635, %v617
        %v1663 = vsel %vm1658, %v1636, %v619
        %v1664 = vsel %vm1658, %v1637, %v621
        %v1665 = vsel %vm1658, %v1638, %v623
        %v1666 = vsel %vm1658, %v1639, %v625
        %v1667 = vsel %vm1658, %v1640, %v627
        %v1668 = vsel %vm1658, %v1641, %v629
        %v1669 = vsel %vm1658, %v1642, %v631
        %v1670 = vsel %vm1658, %v1643, %v633
        %v1671 = vsel %vm1658, %v1644, %v635
        %v1672 = vsel %vm1658, %v1645, %v637
        %v1673 = vsel %vm1658, %v1646, %v639
        %v1674 = vsel %vm1658, %v1647, %v641
        %v1675 = vsel %vm1658, %v1648, %v643
        %v1676 = vsel %vm1658, %v1649, %v645
        %v1677 = vsel %vm1658, %v1650, %v647
        %v1678 = vsel %vm1658, %v1651, %v649
        %v1679 = vsel %vm1658, %v1652, %v651
        %v1680 = vsel %vm1658, %v1653, %v653
        %v1681 = vsel %vm1658, %v1654, %v655
        %v1682 = vsel %vm1658, %v1655, %v657
        %v1683 = vsel %vm1658, %v1656, %v659
        %v1684 = vsel %vm1658, %v1657, %v661
        %vm1685 = vcmask 39936
        %v1686 = vsel %vm1685, %v1659, %v692
        %v1687 = vsel %vm1685, %v1660, %v694
        %v1688 = vsel %vm1685, %v1661, %v696
        %v1689 = vsel %vm1685, %v1662, %v698
        %v1690 = vsel %vm1685, %v1663, %v700
        %v1691 = vsel %vm1685, %v1664, %v702
        %v1692 = vsel %vm1685, %v1665, %v704
        %v1693 = vsel %vm1685, %v1666, %v706
        %v1694 = vsel %vm1685, %v1667, %v708
        %v1695 = vsel %vm1685, %v1668, %v710
        %v1696 = vsel %vm1685, %v1669, %v712
        %v1697 = vsel %vm1685, %v1670, %v714
        %v1698 = vsel %vm1685, %v1671, %v716
        %v1699 = vsel %vm1685, %v1672, %v718
        %v1700 = vsel %vm1685, %v1673, %v720
        %v1701 = vsel %vm1685, %v1674, %v722
        %v1702 = vsel %vm1685, %v1675, %v724
        %v1703 = vsel %vm1685, %v1676, %v726
        %v1704 = vsel %vm1685, %v1677, %v728
        %v1705 = vsel %vm1685, %v1678, %v730
        %v1706 = vsel %vm1685, %v1679, %v732
        %v1707 = vsel %vm1685, %v1680, %v734
        %v1708 = vsel %vm1685, %v1681, %v736
        %v1709 = vsel %vm1685, %v1682, %v738
        %v1710 = vsel %vm1685, %v1683, %v740
        %v1711 = vsel %vm1685, %v1684, %v742
        %vm1712 = vcmask 48128
        %v1713 = vsel %vm1712, %v1686, %v773
        %v1714 = vsel %vm1712, %v1687, %v775
        %v1715 = vsel %vm1712, %v1688, %v777
        %v1716 = vsel %vm1712, %v1689, %v779
        %v1717 = vsel %vm1712, %v1690, %v781
        %v1718 = vsel %vm1712, %v1691, %v783
        %v1719 = vsel %vm1712, %v1692, %v785
        %v1720 = vsel %vm1712, %v1693, %v787
        %v1721 = vsel %vm1712, %v1694, %v789
        %v1722 = vsel %vm1712, %v1695, %v791
        %v1723 = vsel %vm1712, %v1696, %v793
        %v1724 = vsel %vm1712, %v1697, %v795
        %v1725 = vsel %vm1712, %v1698, %v797
        %v1726 = vsel %vm1712, %v1699, %v799
        %v1727 = vsel %vm1712, %v1700, %v801
        %v1728 = vsel %vm1712, %v1701, %v803
        %v1729 = vsel %vm1712, %v1702, %v805
        %v1730 = vsel %vm1712, %v1703, %v807
        %v1731 = vsel %vm1712, %v1704, %v809
        %v1732 = vsel %vm1712, %v1705, %v811
        %v1733 = vsel %vm1712, %v1706, %v813
        %v1734 = vsel %vm1712, %v1707, %v815
        %v1735 = vsel %vm1712, %v1708, %v817
        %v1736 = vsel %vm1712, %v1709, %v819
        %v1737 = vsel %vm1712, %v1710, %v821
        %v1738 = vsel %vm1712, %v1711, %v823
        %vm1739 = vcmask 56320
        %v1740 = vsel %vm1739, %v1713, %v854
        %v1741 = vsel %vm1739, %v1714, %v856
        %v1742 = vsel %vm1739, %v1715, %v858
        %v1743 = vsel %vm1739, %v1716, %v860
        %v1744 = vsel %vm1739, %v1717, %v862
        %v1745 = vsel %vm1739, %v1718, %v864
        %v1746 = vsel %vm1739, %v1719, %v866
        %v1747 = vsel %vm1739, %v1720, %v868
        %v1748 = vsel %vm1739, %v1721, %v870
        %v1749 = vsel %vm1739, %v1722, %v872
        %v1750 = vsel %vm1739, %v1723, %v874
        %v1751 = vsel %vm1739, %v1724, %v876
        %v1752 = vsel %vm1739, %v1725, %v878
        %v1753 = vsel %vm1739, %v1726, %v880
        %v1754 = vsel %vm1739, %v1727, %v882
        %v1755 = vsel %vm1739, %v1728, %v884
        %v1756 = vsel %vm1739, %v1729, %v886
        %v1757 = vsel %vm1739, %v1730, %v888
        %v1758 = vsel %vm1739, %v1731, %v890
        %v1759 = vsel %vm1739, %v1732, %v892
        %v1760 = vsel %vm1739, %v1733, %v894
        %v1761 = vsel %vm1739, %v1734, %v896
        %v1762 = vsel %vm1739, %v1735, %v898
        %v1763 = vsel %vm1739, %v1736, %v900
        %v1764 = vsel %vm1739, %v1737, %v902
        %v1765 = vsel %vm1739, %v1738, %v904
        %vm1766 = vcmask 64512
        %v1767 = vsel %vm1766, %v1740, %v934
        %v1768 = vsel %vm1766, %v1741, %v936
        %v1769 = vsel %vm1766, %v1742, %v938
        %v1770 = vsel %vm1766, %v1743, %v940
        %v1771 = vsel %vm1766, %v1744, %v942
        %v1772 = vsel %vm1766, %v1745, %v944
        %v1773 = vsel %vm1766, %v1746, %v946
        %v1774 = vsel %vm1766, %v1747, %v948
        %v1775 = vsel %vm1766, %v1748, %v950
        %v1776 = vsel %vm1766, %v1749, %v952
        %v1777 = vsel %vm1766, %v1750, %v954
        %v1778 = vsel %vm1766, %v1751, %v956
        %v1779 = vsel %vm1766, %v1752, %v958
        %v1780 = vsel %vm1766, %v1753, %v960
        %v1781 = vsel %vm1766, %v1754, %v962
        %v1782 = vsel %vm1766, %v1755, %v964
        %v1783 = vsel %vm1766, %v1756, %v966
        %v1784 = vsel %vm1766, %v1757, %v968
        %v1785 = vsel %vm1766, %v1758, %v970
        %v1786 = vsel %vm1766, %v1759, %v972
        %v1787 = vsel %vm1766, %v1760, %v974
        %v1788 = vsel %vm1766, %v1761, %v976
        %v1789 = vsel %vm1766, %v1762, %v978
        %v1790 = vsel %vm1766, %v1763, %v980
        %v1791 = vsel %vm1766, %v1764, %v982
        %v1792 = vsel %vm1766, %v1765, %v984
        %vm1793 = vcmask 72704
        %v1794 = vsel %vm1793, %v1767, %v1015
        %v1795 = vsel %vm1793, %v1768, %v1017
        %v1796 = vsel %vm1793, %v1769, %v1019
        %v1797 = vsel %vm1793, %v1770, %v1021
        %v1798 = vsel %vm1793, %v1771, %v1023
        %v1799 = vsel %vm1793, %v1772, %v1025
        %v1800 = vsel %vm1793, %v1773, %v1027
        %v1801 = vsel %vm1793, %v1774, %v1029
        %v1802 = vsel %vm1793, %v1775, %v1031
        %v1803 = vsel %vm1793, %v1776, %v1033
        %v1804 = vsel %vm1793, %v1777, %v1035
        %v1805 = vsel %vm1793, %v1778, %v1037
        %v1806 = vsel %vm1793, %v1779, %v1039
        %v1807 = vsel %vm1793, %v1780, %v1041
        %v1808 = vsel %vm1793, %v1781, %v1043
        %v1809 = vsel %vm1793, %v1782, %v1045
        %v1810 = vsel %vm1793, %v1783, %v1047
        %v1811 = vsel %vm1793, %v1784, %v1049
        %v1812 = vsel %vm1793, %v1785, %v1051
        %v1813 = vsel %vm1793, %v1786, %v1053
        %v1814 = vsel %vm1793, %v1787, %v1055
        %v1815 = vsel %vm1793, %v1788, %v1057
        %v1816 = vsel %vm1793, %v1789, %v1059
        %v1817 = vsel %vm1793, %v1790, %v1061
        %v1818 = vsel %vm1793, %v1791, %v1063
        %v1819 = vsel %vm1793, %v1792, %v1065
        %vm1820 = vcmask 80896
        %v1821 = vsel %vm1820, %v1794, %v1096
        %v1822 = vsel %vm1820, %v1795, %v1098
        %v1823 = vsel %vm1820, %v1796, %v1100
        %v1824 = vsel %vm1820, %v1797, %v1102
        %v1825 = vsel %vm1820, %v1798, %v1104
        %v1826 = vsel %vm1820, %v1799, %v1106
        %v1827 = vsel %vm1820, %v1800, %v1108
        %v1828 = vsel %vm1820, %v1801, %v1110
        %v1829 = vsel %vm1820, %v1802, %v1112
        %v1830 = vsel %vm1820, %v1803, %v1114
        %v1831 = vsel %vm1820, %v1804, %v1116
        %v1832 = vsel %vm1820, %v1805, %v1118
        %v1833 = vsel %vm1820, %v1806, %v1120
        %v1834 = vsel %vm1820, %v1807, %v1122
        %v1835 = vsel %vm1820, %v1808, %v1124
        %v1836 = vsel %vm1820, %v1809, %v1126
        %v1837 = vsel %vm1820, %v1810, %v1128
        %v1838 = vsel %vm1820, %v1811, %v1130
        %v1839 = vsel %vm1820, %v1812, %v1132
        %v1840 = vsel %vm1820, %v1813, %v1134
        %v1841 = vsel %vm1820, %v1814, %v1136
        %v1842 = vsel %vm1820, %v1815, %v1138
        %v1843 = vsel %vm1820, %v1816, %v1140
        %v1844 = vsel %vm1820, %v1817, %v1142
        %v1845 = vsel %vm1820, %v1818, %v1144
        %v1846 = vsel %vm1820, %v1819, %v1146
        %vm1847 = vcmask 89088
        %v1848 = vsel %vm1847, %v1821, %v1177
        %v1849 = vsel %vm1847, %v1822, %v1179
        %v1850 = vsel %vm1847, %v1823, %v1181
        %v1851 = vsel %vm1847, %v1824, %v1183
        %v1852 = vsel %vm1847, %v1825, %v1185
        %v1853 = vsel %vm1847, %v1826, %v1187
        %v1854 = vsel %vm1847, %v1827, %v1189
        %v1855 = vsel %vm1847, %v1828, %v1191
        %v1856 = vsel %vm1847, %v1829, %v1193
        %v1857 = vsel %vm1847, %v1830, %v1195
        %v1858 = vsel %vm1847, %v1831, %v1197
        %v1859 = vsel %vm1847, %v1832, %v1199
        %v1860 = vsel %vm1847, %v1833, %v1201
        %v1861 = vsel %vm1847, %v1834, %v1203
        %v1862 = vsel %vm1847, %v1835, %v1205
        %v1863 = vsel %vm1847, %v1836, %v1207
        %v1864 = vsel %vm1847, %v1837, %v1209
        %v1865 = vsel %vm1847, %v1838, %v1211
        %v1866 = vsel %vm1847, %v1839, %v1213
        %v1867 = vsel %vm1847, %v1840, %v1215
        %v1868 = vsel %vm1847, %v1841, %v1217
        %v1869 = vsel %vm1847, %v1842, %v1219
        %v1870 = vsel %vm1847, %v1843, %v1221
        %v1871 = vsel %vm1847, %v1844, %v1223
        %v1872 = vsel %vm1847, %v1845, %v1225
        %v1873 = vsel %vm1847, %v1846, %v1227
        %vm1874 = vcmask 97280
        %v1875 = vsel %vm1874, %v1848, %v1257
        %v1876 = vsel %vm1874, %v1849, %v1259
        %v1877 = vsel %vm1874, %v1850, %v1261
        %v1878 = vsel %vm1874, %v1851, %v1263
        %v1879 = vsel %vm1874, %v1852, %v1265
        %v1880 = vsel %vm1874, %v1853, %v1267
        %v1881 = vsel %vm1874, %v1854, %v1269
        %v1882 = vsel %vm1874, %v1855, %v1271
        %v1883 = vsel %vm1874, %v1856, %v1273
        %v1884 = vsel %vm1874, %v1857, %v1275
        %v1885 = vsel %vm1874, %v1858, %v1277
        %v1886 = vsel %vm1874, %v1859, %v1279
        %v1887 = vsel %vm1874, %v1860, %v1281
        %v1888 = vsel %vm1874, %v1861, %v1283
        %v1889 = vsel %vm1874, %v1862, %v1285
        %v1890 = vsel %vm1874, %v1863, %v1287
        %v1891 = vsel %vm1874, %v1864, %v1289
        %v1892 = vsel %vm1874, %v1865, %v1291
        %v1893 = vsel %vm1874, %v1866, %v1293
        %v1894 = vsel %vm1874, %v1867, %v1295
        %v1895 = vsel %vm1874, %v1868, %v1297
        %v1896 = vsel %vm1874, %v1869, %v1299
        %v1897 = vsel %vm1874, %v1870, %v1301
        %v1898 = vsel %vm1874, %v1871, %v1303
        %v1899 = vsel %vm1874, %v1872, %v1305
        %v1900 = vsel %vm1874, %v1873, %v1307
        %vm1901 = vcmask 105472
        %v1902 = vsel %vm1901, %v1875, %v1338
        %v1903 = vsel %vm1901, %v1876, %v1340
        %v1904 = vsel %vm1901, %v1877, %v1342
        %v1905 = vsel %vm1901, %v1878, %v1344
        %v1906 = vsel %vm1901, %v1879, %v1346
        %v1907 = vsel %vm1901, %v1880, %v1348
        %v1908 = vsel %vm1901, %v1881, %v1350
        %v1909 = vsel %vm1901, %v1882, %v1352
        %v1910 = vsel %vm1901, %v1883, %v1354
        %v1911 = vsel %vm1901, %v1884, %v1356
        %v1912 = vsel %vm1901, %v1885, %v1358
        %v1913 = vsel %vm1901, %v1886, %v1360
        %v1914 = vsel %vm1901, %v1887, %v1362
        %v1915 = vsel %vm1901, %v1888, %v1364
        %v1916 = vsel %vm1901, %v1889, %v1366
        %v1917 = vsel %vm1901, %v1890, %v1368
        %v1918 = vsel %vm1901, %v1891, %v1370
        %v1919 = vsel %vm1901, %v1892, %v1372
        %v1920 = vsel %vm1901, %v1893, %v1374
        %v1921 = vsel %vm1901, %v1894, %v1376
        %v1922 = vsel %vm1901, %v1895, %v1378
        %v1923 = vsel %vm1901, %v1896, %v1380
        %v1924 = vsel %vm1901, %v1897, %v1382
        %v1925 = vsel %vm1901, %v1898, %v1384
        %v1926 = vsel %vm1901, %v1899, %v1386
        %v1927 = vsel %vm1901, %v1900, %v1388
        %vm1928 = vcmask 113664
        %v1929 = vsel %vm1928, %v1902, %v1419
        %v1930 = vsel %vm1928, %v1903, %v1421
        %v1931 = vsel %vm1928, %v1904, %v1423
        %v1932 = vsel %vm1928, %v1905, %v1425
        %v1933 = vsel %vm1928, %v1906, %v1427
        %v1934 = vsel %vm1928, %v1907, %v1429
        %v1935 = vsel %vm1928, %v1908, %v1431
        %v1936 = vsel %vm1928, %v1909, %v1433
        %v1937 = vsel %vm1928, %v1910, %v1435
        %v1938 = vsel %vm1928, %v1911, %v1437
        %v1939 = vsel %vm1928, %v1912, %v1439
        %v1940 = vsel %vm1928, %v1913, %v1441
        %v1941 = vsel %vm1928, %v1914, %v1443
        %v1942 = vsel %vm1928, %v1915, %v1445
        %v1943 = vsel %vm1928, %v1916, %v1447
        %v1944 = vsel %vm1928, %v1917, %v1449
        %v1945 = vsel %vm1928, %v1918, %v1451
        %v1946 = vsel %vm1928, %v1919, %v1453
        %v1947 = vsel %vm1928, %v1920, %v1455
        %v1948 = vsel %vm1928, %v1921, %v1457
        %v1949 = vsel %vm1928, %v1922, %v1459
        %v1950 = vsel %vm1928, %v1923, %v1461
        %v1951 = vsel %vm1928, %v1924, %v1463
        %v1952 = vsel %vm1928, %v1925, %v1465
        %v1953 = vsel %vm1928, %v1926, %v1467
        %v1954 = vsel %vm1928, %v1927, %v1469
        %vm1955 = vcmask 121856
        %v1956 = vsel %vm1955, %v1929, %v1500
        %v1957 = vsel %vm1955, %v1930, %v1502
        %v1958 = vsel %vm1955, %v1931, %v1504
        %v1959 = vsel %vm1955, %v1932, %v1506
        %v1960 = vsel %vm1955, %v1933, %v1508
        %v1961 = vsel %vm1955, %v1934, %v1510
        %v1962 = vsel %vm1955, %v1935, %v1512
        %v1963 = vsel %vm1955, %v1936, %v1514
        %v1964 = vsel %vm1955, %v1937, %v1516
        %v1965 = vsel %vm1955, %v1938, %v1518
        %v1966 = vsel %vm1955, %v1939, %v1520
        %v1967 = vsel %vm1955, %v1940, %v1522
        %v1968 = vsel %vm1955, %v1941, %v1524
        %v1969 = vsel %vm1955, %v1942, %v1526
        %v1970 = vsel %vm1955, %v1943, %v1528
        %v1971 = vsel %vm1955, %v1944, %v1530
        %v1972 = vsel %vm1955, %v1945, %v1532
        %v1973 = vsel %vm1955, %v1946, %v1534
        %v1974 = vsel %vm1955, %v1947, %v1536
        %v1975 = vsel %vm1955, %v1948, %v1538
        %v1976 = vsel %vm1955, %v1949, %v1540
        %v1977 = vsel %vm1955, %v1950, %v1542
        %v1978 = vsel %vm1955, %v1951, %v1544
        %v1979 = vsel %vm1955, %v1952, %v1546
        %v1980 = vsel %vm1955, %v1953, %v1548
        %v1981 = vsel %vm1955, %v1954, %v1550
        %v2008 = vrot.slane %v1956, 1
        %v2009 = vrot.slane %v1956, 2
        %v2010 = vrot.slane %v1956, 3
        %v2011 = vrot.slane %v1956, 4
        %v2012 = vrot.slane %v1956, 5
        %v2013 = vrot.slane %v1956, 6
        %v2014 = vrot.slane %v1956, 7
        %v2015 = vrot.slane %v1957, 1
        %v2016 = vrot.slane %v1957, 2
        %v2017 = vrot.slane %v1957, 3
        %v2018 = vrot.slane %v1957, 4
        %v2019 = vrot.slane %v1958, 1
        %v2020 = vrot.slane %v1958, 2
        %v2021 = vrot.slane %v1958, 3
        %v2022 = vrot.slane %v1958, 4
        %v2023 = vrot.slane %v1958, 5
        %v2024 = vrot.slane %v1958, 6
        %v2025 = vrot.slane %v1958, 7
        %v2026 = vrot.slane %v1959, 1
        %v2027 = vrot.slane %v1959, 2
        %v2028 = vrot.slane %v1959, 3
        %v2029 = vrot.slane %v1959, 4
        %v2030 = vrot.slane %v1960, 1
        %v2031 = vrot.slane %v1960, 2
        %v2032 = vrot.slane %v1960, 3
        %v2033 = vrot.slane %v1960, 4
        %v2034 = vrot.slane %v1960, 5
        %v2035 = vrot.slane %v1960, 6
        %v2036 = vrot.slane %v1960, 7
        %v2037 = vrot.slane %v1961, 1
        %v2038 = vrot.slane %v1961, 2
        %v2039 = vrot.slane %v1961, 3
        %v2040 = vrot.slane %v1961, 4
        %v2041 = vrot.slane %v1962, 1
        %v2042 = vrot.slane %v1962, 2
        %v2043 = vrot.slane %v1962, 3
        %v2044 = vrot.slane %v1962, 4
        %v2045 = vrot.slane %v1962, 5
        %v2046 = vrot.slane %v1962, 6
        %v2047 = vrot.slane %v1962, 7
        %v2048 = vrot.slane %v1963, 1
        %v2049 = vrot.slane %v1963, 2
        %v2050 = vrot.slane %v1963, 3
        %v2051 = vrot.slane %v1963, 4
        %v2052 = vrot.slane %v1964, 1
        %v2053 = vrot.slane %v1964, 2
        %v2054 = vrot.slane %v1964, 3
        %v2055 = vrot.slane %v1964, 4
        %v2056 = vrot.slane %v1964, 5
        %v2057 = vrot.slane %v1964, 6
        %v2058 = vrot.slane %v1964, 7
        %v2059 = vrot.slane %v1965, 1
        %v2060 = vrot.slane %v1965, 2
        %v2061 = vrot.slane %v1965, 3
        %v2062 = vrot.slane %v1965, 4
        %v2063 = vrot.slane %v1966, 1
        %v2064 = vrot.slane %v1966, 2
        %v2065 = vrot.slane %v1966, 3
        %v2066 = vrot.slane %v1966, 4
        %v2067 = vrot.slane %v1966, 5
        %v2068 = vrot.slane %v1966, 6
        %v2069 = vrot.slane %v1966, 7
        %v2070 = vrot.slane %v1967, 1
        %v2071 = vrot.slane %v1967, 2
        %v2072 = vrot.slane %v1967, 3
        %v2073 = vrot.slane %v1967, 4
        %v2074 = vrot.slane %v1968, 1
        %v2075 = vrot.slane %v1968, 2
        %v2076 = vrot.slane %v1968, 3
        %v2077 = vrot.slane %v1968, 4
        %v2078 = vrot.slane %v1968, 5
        %v2079 = vrot.slane %v1968, 6
        %v2080 = vrot.slane %v1968, 7
        %v2081 = vrot.slane %v1969, 1
        %v2082 = vrot.slane %v1969, 2
        %v2083 = vrot.slane %v1969, 3
        %v2084 = vrot.slane %v1969, 4
        %v2085 = vrot.slane %v1970, 1
        %v2086 = vrot.slane %v1970, 2
        %v2087 = vrot.slane %v1970, 3
        %v2088 = vrot.slane %v1970, 4
        %v2089 = vrot.slane %v1970, 5
        %v2090 = vrot.slane %v1970, 6
        %v2091 = vrot.slane %v1970, 7
        %v2092 = vrot.slane %v1971, 1
        %v2093 = vrot.slane %v1971, 2
        %v2094 = vrot.slane %v1971, 3
        %v2095 = vrot.slane %v1971, 4
        %v2096 = vrot.slane %v1972, 1
        %v2097 = vrot.slane %v1972, 2
        %v2098 = vrot.slane %v1972, 3
        %v2099 = vrot.slane %v1972, 4
        %v2100 = vrot.slane %v1972, 5
        %v2101 = vrot.slane %v1972, 6
        %v2102 = vrot.slane %v1972, 7
        %v2103 = vrot.slane %v1973, 1
        %v2104 = vrot.slane %v1973, 2
        %v2105 = vrot.slane %v1973, 3
        %v2106 = vrot.slane %v1973, 4
        %v2107 = vrot.slane %v1974, 1
        %v2108 = vrot.slane %v1974, 2
        %v2109 = vrot.slane %v1974, 3
        %v2110 = vrot.slane %v1974, 4
        %v2111 = vrot.slane %v1974, 5
        %v2112 = vrot.slane %v1974, 6
        %v2113 = vrot.slane %v1974, 7
        %v2114 = vrot.slane %v1975, 1
        %v2115 = vrot.slane %v1975, 2
        %v2116 = vrot.slane %v1975, 3
        %v2117 = vrot.slane %v1975, 4
        %v2118 = vrot.slane %v1976, 1
        %v2119 = vrot.slane %v1976, 2
        %v2120 = vrot.slane %v1976, 3
        %v2121 = vrot.slane %v1976, 4
        %v2122 = vrot.slane %v1976, 5
        %v2123 = vrot.slane %v1976, 6
        %v2124 = vrot.slane %v1976, 7
        %v2125 = vrot.slane %v1977, 1
        %v2126 = vrot.slane %v1977, 2
        %v2127 = vrot.slane %v1977, 3
        %v2128 = vrot.slane %v1977, 4
        %v2129 = vrot.slane %v1978, 1
        %v2130 = vrot.slane %v1978, 2
        %v2131 = vrot.slane %v1978, 3
        %v2132 = vrot.slane %v1978, 4
        %v2133 = vrot.slane %v1978, 5
        %v2134 = vrot.slane %v1978, 6
        %v2135 = vrot.slane %v1978, 7
        %v2136 = vrot.slane %v1979, 1
        %v2137 = vrot.slane %v1979, 2
        %v2138 = vrot.slane %v1979, 3
        %v2139 = vrot.slane %v1979, 4
        %v2140 = vrot.slane %v1980, 1
        %v2141 = vrot.slane %v1980, 2
        %v2142 = vrot.slane %v1980, 3
        %v2143 = vrot.slane %v1980, 4
        %v2144 = vrot.slane %v1980, 5
        %v2145 = vrot.slane %v1980, 6
        %v2146 = vrot.slane %v1980, 7
        %v2147 = vrot.slane %v1981, 1
        %v2148 = vrot.slane %v1981, 2
        %v2149 = vrot.slane %v1981, 3
        %v2150 = vrot.slane %v1981, 4
        %v2151 = vld [vmem:[%s1] sm:$0xff]
        %v2152 = vld [vmem:[%s1 + $0x8] sm:$0xff]
        %2153 = vst [vmem:[#allocation1] ss:$9 sm:$0xff] %v1956
        %s2154 = scalar_lea.vmem [#allocation1], 1
        %2155 = vst [vmem:[%s2154] ss:$9 sm:$0xff] %v2008
        %s2156 = scalar_lea.vmem [#allocation1], 2
        %2157 = vst [vmem:[%s2156] ss:$9 sm:$0xff] %v2009
        %s2158 = scalar_lea.vmem [#allocation1], 3
        %2159 = vst [vmem:[%s2158] ss:$9 sm:$0xff] %v2010
        %s2160 = scalar_lea.vmem [#allocation1], 4
        %2161 = vst [vmem:[%s2160] ss:$9 sm:$0xff] %v2011
        %s2162 = scalar_lea.vmem [#allocation1], 5
        %2163 = vst [vmem:[%s2162] ss:$9 sm:$0xff] %v2012
        %s2164 = scalar_lea.vmem [#allocation1], 6
        %2165 = vst [vmem:[%s2164] ss:$9 sm:$0xff] %v2013
        %s2166 = scalar_lea.vmem [#allocation1], 7
        %2167 = vst [vmem:[%s2166] ss:$9 sm:$0xff] %v2014
        %v2168 = vld [vmem:[#allocation1] sm:$0xff]
        %2169 = vst [vmem:[#allocation1] ss:$9 sm:$0xff] %v1957
        %2170 = vst [vmem:[%s2154] ss:$9 sm:$0xff] %v2015
        %2171 = vst [vmem:[%s2156] ss:$9 sm:$0xff] %v2016
        %2172 = vst [vmem:[%s2158] ss:$9 sm:$0xff] %v2017
        %2173 = vst [vmem:[%s2160] ss:$9 sm:$0xff] %v2018
        %2174 = vst [vmem:[%s2162] ss:$9 sm:$0xff] %v1958
        %2175 = vst [vmem:[%s2164] ss:$9 sm:$0xff] %v2019
        %2176 = vst [vmem:[%s2166] ss:$9 sm:$0xff] %v2020
        %v2177 = vld [vmem:[#allocation1] sm:$0xff]
        %2178 = vst [vmem:[#allocation1] ss:$9 sm:$0xff] %v2021
        %2179 = vst [vmem:[%s2154] ss:$9 sm:$0xff] %v2022
        %2180 = vst [vmem:[%s2156] ss:$9 sm:$0xff] %v2023
        %2181 = vst [vmem:[%s2158] ss:$9 sm:$0xff] %v2024
        %2182 = vst [vmem:[%s2160] ss:$9 sm:$0xff] %v2025
        %2183 = vst [vmem:[%s2162] ss:$9 sm:$0xff] %v1959
        %2184 = vst [vmem:[%s2164] ss:$9 sm:$0xff] %v2026
        %2185 = vst [vmem:[%s2166] ss:$9 sm:$0xff] %v2027
        %v2186 = vld [vmem:[#allocation1] sm:$0xff]
        %2187 = vst [vmem:[#allocation1] ss:$9 sm:$0xff] %v2028
        %2188 = vst [vmem:[%s2154] ss:$9 sm:$0xff] %v2029
        %2189 = vst [vmem:[%s2156] ss:$9 sm:$0xff] %v1960
        %2190 = vst [vmem:[%s2158] ss:$9 sm:$0xff] %v2030
        %2191 = vst [vmem:[%s2160] ss:$9 sm:$0xff] %v2031
        %2192 = vst [vmem:[%s2162] ss:$9 sm:$0xff] %v2032
        %2193 = vst [vmem:[%s2164] ss:$9 sm:$0xff] %v2033
        %2194 = vst [vmem:[%s2166] ss:$9 sm:$0xff] %v2034
        %v2195 = vld [vmem:[#allocation1] sm:$0xff]
        %2196 = vst [vmem:[#allocation1] ss:$9 sm:$0xff] %v2035
        %2197 = vst [vmem:[%s2154] ss:$9 sm:$0xff] %v2036
        %2198 = vst [vmem:[%s2156] ss:$9 sm:$0xff] %v1961
        %2199 = vst [vmem:[%s2158] ss:$9 sm:$0xff] %v2037
        %2200 = vst [vmem:[%s2160] ss:$9 sm:$0xff] %v2038
        %2201 = vst [vmem:[%s2162] ss:$9 sm:$0xff] %v2039
        %2202 = vst [vmem:[%s2164] ss:$9 sm:$0xff] %v2040
        %2203 = vst [vmem:[%s2166] ss:$9 sm:$0xff] %v1962
        %v2204 = vld [vmem:[#allocation1] sm:$0xff]
        %2205 = vst [vmem:[#allocation1] ss:$9 sm:$0xff] %v2041
        %2206 = vst [vmem:[%s2154] ss:$9 sm:$0xff] %v2042
        %2207 = vst [vmem:[%s2156] ss:$9 sm:$0xff] %v2043
        %2208 = vst [vmem:[%s2158] ss:$9 sm:$0xff] %v2044
        %2209 = vst [vmem:[%s2160] ss:$9 sm:$0xff] %v2045
        %2210 = vst [vmem:[%s2162] ss:$9 sm:$0xff] %v2046
        %2211 = vst [vmem:[%s2164] ss:$9 sm:$0xff] %v2047
        %2212 = vst [vmem:[%s2166] ss:$9 sm:$0xff] %v1963
        %v2213 = vld [vmem:[#allocation1] sm:$0xff]
        %2214 = vst [vmem:[#allocation1] ss:$9 sm:$0xff] %v2048
        %2215 = vst [vmem:[%s2154] ss:$9 sm:$0xff] %v2049
        %2216 = vst [vmem:[%s2156] ss:$9 sm:$0xff] %v2050
        %2217 = vst [vmem:[%s2158] ss:$9 sm:$0xff] %v2051
        %2218 = vst [vmem:[%s2160] ss:$9 sm:$0xff] %v1964
        %2219 = vst [vmem:[%s2162] ss:$9 sm:$0xff] %v2052
        %2220 = vst [vmem:[%s2164] ss:$9 sm:$0xff] %v2053
        %2221 = vst [vmem:[%s2166] ss:$9 sm:$0xff] %v2054
        %v2222 = vld [vmem:[#allocation1] sm:$0xff]
        %2223 = vst [vmem:[#allocation1] ss:$9 sm:$0xff] %v2055
        %2224 = vst [vmem:[%s2154] ss:$9 sm:$0xff] %v2056
        %2225 = vst [vmem:[%s2156] ss:$9 sm:$0xff] %v2057
        %2226 = vst [vmem:[%s2158] ss:$9 sm:$0xff] %v2058
        %2227 = vst [vmem:[%s2160] ss:$9 sm:$0xff] %v1965
        %2228 = vst [vmem:[%s2162] ss:$9 sm:$0xff] %v2059
        %2229 = vst [vmem:[%s2164] ss:$9 sm:$0xff] %v2060
        %2230 = vst [vmem:[%s2166] ss:$9 sm:$0xff] %v2061
        %v2231 = vld [vmem:[#allocation1] sm:$0xff]
        %2232 = vst [vmem:[#allocation1] ss:$9 sm:$0xff] %v2062
        %2233 = vst [vmem:[%s2154] ss:$9 sm:$0xff] %v1966
        %2234 = vst [vmem:[%s2156] ss:$9 sm:$0xff] %v2063
        %2235 = vst [vmem:[%s2158] ss:$9 sm:$0xff] %v2064
        %2236 = vst [vmem:[%s2160] ss:$9 sm:$0xff] %v2065
        %2237 = vst [vmem:[%s2162] ss:$9 sm:$0xff] %v2066
        %2238 = vst [vmem:[%s2164] ss:$9 sm:$0xff] %v2067
        %2239 = vst [vmem:[%s2166] ss:$9 sm:$0xff] %v2068
        %v2240 = vld [vmem:[#allocation1] sm:$0xff]
        %2241 = vst [vmem:[#allocation1] ss:$9 sm:$0xff] %v2069
        %2242 = vst [vmem:[%s2154] ss:$9 sm:$0xff] %v1967
        %2243 = vst [vmem:[%s2156] ss:$9 sm:$0xff] %v2070
        %2244 = vst [vmem:[%s2158] ss:$9 sm:$0xff] %v2071
        %2245 = vst [vmem:[%s2160] ss:$9 sm:$0xff] %v2072
        %2246 = vst [vmem:[%s2162] ss:$9 sm:$0xff] %v2073
        %2247 = vst [vmem:[%s2164] ss:$9 sm:$0xff] %v1968
        %2248 = vst [vmem:[%s2166] ss:$9 sm:$0xff] %v2074
        %v2249 = vld [vmem:[#allocation1] sm:$0xff]
        %2250 = vst [vmem:[#allocation1] ss:$9 sm:$0xff] %v2075
        %2251 = vst [vmem:[%s2154] ss:$9 sm:$0xff] %v2076
        %2252 = vst [vmem:[%s2156] ss:$9 sm:$0xff] %v2077
        %2253 = vst [vmem:[%s2158] ss:$9 sm:$0xff] %v2078
        %2254 = vst [vmem:[%s2160] ss:$9 sm:$0xff] %v2079
        %2255 = vst [vmem:[%s2162] ss:$9 sm:$0xff] %v2080
        %2256 = vst [vmem:[%s2164] ss:$9 sm:$0xff] %v1969
        %2257 = vst [vmem:[%s2166] ss:$9 sm:$0xff] %v2081
        %v2258 = vld [vmem:[#allocation1] sm:$0xff]
        %2259 = vst [vmem:[#allocation1] ss:$9 sm:$0xff] %v2082
        %2260 = vst [vmem:[%s2154] ss:$9 sm:$0xff] %v2083
        %2261 = vst [vmem:[%s2156] ss:$9 sm:$0xff] %v2084
        %2262 = vst [vmem:[%s2158] ss:$9 sm:$0xff] %v1970
        %2263 = vst [vmem:[%s2160] ss:$9 sm:$0xff] %v2085
        %2264 = vst [vmem:[%s2162] ss:$9 sm:$0xff] %v2086
        %2265 = vst [vmem:[%s2164] ss:$9 sm:$0xff] %v2087
        %2266 = vst [vmem:[%s2166] ss:$9 sm:$0xff] %v2088
        %v2267 = vld [vmem:[#allocation1] sm:$0xff]
        %2268 = vst [vmem:[#allocation1] ss:$9 sm:$0xff] %v2089
        %2269 = vst [vmem:[%s2154] ss:$9 sm:$0xff] %v2090
        %2270 = vst [vmem:[%s2156] ss:$9 sm:$0xff] %v2091
        %2271 = vst [vmem:[%s2158] ss:$9 sm:$0xff] %v1971
        %2272 = vst [vmem:[%s2160] ss:$9 sm:$0xff] %v2092
        %2273 = vst [vmem:[%s2162] ss:$9 sm:$0xff] %v2093
        %2274 = vst [vmem:[%s2164] ss:$9 sm:$0xff] %v2094
        %2275 = vst [vmem:[%s2166] ss:$9 sm:$0xff] %v2095
        %v2276 = vld [vmem:[#allocation1] sm:$0xff]
        %2277 = vst [vmem:[#allocation1] ss:$9 sm:$0xff] %v1972
        %2278 = vst [vmem:[%s2154] ss:$9 sm:$0xff] %v2096
        %2279 = vst [vmem:[%s2156] ss:$9 sm:$0xff] %v2097
        %2280 = vst [vmem:[%s2158] ss:$9 sm:$0xff] %v2098
        %2281 = vst [vmem:[%s2160] ss:$9 sm:$0xff] %v2099
        %2282 = vst [vmem:[%s2162] ss:$9 sm:$0xff] %v2100
        %2283 = vst [vmem:[%s2164] ss:$9 sm:$0xff] %v2101
        %2284 = vst [vmem:[%s2166] ss:$9 sm:$0xff] %v2102
        %v2285 = vld [vmem:[#allocation1] sm:$0xff]
        %2286 = vst [vmem:[#allocation1] ss:$9 sm:$0xff] %v1973
        %2287 = vst [vmem:[%s2154] ss:$9 sm:$0xff] %v2103
        %2288 = vst [vmem:[%s2156] ss:$9 sm:$0xff] %v2104
        %2289 = vst [vmem:[%s2158] ss:$9 sm:$0xff] %v2105
        %2290 = vst [vmem:[%s2160] ss:$9 sm:$0xff] %v2106
        %2291 = vst [vmem:[%s2162] ss:$9 sm:$0xff] %v1974
        %2292 = vst [vmem:[%s2164] ss:$9 sm:$0xff] %v2107
        %2293 = vst [vmem:[%s2166] ss:$9 sm:$0xff] %v2108
        %v2294 = vld [vmem:[#allocation1] sm:$0xff]
        %2295 = vst [vmem:[#allocation1] ss:$9 sm:$0xff] %v2109
        %2296 = vst [vmem:[%s2154] ss:$9 sm:$0xff] %v2110
        %2297 = vst [vmem:[%s2156] ss:$9 sm:$0xff] %v2111
        %2298 = vst [vmem:[%s2158] ss:$9 sm:$0xff] %v2112
        %2299 = vst [vmem:[%s2160] ss:$9 sm:$0xff] %v2113
        %2300 = vst [vmem:[%s2162] ss:$9 sm:$0xff] %v1975
        %2301 = vst [vmem:[%s2164] ss:$9 sm:$0xff] %v2114
        %2302 = vst [vmem:[%s2166] ss:$9 sm:$0xff] %v2115
        %v2303 = vld [vmem:[#allocation1] sm:$0xff]
        %2304 = vst [vmem:[#allocation1] ss:$9 sm:$0xff] %v2116
        %2305 = vst [vmem:[%s2154] ss:$9 sm:$0xff] %v2117
        %2306 = vst [vmem:[%s2156] ss:$9 sm:$0xff] %v1976
        %2307 = vst [vmem:[%s2158] ss:$9 sm:$0xff] %v2118
        %2308 = vst [vmem:[%s2160] ss:$9 sm:$0xff] %v2119
        %2309 = vst [vmem:[%s2162] ss:$9 sm:$0xff] %v2120
        %2310 = vst [vmem:[%s2164] ss:$9 sm:$0xff] %v2121
        %2311 = vst [vmem:[%s2166] ss:$9 sm:$0xff] %v2122
        %v2312 = vld [vmem:[#allocation1] sm:$0xff]
        %2313 = vst [vmem:[#allocation1] ss:$9 sm:$0xff] %v2123
        %2314 = vst [vmem:[%s2154] ss:$9 sm:$0xff] %v2124
        %2315 = vst [vmem:[%s2156] ss:$9 sm:$0xff] %v1977
        %2316 = vst [vmem:[%s2158] ss:$9 sm:$0xff] %v2125
        %2317 = vst [vmem:[%s2160] ss:$9 sm:$0xff] %v2126
        %2318 = vst [vmem:[%s2162] ss:$9 sm:$0xff] %v2127
        %2319 = vst [vmem:[%s2164] ss:$9 sm:$0xff] %v2128
        %2320 = vst [vmem:[%s2166] ss:$9 sm:$0xff] %v1978
        %v2321 = vld [vmem:[#allocation1] sm:$0xff]
        %2322 = vst [vmem:[#allocation1] ss:$9 sm:$0xff] %v2129
        %2323 = vst [vmem:[%s2154] ss:$9 sm:$0xff] %v2130
        %2324 = vst [vmem:[%s2156] ss:$9 sm:$0xff] %v2131
        %2325 = vst [vmem:[%s2158] ss:$9 sm:$0xff] %v2132
        %2326 = vst [vmem:[%s2160] ss:$9 sm:$0xff] %v2133
        %2327 = vst [vmem:[%s2162] ss:$9 sm:$0xff] %v2134
        %2328 = vst [vmem:[%s2164] ss:$9 sm:$0xff] %v2135
        %2329 = vst [vmem:[%s2166] ss:$9 sm:$0xff] %v1979
        %v2330 = vld [vmem:[#allocation1] sm:$0xff]
        %2331 = vst [vmem:[#allocation1] ss:$9 sm:$0xff] %v2136
        %2332 = vst [vmem:[%s2154] ss:$9 sm:$0xff] %v2137
        %2333 = vst [vmem:[%s2156] ss:$9 sm:$0xff] %v2138
        %2334 = vst [vmem:[%s2158] ss:$9 sm:$0xff] %v2139
        %2335 = vst [vmem:[%s2160] ss:$9 sm:$0xff] %v1980
        %2336 = vst [vmem:[%s2162] ss:$9 sm:$0xff] %v2140
        %2337 = vst [vmem:[%s2164] ss:$9 sm:$0xff] %v2141
        %2338 = vst [vmem:[%s2166] ss:$9 sm:$0xff] %v2142
        %v2339 = vld [vmem:[#allocation1] sm:$0xff]
        %2340 = vst [vmem:[#allocation1] ss:$9 sm:$0xff] %v2143
        %2341 = vst [vmem:[%s2154] ss:$9 sm:$0xff] %v2144
        %2342 = vst [vmem:[%s2156] ss:$9 sm:$0xff] %v2145
        %2343 = vst [vmem:[%s2158] ss:$9 sm:$0xff] %v2146
        %2344 = vst [vmem:[%s2160] ss:$9 sm:$0xff] %v1981
        %2345 = vst [vmem:[%s2162] ss:$9 sm:$0xff] %v2147
        %2346 = vst [vmem:[%s2164] ss:$9 sm:$0xff] %v2148
        %2347 = vst [vmem:[%s2166] ss:$9 sm:$0xff] %v2149
        %v2348 = vld [vmem:[#allocation1] sm:$0xff]
        %2349 = vst [vmem:[#allocation1] ss:$9 sm:$0xff] %v2150
        %v2350 = vld [vmem:[#allocation1] sm:$0xff]
        %vm2351 = vcmask 130048
        %v2352 = vsel %vm2351, %v2168, 0
        %v2354 = vsel %vm2351, %v2177, 0
        %v2356 = vsel %vm2351, %v2186, 0
        %v2358 = vsel %vm2351, %v2195, 0
        %v2360 = vsel %vm2351, %v2204, 0
        %v2362 = vsel %vm2351, %v2213, 0
        %v2364 = vsel %vm2351, %v2222, 0
        %v2366 = vsel %vm2351, %v2231, 0
        %v2368 = vsel %vm2351, %v2240, 0
        %v2370 = vsel %vm2351, %v2249, 0
        %v2372 = vsel %vm2351, %v2258, 0
        %v2374 = vsel %vm2351, %v2267, 0
        %v2376 = vsel %vm2351, %v2276, 0
        %v2378 = vsel %vm2351, %v2285, 0
        %v2380 = vsel %vm2351, %v2294, 0
        %v2382 = vsel %vm2351, %v2303, 0
        %v2384 = vsel %vm2351, %v2312, 0
        %v2386 = vsel %vm2351, %v2321, 0
        %v2388 = vsel %vm2351, %v2330, 0
        %v2390 = vsel %vm2351, %v2339, 0
        %v2392 = vsel %vm2351, %v2348, 0
        %v2394 = vsel %vm2351, %v2350, 0
        %2396 = vmatpush.msra.mxu0 0.0
        %2397 = vmatpush.msra.mxu0 0.0
        %2398 = vmatpush.msra.mxu0 0.0
        %2399 = vmatpush.msra.mxu0 0.0
        %2400 = vmatpush.msra.mxu0 0.0
        %2401 = vmatpush.msra.mxu0 0.0
        %2402 = vmatpush.msra.mxu0 0.0
        %2403 = vmatpush.msra.mxu0 0.0
        %2404 = vmatpush.msra.mxu0 0.0
        %2405 = vmatpush.msra.mxu0 0.0
        %2406 = vmatpush.msra.mxu0 0.0
        %2407 = vmatpush.msra.mxu0 0.0
        %2408 = vmatpush.msra.mxu0 0.0
        %2409 = vmatpush.msra.mxu0 0.0
        %2410 = vmatpush.msra.mxu0 %v2152
        %2411 = vmatpush.msra.mxu0 %v2151
        %2412 = vmatmul.f32.gmra.mxu0 %v2352
        %v2413 = vpop.f32.mrf.mxu0
        %v2414 = vadd.f32 0.0, %v2413
        %2415 = vmatmul.f32.gmra.mxu0 %v2354
        %v2416 = vpop.f32.mrf.mxu0
        %v2417 = vadd.f32 0.0, %v2416
        %2418 = vmatmul.f32.gmra.mxu0 %v2356
        %v2419 = vpop.f32.mrf.mxu0
        %v2420 = vadd.f32 0.0, %v2419
        %2421 = vmatmul.f32.gmra.mxu0 %v2358
        %v2422 = vpop.f32.mrf.mxu0
        %v2423 = vadd.f32 0.0, %v2422
        %2424 = vmatmul.f32.gmra.mxu0 %v2360
        %v2425 = vpop.f32.mrf.mxu0
        %v2426 = vadd.f32 0.0, %v2425
        %2427 = vmatmul.f32.gmra.mxu0 %v2362
        %v2428 = vpop.f32.mrf.mxu0
        %v2429 = vadd.f32 0.0, %v2428
        %2430 = vmatmul.f32.gmra.mxu0 %v2364
        %v2431 = vpop.f32.mrf.mxu0
        %v2432 = vadd.f32 0.0, %v2431
        %2433 = vmatmul.f32.gmra.mxu0 %v2366
        %v2434 = vpop.f32.mrf.mxu0
        %v2435 = vadd.f32 0.0, %v2434
        %2436 = vmatmul.f32.gmra.mxu0 %v2368
        %v2437 = vpop.f32.mrf.mxu0
        %v2438 = vadd.f32 0.0, %v2437
        %2439 = vmatmul.f32.gmra.mxu0 %v2370
        %v2440 = vpop.f32.mrf.mxu0
        %v2441 = vadd.f32 0.0, %v2440
        %2442 = vmatmul.f32.gmra.mxu0 %v2372
        %v2443 = vpop.f32.mrf.mxu0
        %v2444 = vadd.f32 0.0, %v2443
        %2445 = vmatmul.f32.gmra.mxu0 %v2374
        %v2446 = vpop.f32.mrf.mxu0
        %v2447 = vadd.f32 0.0, %v2446
        %2448 = vmatmul.f32.gmra.mxu0 %v2376
        %v2449 = vpop.f32.mrf.mxu0
        %v2450 = vadd.f32 0.0, %v2449
        %2451 = vmatmul.f32.gmra.mxu0 %v2378
        %v2452 = vpop.f32.mrf.mxu0
        %v2453 = vadd.f32 0.0, %v2452
        %2454 = vmatmul.f32.gmra.mxu0 %v2380
        %v2455 = vpop.f32.mrf.mxu0
        %v2456 = vadd.f32 0.0, %v2455
        %2457 = vmatmul.f32.gmra.mxu0 %v2382
        %v2458 = vpop.f32.mrf.mxu0
        %v2459 = vadd.f32 0.0, %v2458
        %2460 = vmatmul.f32.gmra.mxu0 %v2384
        %v2461 = vpop.f32.mrf.mxu0
        %v2462 = vadd.f32 0.0, %v2461
        %2463 = vmatmul.f32.gmra.mxu0 %v2386
        %v2464 = vpop.f32.mrf.mxu0
        %v2465 = vadd.f32 0.0, %v2464
        %2466 = vmatmul.f32.gmra.mxu0 %v2388
        %v2467 = vpop.f32.mrf.mxu0
        %v2468 = vadd.f32 0.0, %v2467
        %2469 = vmatmul.f32.gmra.mxu0 %v2390
        %v2470 = vpop.f32.mrf.mxu0
        %v2471 = vadd.f32 0.0, %v2470
        %2472 = vmatmul.f32.gmra.mxu0 %v2392
        %v2473 = vpop.f32.mrf.mxu0
        %v2474 = vadd.f32 0.0, %v2473
        %2475 = vmatmul.f32.gmra.mxu0 %v2394
        %v2476 = vpop.f32.mrf.mxu0
        %v2477 = vadd.f32 0.0, %v2476
        %2478 = vdwg.mxu0
        %v2479 = vmax.f32 %v2414, 0.0
        %v2480 = vmax.f32 %v2417, 0.0
        %v2481 = vmax.f32 %v2420, 0.0
        %v2482 = vmax.f32 %v2423, 0.0
        %v2483 = vmax.f32 %v2426, 0.0
        %v2484 = vmax.f32 %v2429, 0.0
        %v2485 = vmax.f32 %v2432, 0.0
        %v2486 = vmax.f32 %v2435, 0.0
        %v2487 = vmax.f32 %v2438, 0.0
        %v2488 = vmax.f32 %v2441, 0.0
        %v2489 = vmax.f32 %v2444, 0.0
        %v2490 = vmax.f32 %v2447, 0.0
        %v2491 = vmax.f32 %v2450, 0.0
        %v2492 = vmax.f32 %v2453, 0.0
        %v2493 = vmax.f32 %v2456, 0.0
        %v2494 = vmax.f32 %v2459, 0.0
        %v2495 = vmax.f32 %v2462, 0.0
        %v2496 = vmax.f32 %v2465, 0.0
        %v2497 = vmax.f32 %v2468, 0.0
        %v2498 = vmax.f32 %v2471, 0.0
        %v2499 = vmax.f32 %v2474, 0.0
        %v2500 = vmax.f32 %v2477, 0.0
        %v2523 = vrot.slane %v2479, 1
        %v2524 = vrot.slane %v2479, 2
        %v2525 = vrot.slane %v2479, 3
        %v2526 = vrot.slane %v2479, 4
        %v2527 = vrot.slane %v2479, 5
        %v2528 = vrot.slane %v2479, 6
        %v2529 = vrot.slane %v2479, 7
        %v2530 = vrot.slane %v2480, 1
        %v2531 = vrot.slane %v2480, 2
        %v2532 = vrot.slane %v2480, 3
        %v2533 = vrot.slane %v2480, 4
        %v2534 = vrot.slane %v2480, 5
        %v2535 = vrot.slane %v2480, 6
        %v2536 = vrot.slane %v2480, 7
        %v2537 = vrot.slane %v2481, 1
        %v2538 = vrot.slane %v2481, 2
        %v2539 = vrot.slane %v2481, 3
        %v2540 = vrot.slane %v2481, 4
        %v2541 = vrot.slane %v2481, 5
        %v2542 = vrot.slane %v2481, 6
        %v2543 = vrot.slane %v2481, 7
        %v2544 = vrot.slane %v2482, 1
        %v2545 = vrot.slane %v2482, 2
        %v2546 = vrot.slane %v2482, 3
        %v2547 = vrot.slane %v2482, 4
        %v2548 = vrot.slane %v2482, 5
        %v2549 = vrot.slane %v2482, 6
        %v2550 = vrot.slane %v2482, 7
        %v2551 = vrot.slane %v2483, 1
        %v2552 = vrot.slane %v2483, 2
        %v2553 = vrot.slane %v2483, 3
        %v2554 = vrot.slane %v2483, 4
        %v2555 = vrot.slane %v2483, 5
        %v2556 = vrot.slane %v2483, 6
        %v2557 = vrot.slane %v2483, 7
        %v2558 = vrot.slane %v2484, 1
        %v2559 = vrot.slane %v2484, 2
        %v2560 = vrot.slane %v2484, 3
        %v2561 = vrot.slane %v2484, 4
        %v2562 = vrot.slane %v2484, 5
        %v2563 = vrot.slane %v2484, 6
        %v2564 = vrot.slane %v2484, 7
        %v2565 = vrot.slane %v2485, 1
        %v2566 = vrot.slane %v2485, 2
        %v2567 = vrot.slane %v2485, 3
        %v2568 = vrot.slane %v2485, 4
        %v2569 = vrot.slane %v2485, 5
        %v2570 = vrot.slane %v2485, 6
        %v2571 = vrot.slane %v2485, 7
        %v2572 = vrot.slane %v2486, 1
        %v2573 = vrot.slane %v2486, 2
        %v2574 = vrot.slane %v2486, 3
        %v2575 = vrot.slane %v2486, 4
        %v2576 = vrot.slane %v2486, 5
        %v2577 = vrot.slane %v2486, 6
        %v2578 = vrot.slane %v2486, 7
        %v2579 = vrot.slane %v2487, 1
        %v2580 = vrot.slane %v2487, 2
        %v2581 = vrot.slane %v2487, 3
        %v2582 = vrot.slane %v2487, 4
        %v2583 = vrot.slane %v2487, 5
        %v2584 = vrot.slane %v2487, 6
        %v2585 = vrot.slane %v2487, 7
        %v2586 = vrot.slane %v2488, 1
        %v2587 = vrot.slane %v2488, 2
        %v2588 = vrot.slane %v2488, 3
        %v2589 = vrot.slane %v2488, 4
        %v2590 = vrot.slane %v2488, 5
        %v2591 = vrot.slane %v2488, 6
        %v2592 = vrot.slane %v2488, 7
        %v2593 = vrot.slane %v2489, 1
        %v2594 = vrot.slane %v2489, 2
        %v2595 = vrot.slane %v2489, 3
        %v2596 = vrot.slane %v2489, 4
        %v2597 = vrot.slane %v2489, 5
        %v2598 = vrot.slane %v2489, 6
        %v2599 = vrot.slane %v2489, 7
        %v2600 = vrot.slane %v2490, 1
        %v2601 = vrot.slane %v2490, 2
        %v2602 = vrot.slane %v2490, 3
        %v2603 = vrot.slane %v2490, 4
        %v2604 = vrot.slane %v2490, 5
        %v2605 = vrot.slane %v2490, 6
        %v2606 = vrot.slane %v2490, 7
        %v2607 = vrot.slane %v2491, 1
        %v2608 = vrot.slane %v2491, 2
        %v2609 = vrot.slane %v2491, 3
        %v2610 = vrot.slane %v2491, 4
        %v2611 = vrot.slane %v2491, 5
        %v2612 = vrot.slane %v2491, 6
        %v2613 = vrot.slane %v2491, 7
        %v2614 = vrot.slane %v2492, 1
        %v2615 = vrot.slane %v2492, 2
        %v2616 = vrot.slane %v2492, 3
        %v2617 = vrot.slane %v2492, 4
        %v2618 = vrot.slane %v2492, 5
        %v2619 = vrot.slane %v2492, 6
        %v2620 = vrot.slane %v2492, 7
        %v2621 = vrot.slane %v2493, 1
        %v2622 = vrot.slane %v2493, 2
        %v2623 = vrot.slane %v2493, 3
        %v2624 = vrot.slane %v2493, 4
        %v2625 = vrot.slane %v2493, 5
        %v2626 = vrot.slane %v2493, 6
        %v2627 = vrot.slane %v2493, 7
        %v2628 = vrot.slane %v2494, 1
        %v2629 = vrot.slane %v2494, 2
        %v2630 = vrot.slane %v2494, 3
        %v2631 = vrot.slane %v2494, 4
        %v2632 = vrot.slane %v2494, 5
        %v2633 = vrot.slane %v2494, 6
        %v2634 = vrot.slane %v2494, 7
        %v2635 = vrot.slane %v2495, 1
        %v2636 = vrot.slane %v2495, 2
        %v2637 = vrot.slane %v2495, 3
        %v2638 = vrot.slane %v2495, 4
        %v2639 = vrot.slane %v2495, 5
        %v2640 = vrot.slane %v2495, 6
        %v2641 = vrot.slane %v2495, 7
        %v2642 = vrot.slane %v2496, 1
        %v2643 = vrot.slane %v2496, 2
        %v2644 = vrot.slane %v2496, 3
        %v2645 = vrot.slane %v2496, 4
        %v2646 = vrot.slane %v2496, 5
        %v2647 = vrot.slane %v2496, 6
        %v2648 = vrot.slane %v2496, 7
        %v2649 = vrot.slane %v2497, 1
        %v2650 = vrot.slane %v2497, 2
        %v2651 = vrot.slane %v2497, 3
        %v2652 = vrot.slane %v2497, 4
        %v2653 = vrot.slane %v2497, 5
        %v2654 = vrot.slane %v2497, 6
        %v2655 = vrot.slane %v2497, 7
        %v2656 = vrot.slane %v2498, 1
        %v2657 = vrot.slane %v2498, 2
        %v2658 = vrot.slane %v2498, 3
        %v2659 = vrot.slane %v2498, 4
        %v2660 = vrot.slane %v2498, 5
        %v2661 = vrot.slane %v2498, 6
        %v2662 = vrot.slane %v2498, 7
        %v2663 = vrot.slane %v2499, 1
        %v2664 = vrot.slane %v2499, 2
        %v2665 = vrot.slane %v2499, 3
        %v2666 = vrot.slane %v2499, 4
        %v2667 = vrot.slane %v2499, 5
        %v2668 = vrot.slane %v2499, 6
        %v2669 = vrot.slane %v2499, 7
        %2670 = vst [vmem:[#allocation1] ss:$9 sm:$0xff] %v2479
        %s2671 = scalar_lea.vmem [#allocation1], 1
        %2672 = vst [vmem:[%s2671] ss:$9 sm:$0xff] %v2523
        %s2673 = scalar_lea.vmem [#allocation1], 2
        %2674 = vst [vmem:[%s2673] ss:$9 sm:$0xff] %v2524
        %s2675 = scalar_lea.vmem [#allocation1], 3
        %2676 = vst [vmem:[%s2675] ss:$9 sm:$0xff] %v2525
        %s2677 = scalar_lea.vmem [#allocation1], 4
        %2678 = vst [vmem:[%s2677] ss:$9 sm:$0xff] %v2526
        %s2679 = scalar_lea.vmem [#allocation1], 5
        %2680 = vst [vmem:[%s2679] ss:$9 sm:$0xff] %v2527
        %s2681 = scalar_lea.vmem [#allocation1], 6
        %2682 = vst [vmem:[%s2681] ss:$9 sm:$0xff] %v2528
        %s2683 = scalar_lea.vmem [#allocation1], 7
        %2684 = vst [vmem:[%s2683] ss:$9 sm:$0xff] %v2529
        %v2685 = vld [vmem:[#allocation1] sm:$0xff]
        %2686 = vst [vmem:[#allocation1] ss:$9 sm:$0xff] %v2480
        %2687 = vst [vmem:[%s2671] ss:$9 sm:$0xff] %v2530
        %2688 = vst [vmem:[%s2673] ss:$9 sm:$0xff] %v2531
        %v2689 = vld [vmem:[#allocation1] sm:$0xff]
        %2690 = vst [vmem:[#allocation1] ss:$9 sm:$0xff] %v2545
        %2691 = vst [vmem:[%s2671] ss:$9 sm:$0xff] %v2546
        %2692 = vst [vmem:[%s2673] ss:$9 sm:$0xff] %v2547
        %2693 = vst [vmem:[%s2675] ss:$9 sm:$0xff] %v2548
        %2694 = vst [vmem:[%s2677] ss:$9 sm:$0xff] %v2549
        %2695 = vst [vmem:[%s2679] ss:$9 sm:$0xff] %v2550
        %2696 = vst [vmem:[%s2681] ss:$9 sm:$0xff] %v2483
        %2697 = vst [vmem:[%s2683] ss:$9 sm:$0xff] %v2551
        %v2698 = vld [vmem:[#allocation1] sm:$0xff]
        %2699 = vst [vmem:[#allocation1] ss:$9 sm:$0xff] %v2552
        %2700 = vst [vmem:[%s2671] ss:$9 sm:$0xff] %v2553
        %2701 = vst [vmem:[%s2673] ss:$9 sm:$0xff] %v2554
        %v2702 = vld [vmem:[#allocation1] sm:$0xff]
        %2703 = vst [vmem:[#allocation1] ss:$9 sm:$0xff] %v2568
        %2704 = vst [vmem:[%s2671] ss:$9 sm:$0xff] %v2569
        %2705 = vst [vmem:[%s2673] ss:$9 sm:$0xff] %v2570
        %2706 = vst [vmem:[%s2675] ss:$9 sm:$0xff] %v2571
        %2707 = vst [vmem:[%s2677] ss:$9 sm:$0xff] %v2486
        %2708 = vst [vmem:[%s2679] ss:$9 sm:$0xff] %v2572
        %2709 = vst [vmem:[%s2681] ss:$9 sm:$0xff] %v2573
        %2710 = vst [vmem:[%s2683] ss:$9 sm:$0xff] %v2574
        %v2711 = vld [vmem:[#allocation1] sm:$0xff]
        %2712 = vst [vmem:[#allocation1] ss:$9 sm:$0xff] %v2575
        %2713 = vst [vmem:[%s2671] ss:$9 sm:$0xff] %v2576
        %2714 = vst [vmem:[%s2673] ss:$9 sm:$0xff] %v2577
        %v2715 = vld [vmem:[#allocation1] sm:$0xff]
        %2716 = vst [vmem:[#allocation1] ss:$9 sm:$0xff] %v2591
        %2717 = vst [vmem:[%s2671] ss:$9 sm:$0xff] %v2592
        %2718 = vst [vmem:[%s2673] ss:$9 sm:$0xff] %v2489
        %2719 = vst [vmem:[%s2675] ss:$9 sm:$0xff] %v2593
        %2720 = vst [vmem:[%s2677] ss:$9 sm:$0xff] %v2594
        %2721 = vst [vmem:[%s2679] ss:$9 sm:$0xff] %v2595
        %2722 = vst [vmem:[%s2681] ss:$9 sm:$0xff] %v2596
        %2723 = vst [vmem:[%s2683] ss:$9 sm:$0xff] %v2597
        %v2724 = vld [vmem:[#allocation1] sm:$0xff]
        %2725 = vst [vmem:[#allocation1] ss:$9 sm:$0xff] %v2598
        %2726 = vst [vmem:[%s2671] ss:$9 sm:$0xff] %v2599
        %2727 = vst [vmem:[%s2673] ss:$9 sm:$0xff] %v2490
        %v2728 = vld [vmem:[#allocation1] sm:$0xff]
        %2729 = vst [vmem:[#allocation1] ss:$9 sm:$0xff] %v2492
        %2730 = vst [vmem:[%s2671] ss:$9 sm:$0xff] %v2614
        %2731 = vst [vmem:[%s2673] ss:$9 sm:$0xff] %v2615
        %2732 = vst [vmem:[%s2675] ss:$9 sm:$0xff] %v2616
        %2733 = vst [vmem:[%s2677] ss:$9 sm:$0xff] %v2617
        %2734 = vst [vmem:[%s2679] ss:$9 sm:$0xff] %v2618
        %2735 = vst [vmem:[%s2681] ss:$9 sm:$0xff] %v2619
        %2736 = vst [vmem:[%s2683] ss:$9 sm:$0xff] %v2620
        %v2737 = vld [vmem:[#allocation1] sm:$0xff]
        %2738 = vst [vmem:[#allocation1] ss:$9 sm:$0xff] %v2493
        %2739 = vst [vmem:[%s2671] ss:$9 sm:$0xff] %v2621
        %2740 = vst [vmem:[%s2673] ss:$9 sm:$0xff] %v2622
        %v2741 = vld [vmem:[#allocation1] sm:$0xff]
        %2742 = vst [vmem:[#allocation1] ss:$9 sm:$0xff] %v2636
        %2743 = vst [vmem:[%s2671] ss:$9 sm:$0xff] %v2637
        %2744 = vst [vmem:[%s2673] ss:$9 sm:$0xff] %v2638
        %2745 = vst [vmem:[%s2675] ss:$9 sm:$0xff] %v2639
        %2746 = vst [vmem:[%s2677] ss:$9 sm:$0xff] %v2640
        %2747 = vst [vmem:[%s2679] ss:$9 sm:$0xff] %v2641
        %2748 = vst [vmem:[%s2681] ss:$9 sm:$0xff] %v2496
        %2749 = vst [vmem:[%s2683] ss:$9 sm:$0xff] %v2642
        %v2750 = vld [vmem:[#allocation1] sm:$0xff]
        %2751 = vst [vmem:[#allocation1] ss:$9 sm:$0xff] %v2643
        %2752 = vst [vmem:[%s2671] ss:$9 sm:$0xff] %v2644
        %2753 = vst [vmem:[%s2673] ss:$9 sm:$0xff] %v2645
        %v2754 = vld [vmem:[#allocation1] sm:$0xff]
        %2767 = vst [vmem:[#allocation1] ss:$9 sm:$0xff] %v2523
        %s2768 = scalar_lea.vmem [#allocation1], 1
        %2769 = vst [vmem:[%s2768] ss:$9 sm:$0xff] %v2524
        %s2770 = scalar_lea.vmem [#allocation1], 2
        %2771 = vst [vmem:[%s2770] ss:$9 sm:$0xff] %v2525
        %s2772 = scalar_lea.vmem [#allocation1], 3
        %2773 = vst [vmem:[%s2772] ss:$9 sm:$0xff] %v2526
        %s2774 = scalar_lea.vmem [#allocation1], 4
        %2775 = vst [vmem:[%s2774] ss:$9 sm:$0xff] %v2527
        %s2776 = scalar_lea.vmem [#allocation1], 5
        %2777 = vst [vmem:[%s2776] ss:$9 sm:$0xff] %v2528
        %s2778 = scalar_lea.vmem [#allocation1], 6
        %2779 = vst [vmem:[%s2778] ss:$9 sm:$0xff] %v2529
        %s2780 = scalar_lea.vmem [#allocation1], 7
        %2781 = vst [vmem:[%s2780] ss:$9 sm:$0xff] %v2480
        %v2782 = vld [vmem:[#allocation1] sm:$0xff]
        %2783 = vst [vmem:[#allocation1] ss:$9 sm:$0xff] %v2530
        %2784 = vst [vmem:[%s2768] ss:$9 sm:$0xff] %v2531
        %2785 = vst [vmem:[%s2770] ss:$9 sm:$0xff] %v2532
        %v2786 = vld [vmem:[#allocation1] sm:$0xff]
        %2787 = vst [vmem:[#allocation1] ss:$9 sm:$0xff] %v2546
        %2788 = vst [vmem:[%s2768] ss:$9 sm:$0xff] %v2547
        %2789 = vst [vmem:[%s2770] ss:$9 sm:$0xff] %v2548
        %2790 = vst [vmem:[%s2772] ss:$9 sm:$0xff] %v2549
        %2791 = vst [vmem:[%s2774] ss:$9 sm:$0xff] %v2550
        %2792 = vst [vmem:[%s2776] ss:$9 sm:$0xff] %v2483
        %2793 = vst [vmem:[%s2778] ss:$9 sm:$0xff] %v2551
        %2794 = vst [vmem:[%s2780] ss:$9 sm:$0xff] %v2552
        %v2795 = vld [vmem:[#allocation1] sm:$0xff]
        %2796 = vst [vmem:[#allocation1] ss:$9 sm:$0xff] %v2553
        %2797 = vst [vmem:[%s2768] ss:$9 sm:$0xff] %v2554
        %2798 = vst [vmem:[%s2770] ss:$9 sm:$0xff] %v2555
        %v2799 = vld [vmem:[#allocation1] sm:$0xff]
        %2800 = vst [vmem:[#allocation1] ss:$9 sm:$0xff] %v2569
        %2801 = vst [vmem:[%s2768] ss:$9 sm:$0xff] %v2570
        %2802 = vst [vmem:[%s2770] ss:$9 sm:$0xff] %v2571
        %2803 = vst [vmem:[%s2772] ss:$9 sm:$0xff] %v2486
        %2804 = vst [vmem:[%s2774] ss:$9 sm:$0xff] %v2572
        %2805 = vst [vmem:[%s2776] ss:$9 sm:$0xff] %v2573
        %2806 = vst [vmem:[%s2778] ss:$9 sm:$0xff] %v2574
        %2807 = vst [vmem:[%s2780] ss:$9 sm:$0xff] %v2575
        %v2808 = vld [vmem:[#allocation1] sm:$0xff]
        %2809 = vst [vmem:[#allocation1] ss:$9 sm:$0xff] %v2576
        %2810 = vst [vmem:[%s2768] ss:$9 sm:$0xff] %v2577
        %2811 = vst [vmem:[%s2770] ss:$9 sm:$0xff] %v2578
        %v2812 = vld [vmem:[#allocation1] sm:$0xff]
        %2813 = vst [vmem:[#allocation1] ss:$9 sm:$0xff] %v2592
        %2814 = vst [vmem:[%s2768] ss:$9 sm:$0xff] %v2489
        %2815 = vst [vmem:[%s2770] ss:$9 sm:$0xff] %v2593
        %2816 = vst [vmem:[%s2772] ss:$9 sm:$0xff] %v2594
        %2817 = vst [vmem:[%s2774] ss:$9 sm:$0xff] %v2595
        %2818 = vst [vmem:[%s2776] ss:$9 sm:$0xff] %v2596
        %2819 = vst [vmem:[%s2778] ss:$9 sm:$0xff] %v2597
        %2820 = vst [vmem:[%s2780] ss:$9 sm:$0xff] %v2598
        %v2821 = vld [vmem:[#allocation1] sm:$0xff]
        %2822 = vst [vmem:[#allocation1] ss:$9 sm:$0xff] %v2599
        %2823 = vst [vmem:[%s2768] ss:$9 sm:$0xff] %v2490
        %2824 = vst [vmem:[%s2770] ss:$9 sm:$0xff] %v2600
        %v2825 = vld [vmem:[#allocation1] sm:$0xff]
        %2826 = vst [vmem:[#allocation1] ss:$9 sm:$0xff] %v2614
        %2827 = vst [vmem:[%s2768] ss:$9 sm:$0xff] %v2615
        %2828 = vst [vmem:[%s2770] ss:$9 sm:$0xff] %v2616
        %2829 = vst [vmem:[%s2772] ss:$9 sm:$0xff] %v2617
        %2830 = vst [vmem:[%s2774] ss:$9 sm:$0xff] %v2618
        %2831 = vst [vmem:[%s2776] ss:$9 sm:$0xff] %v2619
        %2832 = vst [vmem:[%s2778] ss:$9 sm:$0xff] %v2620
        %2833 = vst [vmem:[%s2780] ss:$9 sm:$0xff] %v2493
        %v2834 = vld [vmem:[#allocation1] sm:$0xff]
        %2835 = vst [vmem:[#allocation1] ss:$9 sm:$0xff] %v2621
        %2836 = vst [vmem:[%s2768] ss:$9 sm:$0xff] %v2622
        %2837 = vst [vmem:[%s2770] ss:$9 sm:$0xff] %v2623
        %v2838 = vld [vmem:[#allocation1] sm:$0xff]
        %2839 = vst [vmem:[#allocation1] ss:$9 sm:$0xff] %v2637
        %2840 = vst [vmem:[%s2768] ss:$9 sm:$0xff] %v2638
        %2841 = vst [vmem:[%s2770] ss:$9 sm:$0xff] %v2639
        %2842 = vst [vmem:[%s2772] ss:$9 sm:$0xff] %v2640
        %2843 = vst [vmem:[%s2774] ss:$9 sm:$0xff] %v2641
        %2844 = vst [vmem:[%s2776] ss:$9 sm:$0xff] %v2496
        %2845 = vst [vmem:[%s2778] ss:$9 sm:$0xff] %v2642
        %2846 = vst [vmem:[%s2780] ss:$9 sm:$0xff] %v2643
        %v2847 = vld [vmem:[#allocation1] sm:$0xff]
        %2848 = vst [vmem:[#allocation1] ss:$9 sm:$0xff] %v2644
        %2849 = vst [vmem:[%s2768] ss:$9 sm:$0xff] %v2645
        %2850 = vst [vmem:[%s2770] ss:$9 sm:$0xff] %v2646
        %v2851 = vld [vmem:[#allocation1] sm:$0xff]
        %2852 = vrot.lane.b32.xlu0 %v2782, 4
        %v2853 = vpop.permute.xlu0 %2852
        %2854 = vrot.lane.b32.xlu0 %v2786, 4
        %v2855 = vpop.permute.xlu0 %2854
        %2856 = vrot.lane.b32.xlu0 %v2795, 4
        %v2857 = vpop.permute.xlu0 %2856
        %2858 = vrot.lane.b32.xlu0 %v2799, 4
        %v2859 = vpop.permute.xlu0 %2858
        %2860 = vrot.lane.b32.xlu0 %v2808, 4
        %v2861 = vpop.permute.xlu0 %2860
        %2862 = vrot.lane.b32.xlu0 %v2812, 4
        %v2863 = vpop.permute.xlu0 %2862
        %2864 = vrot.lane.b32.xlu0 %v2821, 4
        %v2865 = vpop.permute.xlu0 %2864
        %2866 = vrot.lane.b32.xlu0 %v2825, 4
        %v2867 = vpop.permute.xlu0 %2866
        %2868 = vrot.lane.b32.xlu0 %v2834, 4
        %v2869 = vpop.permute.xlu0 %2868
        %2870 = vrot.lane.b32.xlu0 %v2838, 4
        %v2871 = vpop.permute.xlu0 %2870
        %2872 = vrot.lane.b32.xlu0 %v2847, 4
        %v2873 = vpop.permute.xlu0 %2872
        %2874 = vrot.lane.b32.xlu0 %v2851, 4
        %v2875 = vpop.permute.xlu0 %2874
        %2888 = vst [vmem:[#allocation1] ss:$9 sm:$0xff] %v2524
        %s2889 = scalar_lea.vmem [#allocation1], 1
        %2890 = vst [vmem:[%s2889] ss:$9 sm:$0xff] %v2525
        %s2891 = scalar_lea.vmem [#allocation1], 2
        %2892 = vst [vmem:[%s2891] ss:$9 sm:$0xff] %v2526
        %s2893 = scalar_lea.vmem [#allocation1], 3
        %2894 = vst [vmem:[%s2893] ss:$9 sm:$0xff] %v2527
        %s2895 = scalar_lea.vmem [#allocation1], 4
        %2896 = vst [vmem:[%s2895] ss:$9 sm:$0xff] %v2528
        %s2897 = scalar_lea.vmem [#allocation1], 5
        %2898 = vst [vmem:[%s2897] ss:$9 sm:$0xff] %v2529
        %s2899 = scalar_lea.vmem [#allocation1], 6
        %2900 = vst [vmem:[%s2899] ss:$9 sm:$0xff] %v2480
        %s2901 = scalar_lea.vmem [#allocation1], 7
        %2902 = vst [vmem:[%s2901] ss:$9 sm:$0xff] %v2530
        %v2903 = vld [vmem:[#allocation1] sm:$0xff]
        %2904 = vst [vmem:[#allocation1] ss:$9 sm:$0xff] %v2531
        %2905 = vst [vmem:[%s2889] ss:$9 sm:$0xff] %v2532
        %2906 = vst [vmem:[%s2891] ss:$9 sm:$0xff] %v2533
        %v2907 = vld [vmem:[#allocation1] sm:$0xff]
        %2908 = vst [vmem:[#allocation1] ss:$9 sm:$0xff] %v2547
        %2909 = vst [vmem:[%s2889] ss:$9 sm:$0xff] %v2548
        %2910 = vst [vmem:[%s2891] ss:$9 sm:$0xff] %v2549
        %2911 = vst [vmem:[%s2893] ss:$9 sm:$0xff] %v2550
        %2912 = vst [vmem:[%s2895] ss:$9 sm:$0xff] %v2483
        %2913 = vst [vmem:[%s2897] ss:$9 sm:$0xff] %v2551
        %2914 = vst [vmem:[%s2899] ss:$9 sm:$0xff] %v2552
        %2915 = vst [vmem:[%s2901] ss:$9 sm:$0xff] %v2553
        %v2916 = vld [vmem:[#allocation1] sm:$0xff]
        %2917 = vst [vmem:[#allocation1] ss:$9 sm:$0xff] %v2554
        %2918 = vst [vmem:[%s2889] ss:$9 sm:$0xff] %v2555
        %2919 = vst [vmem:[%s2891] ss:$9 sm:$0xff] %v2556
        %v2920 = vld [vmem:[#allocation1] sm:$0xff]
        %2921 = vst [vmem:[#allocation1] ss:$9 sm:$0xff] %v2570
        %2922 = vst [vmem:[%s2889] ss:$9 sm:$0xff] %v2571
        %2923 = vst [vmem:[%s2891] ss:$9 sm:$0xff] %v2486
        %2924 = vst [vmem:[%s2893] ss:$9 sm:$0xff] %v2572
        %2925 = vst [vmem:[%s2895] ss:$9 sm:$0xff] %v2573
        %2926 = vst [vmem:[%s2897] ss:$9 sm:$0xff] %v2574
        %2927 = vst [vmem:[%s2899] ss:$9 sm:$0xff] %v2575
        %2928 = vst [vmem:[%s2901] ss:$9 sm:$0xff] %v2576
        %v2929 = vld [vmem:[#allocation1] sm:$0xff]
        %2930 = vst [vmem:[#allocation1] ss:$9 sm:$0xff] %v2577
        %2931 = vst [vmem:[%s2889] ss:$9 sm:$0xff] %v2578
        %2932 = vst [vmem:[%s2891] ss:$9 sm:$0xff] %v2487
        %v2933 = vld [vmem:[#allocation1] sm:$0xff]
        %2934 = vst [vmem:[#allocation1] ss:$9 sm:$0xff] %v2489
        %2935 = vst [vmem:[%s2889] ss:$9 sm:$0xff] %v2593
        %2936 = vst [vmem:[%s2891] ss:$9 sm:$0xff] %v2594
        %2937 = vst [vmem:[%s2893] ss:$9 sm:$0xff] %v2595
        %2938 = vst [vmem:[%s2895] ss:$9 sm:$0xff] %v2596
        %2939 = vst [vmem:[%s2897] ss:$9 sm:$0xff] %v2597
        %2940 = vst [vmem:[%s2899] ss:$9 sm:$0xff] %v2598
        %2941 = vst [vmem:[%s2901] ss:$9 sm:$0xff] %v2599
        %v2942 = vld [vmem:[#allocation1] sm:$0xff]
        %2943 = vst [vmem:[#allocation1] ss:$9 sm:$0xff] %v2490
        %2944 = vst [vmem:[%s2889] ss:$9 sm:$0xff] %v2600
        %2945 = vst [vmem:[%s2891] ss:$9 sm:$0xff] %v2601
        %v2946 = vld [vmem:[#allocation1] sm:$0xff]
        %2947 = vst [vmem:[#allocation1] ss:$9 sm:$0xff] %v2615
        %2948 = vst [vmem:[%s2889] ss:$9 sm:$0xff] %v2616
        %2949 = vst [vmem:[%s2891] ss:$9 sm:$0xff] %v2617
        %2950 = vst [vmem:[%s2893] ss:$9 sm:$0xff] %v2618
        %2951 = vst [vmem:[%s2895] ss:$9 sm:$0xff] %v2619
        %2952 = vst [vmem:[%s2897] ss:$9 sm:$0xff] %v2620
        %2953 = vst [vmem:[%s2899] ss:$9 sm:$0xff] %v2493
        %2954 = vst [vmem:[%s2901] ss:$9 sm:$0xff] %v2621
        %v2955 = vld [vmem:[#allocation1] sm:$0xff]
        %2956 = vst [vmem:[#allocation1] ss:$9 sm:$0xff] %v2622
        %2957 = vst [vmem:[%s2889] ss:$9 sm:$0xff] %v2623
        %2958 = vst [vmem:[%s2891] ss:$9 sm:$0xff] %v2624
        %v2959 = vld [vmem:[#allocation1] sm:$0xff]
        %2960 = vst [vmem:[#allocation1] ss:$9 sm:$0xff] %v2638
        %2961 = vst [vmem:[%s2889] ss:$9 sm:$0xff] %v2639
        %2962 = vst [vmem:[%s2891] ss:$9 sm:$0xff] %v2640
        %2963 = vst [vmem:[%s2893] ss:$9 sm:$0xff] %v2641
        %2964 = vst [vmem:[%s2895] ss:$9 sm:$0xff] %v2496
        %2965 = vst [vmem:[%s2897] ss:$9 sm:$0xff] %v2642
        %2966 = vst [vmem:[%s2899] ss:$9 sm:$0xff] %v2643
        %2967 = vst [vmem:[%s2901] ss:$9 sm:$0xff] %v2644
        %v2968 = vld [vmem:[#allocation1] sm:$0xff]
        %2969 = vst [vmem:[#allocation1] ss:$9 sm:$0xff] %v2645
        %2970 = vst [vmem:[%s2889] ss:$9 sm:$0xff] %v2646
        %2971 = vst [vmem:[%s2891] ss:$9 sm:$0xff] %v2647
        %v2972 = vld [vmem:[#allocation1] sm:$0xff]
        %2973 = vrot.lane.b32.xlu0 %v2903, 8
        %v2974 = vpop.permute.xlu0 %2973
        %2975 = vrot.lane.b32.xlu0 %v2907, 8
        %v2976 = vpop.permute.xlu0 %2975
        %2977 = vrot.lane.b32.xlu0 %v2916, 8
        %v2978 = vpop.permute.xlu0 %2977
        %2979 = vrot.lane.b32.xlu0 %v2920, 8
        %v2980 = vpop.permute.xlu0 %2979
        %2981 = vrot.lane.b32.xlu0 %v2929, 8
        %v2982 = vpop.permute.xlu0 %2981
        %2983 = vrot.lane.b32.xlu0 %v2933, 8
        %v2984 = vpop.permute.xlu0 %2983
        %2985 = vrot.lane.b32.xlu0 %v2942, 8
        %v2986 = vpop.permute.xlu0 %2985
        %2987 = vrot.lane.b32.xlu0 %v2946, 8
        %v2988 = vpop.permute.xlu0 %2987
        %2989 = vrot.lane.b32.xlu0 %v2955, 8
        %v2990 = vpop.permute.xlu0 %2989
        %2991 = vrot.lane.b32.xlu0 %v2959, 8
        %v2992 = vpop.permute.xlu0 %2991
        %2993 = vrot.lane.b32.xlu0 %v2968, 8
        %v2994 = vpop.permute.xlu0 %2993
        %2995 = vrot.lane.b32.xlu0 %v2972, 8
        %v2996 = vpop.permute.xlu0 %2995
        %3009 = vst [vmem:[#allocation1] ss:$9 sm:$0xff] %v2534
        %s3010 = scalar_lea.vmem [#allocation1], 1
        %3011 = vst [vmem:[%s3010] ss:$9 sm:$0xff] %v2535
        %s3012 = scalar_lea.vmem [#allocation1], 2
        %3013 = vst [vmem:[%s3012] ss:$9 sm:$0xff] %v2536
        %s3014 = scalar_lea.vmem [#allocation1], 3
        %3015 = vst [vmem:[%s3014] ss:$9 sm:$0xff] %v2481
        %s3016 = scalar_lea.vmem [#allocation1], 4
        %3017 = vst [vmem:[%s3016] ss:$9 sm:$0xff] %v2537
        %s3018 = scalar_lea.vmem [#allocation1], 5
        %3019 = vst [vmem:[%s3018] ss:$9 sm:$0xff] %v2538
        %s3020 = scalar_lea.vmem [#allocation1], 6
        %3021 = vst [vmem:[%s3020] ss:$9 sm:$0xff] %v2539
        %s3022 = scalar_lea.vmem [#allocation1], 7
        %3023 = vst [vmem:[%s3022] ss:$9 sm:$0xff] %v2540
        %v3024 = vld [vmem:[#allocation1] sm:$0xff]
        %3025 = vst [vmem:[#allocation1] ss:$9 sm:$0xff] %v2541
        %3026 = vst [vmem:[%s3010] ss:$9 sm:$0xff] %v2542
        %3027 = vst [vmem:[%s3012] ss:$9 sm:$0xff] %v2543
        %v3028 = vld [vmem:[#allocation1] sm:$0xff]
        %3029 = vst [vmem:[#allocation1] ss:$9 sm:$0xff] %v2557
        %3030 = vst [vmem:[%s3010] ss:$9 sm:$0xff] %v2484
        %3031 = vst [vmem:[%s3012] ss:$9 sm:$0xff] %v2558
        %3032 = vst [vmem:[%s3014] ss:$9 sm:$0xff] %v2559
        %3033 = vst [vmem:[%s3016] ss:$9 sm:$0xff] %v2560
        %3034 = vst [vmem:[%s3018] ss:$9 sm:$0xff] %v2561
        %3035 = vst [vmem:[%s3020] ss:$9 sm:$0xff] %v2562
        %3036 = vst [vmem:[%s3022] ss:$9 sm:$0xff] %v2563
        %v3037 = vld [vmem:[#allocation1] sm:$0xff]
        %3038 = vst [vmem:[#allocation1] ss:$9 sm:$0xff] %v2564
        %3039 = vst [vmem:[%s3010] ss:$9 sm:$0xff] %v2485
        %3040 = vst [vmem:[%s3012] ss:$9 sm:$0xff] %v2565
        %v3041 = vld [vmem:[#allocation1] sm:$0xff]
        %3042 = vst [vmem:[#allocation1] ss:$9 sm:$0xff] %v2579
        %3043 = vst [vmem:[%s3010] ss:$9 sm:$0xff] %v2580
        %3044 = vst [vmem:[%s3012] ss:$9 sm:$0xff] %v2581
        %3045 = vst [vmem:[%s3014] ss:$9 sm:$0xff] %v2582
        %3046 = vst [vmem:[%s3016] ss:$9 sm:$0xff] %v2583
        %3047 = vst [vmem:[%s3018] ss:$9 sm:$0xff] %v2584
        %3048 = vst [vmem:[%s3020] ss:$9 sm:$0xff] %v2585
        %3049 = vst [vmem:[%s3022] ss:$9 sm:$0xff] %v2488
        %v3050 = vld [vmem:[#allocation1] sm:$0xff]
        %3051 = vst [vmem:[#allocation1] ss:$9 sm:$0xff] %v2586
        %3052 = vst [vmem:[%s3010] ss:$9 sm:$0xff] %v2587
        %3053 = vst [vmem:[%s3012] ss:$9 sm:$0xff] %v2588
        %v3054 = vld [vmem:[#allocation1] sm:$0xff]
        %3055 = vst [vmem:[#allocation1] ss:$9 sm:$0xff] %v2602
        %3056 = vst [vmem:[%s3010] ss:$9 sm:$0xff] %v2603
        %3057 = vst [vmem:[%s3012] ss:$9 sm:$0xff] %v2604
        %3058 = vst [vmem:[%s3014] ss:$9 sm:$0xff] %v2605
        %3059 = vst [vmem:[%s3016] ss:$9 sm:$0xff] %v2606
        %3060 = vst [vmem:[%s3018] ss:$9 sm:$0xff] %v2491
        %3061 = vst [vmem:[%s3020] ss:$9 sm:$0xff] %v2607
        %3062 = vst [vmem:[%s3022] ss:$9 sm:$0xff] %v2608
        %v3063 = vld [vmem:[#allocation1] sm:$0xff]
        %3064 = vst [vmem:[#allocation1] ss:$9 sm:$0xff] %v2609
        %3065 = vst [vmem:[%s3010] ss:$9 sm:$0xff] %v2610
        %3066 = vst [vmem:[%s3012] ss:$9 sm:$0xff] %v2611
        %v3067 = vld [vmem:[#allocation1] sm:$0xff]
        %3068 = vst [vmem:[#allocation1] ss:$9 sm:$0xff] %v2625
        %3069 = vst [vmem:[%s3010] ss:$9 sm:$0xff] %v2626
        %3070 = vst [vmem:[%s3012] ss:$9 sm:$0xff] %v2627
        %3071 = vst [vmem:[%s3014] ss:$9 sm:$0xff] %v2494
        %3072 = vst [vmem:[%s3016] ss:$9 sm:$0xff] %v2628
        %3073 = vst [vmem:[%s3018] ss:$9 sm:$0xff] %v2629
        %3074 = vst [vmem:[%s3020] ss:$9 sm:$0xff] %v2630
        %3075 = vst [vmem:[%s3022] ss:$9 sm:$0xff] %v2631
        %v3076 = vld [vmem:[#allocation1] sm:$0xff]
        %3077 = vst [vmem:[#allocation1] ss:$9 sm:$0xff] %v2632
        %3078 = vst [vmem:[%s3010] ss:$9 sm:$0xff] %v2633
        %3079 = vst [vmem:[%s3012] ss:$9 sm:$0xff] %v2634
        %v3080 = vld [vmem:[#allocation1] sm:$0xff]
        %3081 = vst [vmem:[#allocation1] ss:$9 sm:$0xff] %v2648
        %3082 = vst [vmem:[%s3010] ss:$9 sm:$0xff] %v2497
        %3083 = vst [vmem:[%s3012] ss:$9 sm:$0xff] %v2649
        %3084 = vst [vmem:[%s3014] ss:$9 sm:$0xff] %v2650
        %3085 = vst [vmem:[%s3016] ss:$9 sm:$0xff] %v2651
        %3086 = vst [vmem:[%s3018] ss:$9 sm:$0xff] %v2652
        %3087 = vst [vmem:[%s3020] ss:$9 sm:$0xff] %v2653
        %3088 = vst [vmem:[%s3022] ss:$9 sm:$0xff] %v2654
        %v3089 = vld [vmem:[#allocation1] sm:$0xff]
        %3090 = vst [vmem:[#allocation1] ss:$9 sm:$0xff] %v2655
        %3091 = vst [vmem:[%s3010] ss:$9 sm:$0xff] %v2498
        %3092 = vst [vmem:[%s3012] ss:$9 sm:$0xff] %v2656
        %v3093 = vld [vmem:[#allocation1] sm:$0xff]
        %3094 = vrot.lane.b32.xlu0 %v3024, 12
        %v3095 = vpop.permute.xlu0 %3094
        %3096 = vrot.lane.b32.xlu0 %v3028, 12
        %v3097 = vpop.permute.xlu0 %3096
        %3098 = vrot.lane.b32.xlu0 %v3037, 12
        %v3099 = vpop.permute.xlu0 %3098
        %3100 = vrot.lane.b32.xlu0 %v3041, 12
        %v3101 = vpop.permute.xlu0 %3100
        %3102 = vrot.lane.b32.xlu0 %v3050, 12
        %v3103 = vpop.permute.xlu0 %3102
        %3104 = vrot.lane.b32.xlu0 %v3054, 12
        %v3105 = vpop.permute.xlu0 %3104
        %3106 = vrot.lane.b32.xlu0 %v3063, 12
        %v3107 = vpop.permute.xlu0 %3106
        %3108 = vrot.lane.b32.xlu0 %v3067, 12
        %v3109 = vpop.permute.xlu0 %3108
        %3110 = vrot.lane.b32.xlu0 %v3076, 12
        %v3111 = vpop.permute.xlu0 %3110
        %3112 = vrot.lane.b32.xlu0 %v3080, 12
        %v3113 = vpop.permute.xlu0 %3112
        %3114 = vrot.lane.b32.xlu0 %v3089, 12
        %v3115 = vpop.permute.xlu0 %3114
        %3116 = vrot.lane.b32.xlu0 %v3093, 12
        %v3117 = vpop.permute.xlu0 %3116
        %3130 = vst [vmem:[#allocation1] ss:$9 sm:$0xff] %v2535
        %s3131 = scalar_lea.vmem [#allocation1], 1
        %3132 = vst [vmem:[%s3131] ss:$9 sm:$0xff] %v2536
        %s3133 = scalar_lea.vmem [#allocation1], 2
        %3134 = vst [vmem:[%s3133] ss:$9 sm:$0xff] %v2481
        %s3135 = scalar_lea.vmem [#allocation1], 3
        %3136 = vst [vmem:[%s3135] ss:$9 sm:$0xff] %v2537
        %s3137 = scalar_lea.vmem [#allocation1], 4
        %3138 = vst [vmem:[%s3137] ss:$9 sm:$0xff] %v2538
        %s3139 = scalar_lea.vmem [#allocation1], 5
        %3140 = vst [vmem:[%s3139] ss:$9 sm:$0xff] %v2539
        %s3141 = scalar_lea.vmem [#allocation1], 6
        %3142 = vst [vmem:[%s3141] ss:$9 sm:$0xff] %v2540
        %s3143 = scalar_lea.vmem [#allocation1], 7
        %3144 = vst [vmem:[%s3143] ss:$9 sm:$0xff] %v2541
        %v3145 = vld [vmem:[#allocation1] sm:$0xff]
        %3146 = vst [vmem:[#allocation1] ss:$9 sm:$0xff] %v2542
        %3147 = vst [vmem:[%s3131] ss:$9 sm:$0xff] %v2543
        %3148 = vst [vmem:[%s3133] ss:$9 sm:$0xff] %v2482
        %v3149 = vld [vmem:[#allocation1] sm:$0xff]
        %3150 = vst [vmem:[#allocation1] ss:$9 sm:$0xff] %v2484
        %3151 = vst [vmem:[%s3131] ss:$9 sm:$0xff] %v2558
        %3152 = vst [vmem:[%s3133] ss:$9 sm:$0xff] %v2559
        %3153 = vst [vmem:[%s3135] ss:$9 sm:$0xff] %v2560
        %3154 = vst [vmem:[%s3137] ss:$9 sm:$0xff] %v2561
        %3155 = vst [vmem:[%s3139] ss:$9 sm:$0xff] %v2562
        %3156 = vst [vmem:[%s3141] ss:$9 sm:$0xff] %v2563
        %3157 = vst [vmem:[%s3143] ss:$9 sm:$0xff] %v2564
        %v3158 = vld [vmem:[#allocation1] sm:$0xff]
        %3159 = vst [vmem:[#allocation1] ss:$9 sm:$0xff] %v2485
        %3160 = vst [vmem:[%s3131] ss:$9 sm:$0xff] %v2565
        %3161 = vst [vmem:[%s3133] ss:$9 sm:$0xff] %v2566
        %v3162 = vld [vmem:[#allocation1] sm:$0xff]
        %3163 = vst [vmem:[#allocation1] ss:$9 sm:$0xff] %v2580
        %3164 = vst [vmem:[%s3131] ss:$9 sm:$0xff] %v2581
        %3165 = vst [vmem:[%s3133] ss:$9 sm:$0xff] %v2582
        %3166 = vst [vmem:[%s3135] ss:$9 sm:$0xff] %v2583
        %3167 = vst [vmem:[%s3137] ss:$9 sm:$0xff] %v2584
        %3168 = vst [vmem:[%s3139] ss:$9 sm:$0xff] %v2585
        %3169 = vst [vmem:[%s3141] ss:$9 sm:$0xff] %v2488
        %3170 = vst [vmem:[%s3143] ss:$9 sm:$0xff] %v2586
        %v3171 = vld [vmem:[#allocation1] sm:$0xff]
        %3172 = vst [vmem:[#allocation1] ss:$9 sm:$0xff] %v2587
        %3173 = vst [vmem:[%s3131] ss:$9 sm:$0xff] %v2588
        %3174 = vst [vmem:[%s3133] ss:$9 sm:$0xff] %v2589
        %v3175 = vld [vmem:[#allocation1] sm:$0xff]
        %3176 = vst [vmem:[#allocation1] ss:$9 sm:$0xff] %v2603
        %3177 = vst [vmem:[%s3131] ss:$9 sm:$0xff] %v2604
        %3178 = vst [vmem:[%s3133] ss:$9 sm:$0xff] %v2605
        %3179 = vst [vmem:[%s3135] ss:$9 sm:$0xff] %v2606
        %3180 = vst [vmem:[%s3137] ss:$9 sm:$0xff] %v2491
        %3181 = vst [vmem:[%s3139] ss:$9 sm:$0xff] %v2607
        %3182 = vst [vmem:[%s3141] ss:$9 sm:$0xff] %v2608
        %3183 = vst [vmem:[%s3143] ss:$9 sm:$0xff] %v2609
        %v3184 = vld [vmem:[#allocation1] sm:$0xff]
        %3185 = vst [vmem:[#allocation1] ss:$9 sm:$0xff] %v2610
        %3186 = vst [vmem:[%s3131] ss:$9 sm:$0xff] %v2611
        %3187 = vst [vmem:[%s3133] ss:$9 sm:$0xff] %v2612
        %v3188 = vld [vmem:[#allocation1] sm:$0xff]
        %3189 = vst [vmem:[#allocation1] ss:$9 sm:$0xff] %v2626
        %3190 = vst [vmem:[%s3131] ss:$9 sm:$0xff] %v2627
        %3191 = vst [vmem:[%s3133] ss:$9 sm:$0xff] %v2494
        %3192 = vst [vmem:[%s3135] ss:$9 sm:$0xff] %v2628
        %3193 = vst [vmem:[%s3137] ss:$9 sm:$0xff] %v2629
        %3194 = vst [vmem:[%s3139] ss:$9 sm:$0xff] %v2630
        %3195 = vst [vmem:[%s3141] ss:$9 sm:$0xff] %v2631
        %3196 = vst [vmem:[%s3143] ss:$9 sm:$0xff] %v2632
        %v3197 = vld [vmem:[#allocation1] sm:$0xff]
        %3198 = vst [vmem:[#allocation1] ss:$9 sm:$0xff] %v2633
        %3199 = vst [vmem:[%s3131] ss:$9 sm:$0xff] %v2634
        %3200 = vst [vmem:[%s3133] ss:$9 sm:$0xff] %v2495
        %v3201 = vld [vmem:[#allocation1] sm:$0xff]
        %3202 = vst [vmem:[#allocation1] ss:$9 sm:$0xff] %v2497
        %3203 = vst [vmem:[%s3131] ss:$9 sm:$0xff] %v2649
        %3204 = vst [vmem:[%s3133] ss:$9 sm:$0xff] %v2650
        %3205 = vst [vmem:[%s3135] ss:$9 sm:$0xff] %v2651
        %3206 = vst [vmem:[%s3137] ss:$9 sm:$0xff] %v2652
        %3207 = vst [vmem:[%s3139] ss:$9 sm:$0xff] %v2653
        %3208 = vst [vmem:[%s3141] ss:$9 sm:$0xff] %v2654
        %3209 = vst [vmem:[%s3143] ss:$9 sm:$0xff] %v2655
        %v3210 = vld [vmem:[#allocation1] sm:$0xff]
        %3211 = vst [vmem:[#allocation1] ss:$9 sm:$0xff] %v2498
        %3212 = vst [vmem:[%s3131] ss:$9 sm:$0xff] %v2656
        %3213 = vst [vmem:[%s3133] ss:$9 sm:$0xff] %v2657
        %v3214 = vld [vmem:[#allocation1] sm:$0xff]
        %3215 = vrot.lane.b32.xlu0 %v3145, 16
        %v3216 = vpop.permute.xlu0 %3215
        %3217 = vrot.lane.b32.xlu0 %v3149, 16
        %v3218 = vpop.permute.xlu0 %3217
        %3219 = vrot.lane.b32.xlu0 %v3158, 16
        %v3220 = vpop.permute.xlu0 %3219
        %3221 = vrot.lane.b32.xlu0 %v3162, 16
        %v3222 = vpop.permute.xlu0 %3221
        %3223 = vrot.lane.b32.xlu0 %v3171, 16
        %v3224 = vpop.permute.xlu0 %3223
        %3225 = vrot.lane.b32.xlu0 %v3175, 16
        %v3226 = vpop.permute.xlu0 %3225
        %3227 = vrot.lane.b32.xlu0 %v3184, 16
        %v3228 = vpop.permute.xlu0 %3227
        %3229 = vrot.lane.b32.xlu0 %v3188, 16
        %v3230 = vpop.permute.xlu0 %3229
        %3231 = vrot.lane.b32.xlu0 %v3197, 16
        %v3232 = vpop.permute.xlu0 %3231
        %3233 = vrot.lane.b32.xlu0 %v3201, 16
        %v3234 = vpop.permute.xlu0 %3233
        %3235 = vrot.lane.b32.xlu0 %v3210, 16
        %v3236 = vpop.permute.xlu0 %3235
        %3237 = vrot.lane.b32.xlu0 %v3214, 16
        %v3238 = vpop.permute.xlu0 %3237
        %3251 = vst [vmem:[#allocation1] ss:$9 sm:$0xff] %v2536
        %s3252 = scalar_lea.vmem [#allocation1], 1
        %3253 = vst [vmem:[%s3252] ss:$9 sm:$0xff] %v2481
        %s3254 = scalar_lea.vmem [#allocation1], 2
        %3255 = vst [vmem:[%s3254] ss:$9 sm:$0xff] %v2537
        %s3256 = scalar_lea.vmem [#allocation1], 3
        %3257 = vst [vmem:[%s3256] ss:$9 sm:$0xff] %v2538
        %s3258 = scalar_lea.vmem [#allocation1], 4
        %3259 = vst [vmem:[%s3258] ss:$9 sm:$0xff] %v2539
        %s3260 = scalar_lea.vmem [#allocation1], 5
        %3261 = vst [vmem:[%s3260] ss:$9 sm:$0xff] %v2540
        %s3262 = scalar_lea.vmem [#allocation1], 6
        %3263 = vst [vmem:[%s3262] ss:$9 sm:$0xff] %v2541
        %s3264 = scalar_lea.vmem [#allocation1], 7
        %3265 = vst [vmem:[%s3264] ss:$9 sm:$0xff] %v2542
        %v3266 = vld [vmem:[#allocation1] sm:$0xff]
        %3267 = vst [vmem:[#allocation1] ss:$9 sm:$0xff] %v2543
        %3268 = vst [vmem:[%s3252] ss:$9 sm:$0xff] %v2482
        %3269 = vst [vmem:[%s3254] ss:$9 sm:$0xff] %v2544
        %v3270 = vld [vmem:[#allocation1] sm:$0xff]
        %3271 = vst [vmem:[#allocation1] ss:$9 sm:$0xff] %v2558
        %3272 = vst [vmem:[%s3252] ss:$9 sm:$0xff] %v2559
        %3273 = vst [vmem:[%s3254] ss:$9 sm:$0xff] %v2560
        %3274 = vst [vmem:[%s3256] ss:$9 sm:$0xff] %v2561
        %3275 = vst [vmem:[%s3258] ss:$9 sm:$0xff] %v2562
        %3276 = vst [vmem:[%s3260] ss:$9 sm:$0xff] %v2563
        %3277 = vst [vmem:[%s3262] ss:$9 sm:$0xff] %v2564
        %3278 = vst [vmem:[%s3264] ss:$9 sm:$0xff] %v2485
        %v3279 = vld [vmem:[#allocation1] sm:$0xff]
        %3280 = vst [vmem:[#allocation1] ss:$9 sm:$0xff] %v2565
        %3281 = vst [vmem:[%s3252] ss:$9 sm:$0xff] %v2566
        %3282 = vst [vmem:[%s3254] ss:$9 sm:$0xff] %v2567
        %v3283 = vld [vmem:[#allocation1] sm:$0xff]
        %3284 = vst [vmem:[#allocation1] ss:$9 sm:$0xff] %v2581
        %3285 = vst [vmem:[%s3252] ss:$9 sm:$0xff] %v2582
        %3286 = vst [vmem:[%s3254] ss:$9 sm:$0xff] %v2583
        %3287 = vst [vmem:[%s3256] ss:$9 sm:$0xff] %v2584
        %3288 = vst [vmem:[%s3258] ss:$9 sm:$0xff] %v2585
        %3289 = vst [vmem:[%s3260] ss:$9 sm:$0xff] %v2488
        %3290 = vst [vmem:[%s3262] ss:$9 sm:$0xff] %v2586
        %3291 = vst [vmem:[%s3264] ss:$9 sm:$0xff] %v2587
        %v3292 = vld [vmem:[#allocation1] sm:$0xff]
        %3293 = vst [vmem:[#allocation1] ss:$9 sm:$0xff] %v2588
        %3294 = vst [vmem:[%s3252] ss:$9 sm:$0xff] %v2589
        %3295 = vst [vmem:[%s3254] ss:$9 sm:$0xff] %v2590
        %v3296 = vld [vmem:[#allocation1] sm:$0xff]
        %3297 = vst [vmem:[#allocation1] ss:$9 sm:$0xff] %v2604
        %3298 = vst [vmem:[%s3252] ss:$9 sm:$0xff] %v2605
        %3299 = vst [vmem:[%s3254] ss:$9 sm:$0xff] %v2606
        %3300 = vst [vmem:[%s3256] ss:$9 sm:$0xff] %v2491
        %3301 = vst [vmem:[%s3258] ss:$9 sm:$0xff] %v2607
        %3302 = vst [vmem:[%s3260] ss:$9 sm:$0xff] %v2608
        %3303 = vst [vmem:[%s3262] ss:$9 sm:$0xff] %v2609
        %3304 = vst [vmem:[%s3264] ss:$9 sm:$0xff] %v2610
        %v3305 = vld [vmem:[#allocation1] sm:$0xff]
        %3306 = vst [vmem:[#allocation1] ss:$9 sm:$0xff] %v2611
        %3307 = vst [vmem:[%s3252] ss:$9 sm:$0xff] %v2612
        %3308 = vst [vmem:[%s3254] ss:$9 sm:$0xff] %v2613
        %v3309 = vld [vmem:[#allocation1] sm:$0xff]
        %3310 = vst [vmem:[#allocation1] ss:$9 sm:$0xff] %v2627
        %3311 = vst [vmem:[%s3252] ss:$9 sm:$0xff] %v2494
        %3312 = vst [vmem:[%s3254] ss:$9 sm:$0xff] %v2628
        %3313 = vst [vmem:[%s3256] ss:$9 sm:$0xff] %v2629
        %3314 = vst [vmem:[%s3258] ss:$9 sm:$0xff] %v2630
        %3315 = vst [vmem:[%s3260] ss:$9 sm:$0xff] %v2631
        %3316 = vst [vmem:[%s3262] ss:$9 sm:$0xff] %v2632
        %3317 = vst [vmem:[%s3264] ss:$9 sm:$0xff] %v2633
        %v3318 = vld [vmem:[#allocation1] sm:$0xff]
        %3319 = vst [vmem:[#allocation1] ss:$9 sm:$0xff] %v2634
        %3320 = vst [vmem:[%s3252] ss:$9 sm:$0xff] %v2495
        %3321 = vst [vmem:[%s3254] ss:$9 sm:$0xff] %v2635
        %v3322 = vld [vmem:[#allocation1] sm:$0xff]
        %3323 = vst [vmem:[#allocation1] ss:$9 sm:$0xff] %v2649
        %3324 = vst [vmem:[%s3252] ss:$9 sm:$0xff] %v2650
        %3325 = vst [vmem:[%s3254] ss:$9 sm:$0xff] %v2651
        %3326 = vst [vmem:[%s3256] ss:$9 sm:$0xff] %v2652
        %3327 = vst [vmem:[%s3258] ss:$9 sm:$0xff] %v2653
        %3328 = vst [vmem:[%s3260] ss:$9 sm:$0xff] %v2654
        %3329 = vst [vmem:[%s3262] ss:$9 sm:$0xff] %v2655
        %3330 = vst [vmem:[%s3264] ss:$9 sm:$0xff] %v2498
        %v3331 = vld [vmem:[#allocation1] sm:$0xff]
        %3332 = vst [vmem:[#allocation1] ss:$9 sm:$0xff] %v2656
        %3333 = vst [vmem:[%s3252] ss:$9 sm:$0xff] %v2657
        %3334 = vst [vmem:[%s3254] ss:$9 sm:$0xff] %v2658
        %v3335 = vld [vmem:[#allocation1] sm:$0xff]
        %3336 = vrot.lane.b32.xlu0 %v3266, 20
        %v3337 = vpop.permute.xlu0 %3336
        %3338 = vrot.lane.b32.xlu0 %v3270, 20
        %v3339 = vpop.permute.xlu0 %3338
        %3340 = vrot.lane.b32.xlu0 %v3279, 20
        %v3341 = vpop.permute.xlu0 %3340
        %3342 = vrot.lane.b32.xlu0 %v3283, 20
        %v3343 = vpop.permute.xlu0 %3342
        %3344 = vrot.lane.b32.xlu0 %v3292, 20
        %v3345 = vpop.permute.xlu0 %3344
        %3346 = vrot.lane.b32.xlu0 %v3296, 20
        %v3347 = vpop.permute.xlu0 %3346
        %3348 = vrot.lane.b32.xlu0 %v3305, 20
        %v3349 = vpop.permute.xlu0 %3348
        %3350 = vrot.lane.b32.xlu0 %v3309, 20
        %v3351 = vpop.permute.xlu0 %3350
        %3352 = vrot.lane.b32.xlu0 %v3318, 20
        %v3353 = vpop.permute.xlu0 %3352
        %3354 = vrot.lane.b32.xlu0 %v3322, 20
        %v3355 = vpop.permute.xlu0 %3354
        %3356 = vrot.lane.b32.xlu0 %v3331, 20
        %v3357 = vpop.permute.xlu0 %3356
        %3358 = vrot.lane.b32.xlu0 %v3335, 20
        %v3359 = vpop.permute.xlu0 %3358
        %3372 = vst [vmem:[#allocation1] ss:$9 sm:$0xff] %v2545
        %s3373 = scalar_lea.vmem [#allocation1], 1
        %3374 = vst [vmem:[%s3373] ss:$9 sm:$0xff] %v2546
        %s3375 = scalar_lea.vmem [#allocation1], 2
        %3376 = vst [vmem:[%s3375] ss:$9 sm:$0xff] %v2547
        %s3377 = scalar_lea.vmem [#allocation1], 3
        %3378 = vst [vmem:[%s3377] ss:$9 sm:$0xff] %v2548
        %s3379 = scalar_lea.vmem [#allocation1], 4
        %3380 = vst [vmem:[%s3379] ss:$9 sm:$0xff] %v2549
        %s3381 = scalar_lea.vmem [#allocation1], 5
        %3382 = vst [vmem:[%s3381] ss:$9 sm:$0xff] %v2550
        %s3383 = scalar_lea.vmem [#allocation1], 6
        %3384 = vst [vmem:[%s3383] ss:$9 sm:$0xff] %v2483
        %s3385 = scalar_lea.vmem [#allocation1], 7
        %3386 = vst [vmem:[%s3385] ss:$9 sm:$0xff] %v2551
        %v3387 = vld [vmem:[#allocation1] sm:$0xff]
        %3388 = vst [vmem:[#allocation1] ss:$9 sm:$0xff] %v2552
        %3389 = vst [vmem:[%s3373] ss:$9 sm:$0xff] %v2553
        %3390 = vst [vmem:[%s3375] ss:$9 sm:$0xff] %v2554
        %v3391 = vld [vmem:[#allocation1] sm:$0xff]
        %3392 = vst [vmem:[#allocation1] ss:$9 sm:$0xff] %v2568
        %3393 = vst [vmem:[%s3373] ss:$9 sm:$0xff] %v2569
        %3394 = vst [vmem:[%s3375] ss:$9 sm:$0xff] %v2570
        %3395 = vst [vmem:[%s3377] ss:$9 sm:$0xff] %v2571
        %3396 = vst [vmem:[%s3379] ss:$9 sm:$0xff] %v2486
        %3397 = vst [vmem:[%s3381] ss:$9 sm:$0xff] %v2572
        %3398 = vst [vmem:[%s3383] ss:$9 sm:$0xff] %v2573
        %3399 = vst [vmem:[%s3385] ss:$9 sm:$0xff] %v2574
        %v3400 = vld [vmem:[#allocation1] sm:$0xff]
        %3401 = vst [vmem:[#allocation1] ss:$9 sm:$0xff] %v2575
        %3402 = vst [vmem:[%s3373] ss:$9 sm:$0xff] %v2576
        %3403 = vst [vmem:[%s3375] ss:$9 sm:$0xff] %v2577
        %v3404 = vld [vmem:[#allocation1] sm:$0xff]
        %3405 = vst [vmem:[#allocation1] ss:$9 sm:$0xff] %v2591
        %3406 = vst [vmem:[%s3373] ss:$9 sm:$0xff] %v2592
        %3407 = vst [vmem:[%s3375] ss:$9 sm:$0xff] %v2489
        %3408 = vst [vmem:[%s3377] ss:$9 sm:$0xff] %v2593
        %3409 = vst [vmem:[%s3379] ss:$9 sm:$0xff] %v2594
        %3410 = vst [vmem:[%s3381] ss:$9 sm:$0xff] %v2595
        %3411 = vst [vmem:[%s3383] ss:$9 sm:$0xff] %v2596
        %3412 = vst [vmem:[%s3385] ss:$9 sm:$0xff] %v2597
        %v3413 = vld [vmem:[#allocation1] sm:$0xff]
        %3414 = vst [vmem:[#allocation1] ss:$9 sm:$0xff] %v2598
        %3415 = vst [vmem:[%s3373] ss:$9 sm:$0xff] %v2599
        %3416 = vst [vmem:[%s3375] ss:$9 sm:$0xff] %v2490
        %v3417 = vld [vmem:[#allocation1] sm:$0xff]
        %3418 = vst [vmem:[#allocation1] ss:$9 sm:$0xff] %v2492
        %3419 = vst [vmem:[%s3373] ss:$9 sm:$0xff] %v2614
        %3420 = vst [vmem:[%s3375] ss:$9 sm:$0xff] %v2615
        %3421 = vst [vmem:[%s3377] ss:$9 sm:$0xff] %v2616
        %3422 = vst [vmem:[%s3379] ss:$9 sm:$0xff] %v2617
        %3423 = vst [vmem:[%s3381] ss:$9 sm:$0xff] %v2618
        %3424 = vst [vmem:[%s3383] ss:$9 sm:$0xff] %v2619
        %3425 = vst [vmem:[%s3385] ss:$9 sm:$0xff] %v2620
        %v3426 = vld [vmem:[#allocation1] sm:$0xff]
        %3427 = vst [vmem:[#allocation1] ss:$9 sm:$0xff] %v2493
        %3428 = vst [vmem:[%s3373] ss:$9 sm:$0xff] %v2621
        %3429 = vst [vmem:[%s3375] ss:$9 sm:$0xff] %v2622
        %v3430 = vld [vmem:[#allocation1] sm:$0xff]
        %3431 = vst [vmem:[#allocation1] ss:$9 sm:$0xff] %v2636
        %3432 = vst [vmem:[%s3373] ss:$9 sm:$0xff] %v2637
        %3433 = vst [vmem:[%s3375] ss:$9 sm:$0xff] %v2638
        %3434 = vst [vmem:[%s3377] ss:$9 sm:$0xff] %v2639
        %3435 = vst [vmem:[%s3379] ss:$9 sm:$0xff] %v2640
        %3436 = vst [vmem:[%s3381] ss:$9 sm:$0xff] %v2641
        %3437 = vst [vmem:[%s3383] ss:$9 sm:$0xff] %v2496
        %3438 = vst [vmem:[%s3385] ss:$9 sm:$0xff] %v2642
        %v3439 = vld [vmem:[#allocation1] sm:$0xff]
        %3440 = vst [vmem:[#allocation1] ss:$9 sm:$0xff] %v2643
        %3441 = vst [vmem:[%s3373] ss:$9 sm:$0xff] %v2644
        %3442 = vst [vmem:[%s3375] ss:$9 sm:$0xff] %v2645
        %v3443 = vld [vmem:[#allocation1] sm:$0xff]
        %3444 = vst [vmem:[#allocation1] ss:$9 sm:$0xff] %v2659
        %3445 = vst [vmem:[%s3373] ss:$9 sm:$0xff] %v2660
        %3446 = vst [vmem:[%s3375] ss:$9 sm:$0xff] %v2661
        %3447 = vst [vmem:[%s3377] ss:$9 sm:$0xff] %v2662
        %3448 = vst [vmem:[%s3379] ss:$9 sm:$0xff] %v2499
        %3449 = vst [vmem:[%s3381] ss:$9 sm:$0xff] %v2663
        %3450 = vst [vmem:[%s3383] ss:$9 sm:$0xff] %v2664
        %3451 = vst [vmem:[%s3385] ss:$9 sm:$0xff] %v2665
        %v3452 = vld [vmem:[#allocation1] sm:$0xff]
        %3453 = vst [vmem:[#allocation1] ss:$9 sm:$0xff] %v2666
        %3454 = vst [vmem:[%s3373] ss:$9 sm:$0xff] %v2667
        %3455 = vst [vmem:[%s3375] ss:$9 sm:$0xff] %v2668
        %v3456 = vld [vmem:[#allocation1] sm:$0xff]
        %3457 = vrot.lane.b32.xlu0 %v3387, 24
        %v3458 = vpop.permute.xlu0 %3457
        %3459 = vrot.lane.b32.xlu0 %v3391, 24
        %v3460 = vpop.permute.xlu0 %3459
        %3461 = vrot.lane.b32.xlu0 %v3400, 24
        %v3462 = vpop.permute.xlu0 %3461
        %3463 = vrot.lane.b32.xlu0 %v3404, 24
        %v3464 = vpop.permute.xlu0 %3463
        %3465 = vrot.lane.b32.xlu0 %v3413, 24
        %v3466 = vpop.permute.xlu0 %3465
        %3467 = vrot.lane.b32.xlu0 %v3417, 24
        %v3468 = vpop.permute.xlu0 %3467
        %3469 = vrot.lane.b32.xlu0 %v3426, 24
        %v3470 = vpop.permute.xlu0 %3469
        %3471 = vrot.lane.b32.xlu0 %v3430, 24
        %v3472 = vpop.permute.xlu0 %3471
        %3473 = vrot.lane.b32.xlu0 %v3439, 24
        %v3474 = vpop.permute.xlu0 %3473
        %3475 = vrot.lane.b32.xlu0 %v3443, 24
        %v3476 = vpop.permute.xlu0 %3475
        %3477 = vrot.lane.b32.xlu0 %v3452, 24
        %v3478 = vpop.permute.xlu0 %3477
        %3479 = vrot.lane.b32.xlu0 %v3456, 24
        %v3480 = vpop.permute.xlu0 %3479
        %3493 = vst [vmem:[#allocation1] ss:$9 sm:$0xff] %v2546
        %s3494 = scalar_lea.vmem [#allocation1], 1
        %3495 = vst [vmem:[%s3494] ss:$9 sm:$0xff] %v2547
        %s3496 = scalar_lea.vmem [#allocation1], 2
        %3497 = vst [vmem:[%s3496] ss:$9 sm:$0xff] %v2548
        %s3498 = scalar_lea.vmem [#allocation1], 3
        %3499 = vst [vmem:[%s3498] ss:$9 sm:$0xff] %v2549
        %s3500 = scalar_lea.vmem [#allocation1], 4
        %3501 = vst [vmem:[%s3500] ss:$9 sm:$0xff] %v2550
        %s3502 = scalar_lea.vmem [#allocation1], 5
        %3503 = vst [vmem:[%s3502] ss:$9 sm:$0xff] %v2483
        %s3504 = scalar_lea.vmem [#allocation1], 6
        %3505 = vst [vmem:[%s3504] ss:$9 sm:$0xff] %v2551
        %s3506 = scalar_lea.vmem [#allocation1], 7
        %3507 = vst [vmem:[%s3506] ss:$9 sm:$0xff] %v2552
        %v3508 = vld [vmem:[#allocation1] sm:$0xff]
        %3509 = vst [vmem:[#allocation1] ss:$9 sm:$0xff] %v2553
        %3510 = vst [vmem:[%s3494] ss:$9 sm:$0xff] %v2554
        %3511 = vst [vmem:[%s3496] ss:$9 sm:$0xff] %v2555
        %v3512 = vld [vmem:[#allocation1] sm:$0xff]
        %3513 = vst [vmem:[#allocation1] ss:$9 sm:$0xff] %v2569
        %3514 = vst [vmem:[%s3494] ss:$9 sm:$0xff] %v2570
        %3515 = vst [vmem:[%s3496] ss:$9 sm:$0xff] %v2571
        %3516 = vst [vmem:[%s3498] ss:$9 sm:$0xff] %v2486
        %3517 = vst [vmem:[%s3500] ss:$9 sm:$0xff] %v2572
        %3518 = vst [vmem:[%s3502] ss:$9 sm:$0xff] %v2573
        %3519 = vst [vmem:[%s3504] ss:$9 sm:$0xff] %v2574
        %3520 = vst [vmem:[%s3506] ss:$9 sm:$0xff] %v2575
        %v3521 = vld [vmem:[#allocation1] sm:$0xff]
        %3522 = vst [vmem:[#allocation1] ss:$9 sm:$0xff] %v2576
        %3523 = vst [vmem:[%s3494] ss:$9 sm:$0xff] %v2577
        %3524 = vst [vmem:[%s3496] ss:$9 sm:$0xff] %v2578
        %v3525 = vld [vmem:[#allocation1] sm:$0xff]
        %3526 = vst [vmem:[#allocation1] ss:$9 sm:$0xff] %v2592
        %3527 = vst [vmem:[%s3494] ss:$9 sm:$0xff] %v2489
        %3528 = vst [vmem:[%s3496] ss:$9 sm:$0xff] %v2593
        %3529 = vst [vmem:[%s3498] ss:$9 sm:$0xff] %v2594
        %3530 = vst [vmem:[%s3500] ss:$9 sm:$0xff] %v2595
        %3531 = vst [vmem:[%s3502] ss:$9 sm:$0xff] %v2596
        %3532 = vst [vmem:[%s3504] ss:$9 sm:$0xff] %v2597
        %3533 = vst [vmem:[%s3506] ss:$9 sm:$0xff] %v2598
        %v3534 = vld [vmem:[#allocation1] sm:$0xff]
        %3535 = vst [vmem:[#allocation1] ss:$9 sm:$0xff] %v2599
        %3536 = vst [vmem:[%s3494] ss:$9 sm:$0xff] %v2490
        %3537 = vst [vmem:[%s3496] ss:$9 sm:$0xff] %v2600
        %v3538 = vld [vmem:[#allocation1] sm:$0xff]
        %3539 = vst [vmem:[#allocation1] ss:$9 sm:$0xff] %v2614
        %3540 = vst [vmem:[%s3494] ss:$9 sm:$0xff] %v2615
        %3541 = vst [vmem:[%s3496] ss:$9 sm:$0xff] %v2616
        %3542 = vst [vmem:[%s3498] ss:$9 sm:$0xff] %v2617
        %3543 = vst [vmem:[%s3500] ss:$9 sm:$0xff] %v2618
        %3544 = vst [vmem:[%s3502] ss:$9 sm:$0xff] %v2619
        %3545 = vst [vmem:[%s3504] ss:$9 sm:$0xff] %v2620
        %3546 = vst [vmem:[%s3506] ss:$9 sm:$0xff] %v2493
        %v3547 = vld [vmem:[#allocation1] sm:$0xff]
        %3548 = vst [vmem:[#allocation1] ss:$9 sm:$0xff] %v2621
        %3549 = vst [vmem:[%s3494] ss:$9 sm:$0xff] %v2622
        %3550 = vst [vmem:[%s3496] ss:$9 sm:$0xff] %v2623
        %v3551 = vld [vmem:[#allocation1] sm:$0xff]
        %3552 = vst [vmem:[#allocation1] ss:$9 sm:$0xff] %v2637
        %3553 = vst [vmem:[%s3494] ss:$9 sm:$0xff] %v2638
        %3554 = vst [vmem:[%s3496] ss:$9 sm:$0xff] %v2639
        %3555 = vst [vmem:[%s3498] ss:$9 sm:$0xff] %v2640
        %3556 = vst [vmem:[%s3500] ss:$9 sm:$0xff] %v2641
        %3557 = vst [vmem:[%s3502] ss:$9 sm:$0xff] %v2496
        %3558 = vst [vmem:[%s3504] ss:$9 sm:$0xff] %v2642
        %3559 = vst [vmem:[%s3506] ss:$9 sm:$0xff] %v2643
        %v3560 = vld [vmem:[#allocation1] sm:$0xff]
        %3561 = vst [vmem:[#allocation1] ss:$9 sm:$0xff] %v2644
        %3562 = vst [vmem:[%s3494] ss:$9 sm:$0xff] %v2645
        %3563 = vst [vmem:[%s3496] ss:$9 sm:$0xff] %v2646
        %v3564 = vld [vmem:[#allocation1] sm:$0xff]
        %3565 = vst [vmem:[#allocation1] ss:$9 sm:$0xff] %v2660
        %3566 = vst [vmem:[%s3494] ss:$9 sm:$0xff] %v2661
        %3567 = vst [vmem:[%s3496] ss:$9 sm:$0xff] %v2662
        %3568 = vst [vmem:[%s3498] ss:$9 sm:$0xff] %v2499
        %3569 = vst [vmem:[%s3500] ss:$9 sm:$0xff] %v2663
        %3570 = vst [vmem:[%s3502] ss:$9 sm:$0xff] %v2664
        %3571 = vst [vmem:[%s3504] ss:$9 sm:$0xff] %v2665
        %3572 = vst [vmem:[%s3506] ss:$9 sm:$0xff] %v2666
        %v3573 = vld [vmem:[#allocation1] sm:$0xff]
        %3574 = vst [vmem:[#allocation1] ss:$9 sm:$0xff] %v2667
        %3575 = vst [vmem:[%s3494] ss:$9 sm:$0xff] %v2668
        %3576 = vst [vmem:[%s3496] ss:$9 sm:$0xff] %v2669
        %v3577 = vld [vmem:[#allocation1] sm:$0xff]
        %3578 = vrot.lane.b32.xlu0 %v3508, 28
        %v3579 = vpop.permute.xlu0 %3578
        %3580 = vrot.lane.b32.xlu0 %v3512, 28
        %v3581 = vpop.permute.xlu0 %3580
        %3582 = vrot.lane.b32.xlu0 %v3521, 28
        %v3583 = vpop.permute.xlu0 %3582
        %3584 = vrot.lane.b32.xlu0 %v3525, 28
        %v3585 = vpop.permute.xlu0 %3584
        %3586 = vrot.lane.b32.xlu0 %v3534, 28
        %v3587 = vpop.permute.xlu0 %3586
        %3588 = vrot.lane.b32.xlu0 %v3538, 28
        %v3589 = vpop.permute.xlu0 %3588
        %3590 = vrot.lane.b32.xlu0 %v3547, 28
        %v3591 = vpop.permute.xlu0 %3590
        %3592 = vrot.lane.b32.xlu0 %v3551, 28
        %v3593 = vpop.permute.xlu0 %3592
        %3594 = vrot.lane.b32.xlu0 %v3560, 28
        %v3595 = vpop.permute.xlu0 %3594
        %3596 = vrot.lane.b32.xlu0 %v3564, 28
        %v3597 = vpop.permute.xlu0 %3596
        %3598 = vrot.lane.b32.xlu0 %v3573, 28
        %v3599 = vpop.permute.xlu0 %3598
        %3600 = vrot.lane.b32.xlu0 %v3577, 28
        %v3601 = vpop.permute.xlu0 %3600
        %3614 = vst [vmem:[#allocation1] ss:$9 sm:$0xff] %v2547
        %s3615 = scalar_lea.vmem [#allocation1], 1
        %3616 = vst [vmem:[%s3615] ss:$9 sm:$0xff] %v2548
        %s3617 = scalar_lea.vmem [#allocation1], 2
        %3618 = vst [vmem:[%s3617] ss:$9 sm:$0xff] %v2549
        %s3619 = scalar_lea.vmem [#allocation1], 3
        %3620 = vst [vmem:[%s3619] ss:$9 sm:$0xff] %v2550
        %s3621 = scalar_lea.vmem [#allocation1], 4
        %3622 = vst [vmem:[%s3621] ss:$9 sm:$0xff] %v2483
        %s3623 = scalar_lea.vmem [#allocation1], 5
        %3624 = vst [vmem:[%s3623] ss:$9 sm:$0xff] %v2551
        %s3625 = scalar_lea.vmem [#allocation1], 6
        %3626 = vst [vmem:[%s3625] ss:$9 sm:$0xff] %v2552
        %s3627 = scalar_lea.vmem [#allocation1], 7
        %3628 = vst [vmem:[%s3627] ss:$9 sm:$0xff] %v2553
        %v3629 = vld [vmem:[#allocation1] sm:$0xff]
        %3630 = vst [vmem:[#allocation1] ss:$9 sm:$0xff] %v2554
        %3631 = vst [vmem:[%s3615] ss:$9 sm:$0xff] %v2555
        %3632 = vst [vmem:[%s3617] ss:$9 sm:$0xff] %v2556
        %v3633 = vld [vmem:[#allocation1] sm:$0xff]
        %3634 = vst [vmem:[#allocation1] ss:$9 sm:$0xff] %v2570
        %3635 = vst [vmem:[%s3615] ss:$9 sm:$0xff] %v2571
        %3636 = vst [vmem:[%s3617] ss:$9 sm:$0xff] %v2486
        %3637 = vst [vmem:[%s3619] ss:$9 sm:$0xff] %v2572
        %3638 = vst [vmem:[%s3621] ss:$9 sm:$0xff] %v2573
        %3639 = vst [vmem:[%s3623] ss:$9 sm:$0xff] %v2574
        %3640 = vst [vmem:[%s3625] ss:$9 sm:$0xff] %v2575
        %3641 = vst [vmem:[%s3627] ss:$9 sm:$0xff] %v2576
        %v3642 = vld [vmem:[#allocation1] sm:$0xff]
        %3643 = vst [vmem:[#allocation1] ss:$9 sm:$0xff] %v2577
        %3644 = vst [vmem:[%s3615] ss:$9 sm:$0xff] %v2578
        %3645 = vst [vmem:[%s3617] ss:$9 sm:$0xff] %v2487
        %v3646 = vld [vmem:[#allocation1] sm:$0xff]
        %3647 = vst [vmem:[#allocation1] ss:$9 sm:$0xff] %v2489
        %3648 = vst [vmem:[%s3615] ss:$9 sm:$0xff] %v2593
        %3649 = vst [vmem:[%s3617] ss:$9 sm:$0xff] %v2594
        %3650 = vst [vmem:[%s3619] ss:$9 sm:$0xff] %v2595
        %3651 = vst [vmem:[%s3621] ss:$9 sm:$0xff] %v2596
        %3652 = vst [vmem:[%s3623] ss:$9 sm:$0xff] %v2597
        %3653 = vst [vmem:[%s3625] ss:$9 sm:$0xff] %v2598
        %3654 = vst [vmem:[%s3627] ss:$9 sm:$0xff] %v2599
        %v3655 = vld [vmem:[#allocation1] sm:$0xff]
        %3656 = vst [vmem:[#allocation1] ss:$9 sm:$0xff] %v2490
        %3657 = vst [vmem:[%s3615] ss:$9 sm:$0xff] %v2600
        %3658 = vst [vmem:[%s3617] ss:$9 sm:$0xff] %v2601
        %v3659 = vld [vmem:[#allocation1] sm:$0xff]
        %3660 = vst [vmem:[#allocation1] ss:$9 sm:$0xff] %v2615
        %3661 = vst [vmem:[%s3615] ss:$9 sm:$0xff] %v2616
        %3662 = vst [vmem:[%s3617] ss:$9 sm:$0xff] %v2617
        %3663 = vst [vmem:[%s3619] ss:$9 sm:$0xff] %v2618
        %3664 = vst [vmem:[%s3621] ss:$9 sm:$0xff] %v2619
        %3665 = vst [vmem:[%s3623] ss:$9 sm:$0xff] %v2620
        %3666 = vst [vmem:[%s3625] ss:$9 sm:$0xff] %v2493
        %3667 = vst [vmem:[%s3627] ss:$9 sm:$0xff] %v2621
        %v3668 = vld [vmem:[#allocation1] sm:$0xff]
        %3669 = vst [vmem:[#allocation1] ss:$9 sm:$0xff] %v2622
        %3670 = vst [vmem:[%s3615] ss:$9 sm:$0xff] %v2623
        %3671 = vst [vmem:[%s3617] ss:$9 sm:$0xff] %v2624
        %v3672 = vld [vmem:[#allocation1] sm:$0xff]
        %3673 = vst [vmem:[#allocation1] ss:$9 sm:$0xff] %v2638
        %3674 = vst [vmem:[%s3615] ss:$9 sm:$0xff] %v2639
        %3675 = vst [vmem:[%s3617] ss:$9 sm:$0xff] %v2640
        %3676 = vst [vmem:[%s3619] ss:$9 sm:$0xff] %v2641
        %3677 = vst [vmem:[%s3621] ss:$9 sm:$0xff] %v2496
        %3678 = vst [vmem:[%s3623] ss:$9 sm:$0xff] %v2642
        %3679 = vst [vmem:[%s3625] ss:$9 sm:$0xff] %v2643
        %3680 = vst [vmem:[%s3627] ss:$9 sm:$0xff] %v2644
        %v3681 = vld [vmem:[#allocation1] sm:$0xff]
        %3682 = vst [vmem:[#allocation1] ss:$9 sm:$0xff] %v2645
        %3683 = vst [vmem:[%s3615] ss:$9 sm:$0xff] %v2646
        %3684 = vst [vmem:[%s3617] ss:$9 sm:$0xff] %v2647
        %v3685 = vld [vmem:[#allocation1] sm:$0xff]
        %3686 = vst [vmem:[#allocation1] ss:$9 sm:$0xff] %v2661
        %3687 = vst [vmem:[%s3615] ss:$9 sm:$0xff] %v2662
        %3688 = vst [vmem:[%s3617] ss:$9 sm:$0xff] %v2499
        %3689 = vst [vmem:[%s3619] ss:$9 sm:$0xff] %v2663
        %3690 = vst [vmem:[%s3621] ss:$9 sm:$0xff] %v2664
        %3691 = vst [vmem:[%s3623] ss:$9 sm:$0xff] %v2665
        %3692 = vst [vmem:[%s3625] ss:$9 sm:$0xff] %v2666
        %3693 = vst [vmem:[%s3627] ss:$9 sm:$0xff] %v2667
        %v3694 = vld [vmem:[#allocation1] sm:$0xff]
        %3695 = vst [vmem:[#allocation1] ss:$9 sm:$0xff] %v2668
        %3696 = vst [vmem:[%s3615] ss:$9 sm:$0xff] %v2669
        %3697 = vst [vmem:[%s3617] ss:$9 sm:$0xff] %v2500
        %v3698 = vld [vmem:[#allocation1] sm:$0xff]
        %3699 = vrot.lane.b32.xlu0 %v3629, 32
        %v3700 = vpop.permute.xlu0 %3699
        %3701 = vrot.lane.b32.xlu0 %v3633, 32
        %v3702 = vpop.permute.xlu0 %3701
        %3703 = vrot.lane.b32.xlu0 %v3642, 32
        %v3704 = vpop.permute.xlu0 %3703
        %3705 = vrot.lane.b32.xlu0 %v3646, 32
        %v3706 = vpop.permute.xlu0 %3705
        %3707 = vrot.lane.b32.xlu0 %v3655, 32
        %v3708 = vpop.permute.xlu0 %3707
        %3709 = vrot.lane.b32.xlu0 %v3659, 32
        %v3710 = vpop.permute.xlu0 %3709
        %3711 = vrot.lane.b32.xlu0 %v3668, 32
        %v3712 = vpop.permute.xlu0 %3711
        %3713 = vrot.lane.b32.xlu0 %v3672, 32
        %v3714 = vpop.permute.xlu0 %3713
        %3715 = vrot.lane.b32.xlu0 %v3681, 32
        %v3716 = vpop.permute.xlu0 %3715
        %3717 = vrot.lane.b32.xlu0 %v3685, 32
        %v3718 = vpop.permute.xlu0 %3717
        %3719 = vrot.lane.b32.xlu0 %v3694, 32
        %v3720 = vpop.permute.xlu0 %3719
        %3721 = vrot.lane.b32.xlu0 %v3698, 32
        %v3722 = vpop.permute.xlu0 %3721
        %v3735 = vsel %vm1658, %v2685, %v2853
        %v3736 = vsel %vm1658, %v2689, %v2855
        %v3737 = vsel %vm1658, %v2698, %v2857
        %v3738 = vsel %vm1658, %v2702, %v2859
        %v3739 = vsel %vm1658, %v2711, %v2861
        %v3740 = vsel %vm1658, %v2715, %v2863
        %v3741 = vsel %vm1658, %v2724, %v2865
        %v3742 = vsel %vm1658, %v2728, %v2867
        %v3743 = vsel %vm1658, %v2737, %v2869
        %v3744 = vsel %vm1658, %v2741, %v2871
        %v3745 = vsel %vm1658, %v2750, %v2873
        %v3746 = vsel %vm1658, %v2754, %v2875
        %v3747 = vsel %vm1766, %v3735, %v2974
        %v3748 = vsel %vm1766, %v3736, %v2976
        %v3749 = vsel %vm1766, %v3737, %v2978
        %v3750 = vsel %vm1766, %v3738, %v2980
        %v3751 = vsel %vm1766, %v3739, %v2982
        %v3752 = vsel %vm1766, %v3740, %v2984
        %v3753 = vsel %vm1766, %v3741, %v2986
        %v3754 = vsel %vm1766, %v3742, %v2988
        %v3755 = vsel %vm1766, %v3743, %v2990
        %v3756 = vsel %vm1766, %v3744, %v2992
        %v3757 = vsel %vm1766, %v3745, %v2994
        %v3758 = vsel %vm1766, %v3746, %v2996
        %v3759 = vsel %vm1874, %v3747, %v3095
        %v3760 = vsel %vm1874, %v3748, %v3097
        %v3761 = vsel %vm1874, %v3749, %v3099
        %v3762 = vsel %vm1874, %v3750, %v3101
        %v3763 = vsel %vm1874, %v3751, %v3103
        %v3764 = vsel %vm1874, %v3752, %v3105
        %v3765 = vsel %vm1874, %v3753, %v3107
        %v3766 = vsel %vm1874, %v3754, %v3109
        %v3767 = vsel %vm1874, %v3755, %v3111
        %v3768 = vsel %vm1874, %v3756, %v3113
        %v3769 = vsel %vm1874, %v3757, %v3115
        %v3770 = vsel %vm1874, %v3758, %v3117
        %v3771 = vsel %vm2351, %v3759, %v3216
        %v3772 = vsel %vm2351, %v3760, %v3218
        %v3773 = vsel %vm2351, %v3761, %v3220
        %v3774 = vsel %vm2351, %v3762, %v3222
        %v3775 = vsel %vm2351, %v3763, %v3224
        %v3776 = vsel %vm2351, %v3764, %v3226
        %v3777 = vsel %vm2351, %v3765, %v3228
        %v3778 = vsel %vm2351, %v3766, %v3230
        %v3779 = vsel %vm2351, %v3767, %v3232
        %v3780 = vsel %vm2351, %v3768, %v3234
        %v3781 = vsel %vm2351, %v3769, %v3236
        %v3782 = vsel %vm2351, %v3770, %v3238
        %vm3783 = vcmask 162816
        %v3784 = vsel %vm3783, %v3771, %v3337
        %v3785 = vsel %vm3783, %v3772, %v3339
        %v3786 = vsel %vm3783, %v3773, %v3341
        %v3787 = vsel %vm3783, %v3774, %v3343
        %v3788 = vsel %vm3783, %v3775, %v3345
        %v3789 = vsel %vm3783, %v3776, %v3347
        %v3790 = vsel %vm3783, %v3777, %v3349
        %v3791 = vsel %vm3783, %v3778, %v3351
        %v3792 = vsel %vm3783, %v3779, %v3353
        %v3793 = vsel %vm3783, %v3780, %v3355
        %v3794 = vsel %vm3783, %v3781, %v3357
        %v3795 = vsel %vm3783, %v3782, %v3359
        %vm3796 = vcmask 195584
        %v3797 = vsel %vm3796, %v3784, %v3458
        %v3798 = vsel %vm3796, %v3785, %v3460
        %v3799 = vsel %vm3796, %v3786, %v3462
        %v3800 = vsel %vm3796, %v3787, %v3464
        %v3801 = vsel %vm3796, %v3788, %v3466
        %v3802 = vsel %vm3796, %v3789, %v3468
        %v3803 = vsel %vm3796, %v3790, %v3470
        %v3804 = vsel %vm3796, %v3791, %v3472
        %v3805 = vsel %vm3796, %v3792, %v3474
        %v3806 = vsel %vm3796, %v3793, %v3476
        %v3807 = vsel %vm3796, %v3794, %v3478
        %v3808 = vsel %vm3796, %v3795, %v3480
        %vm3809 = vcmask 228352
        %v3810 = vsel %vm3809, %v3797, %v3579
        %v3811 = vsel %vm3809, %v3798, %v3581
        %v3812 = vsel %vm3809, %v3799, %v3583
        %v3813 = vsel %vm3809, %v3800, %v3585
        %v3814 = vsel %vm3809, %v3801, %v3587
        %v3815 = vsel %vm3809, %v3802, %v3589
        %v3816 = vsel %vm3809, %v3803, %v3591
        %v3817 = vsel %vm3809, %v3804, %v3593
        %v3818 = vsel %vm3809, %v3805, %v3595
        %v3819 = vsel %vm3809, %v3806, %v3597
        %v3820 = vsel %vm3809, %v3807, %v3599
        %v3821 = vsel %vm3809, %v3808, %v3601
        %vm3822 = vcmask 261120
        %v3823 = vsel %vm3822, %v3810, %v3700
        %v3824 = vsel %vm3822, %v3811, %v3702
        %v3825 = vsel %vm3822, %v3812, %v3704
        %v3826 = vsel %vm3822, %v3813, %v3706
        %v3827 = vsel %vm3822, %v3814, %v3708
        %v3828 = vsel %vm3822, %v3815, %v3710
        %v3829 = vsel %vm3822, %v3816, %v3712
        %v3830 = vsel %vm3822, %v3817, %v3714
        %v3831 = vsel %vm3822, %v3818, %v3716
        %v3832 = vsel %vm3822, %v3819, %v3718
        %v3833 = vsel %vm3822, %v3820, %v3720
        %v3834 = vsel %vm3822, %v3821, %v3722
        %v3847 = vrot.slane %v3823, 1
        %v3848 = vrot.slane %v3823, 2
        %v3849 = vrot.slane %v3823, 3
        %v3850 = vrot.slane %v3823, 4
        %v3851 = vrot.slane %v3823, 5
        %v3852 = vrot.slane %v3823, 6
        %v3853 = vrot.slane %v3823, 7
        %v3854 = vrot.slane %v3824, 1
        %v3855 = vrot.slane %v3824, 2
        %v3856 = vrot.slane %v3825, 1
        %v3857 = vrot.slane %v3825, 2
        %v3858 = vrot.slane %v3825, 3
        %v3859 = vrot.slane %v3825, 4
        %v3860 = vrot.slane %v3825, 5
        %v3861 = vrot.slane %v3825, 6
        %v3862 = vrot.slane %v3825, 7
        %v3863 = vrot.slane %v3826, 1
        %v3864 = vrot.slane %v3826, 2
        %v3865 = vrot.slane %v3827, 1
        %v3866 = vrot.slane %v3827, 2
        %v3867 = vrot.slane %v3827, 3
        %v3868 = vrot.slane %v3827, 4
        %v3869 = vrot.slane %v3827, 5
        %v3870 = vrot.slane %v3827, 6
        %v3871 = vrot.slane %v3827, 7
        %v3872 = vrot.slane %v3828, 1
        %v3873 = vrot.slane %v3828, 2
        %v3874 = vrot.slane %v3829, 1
        %v3875 = vrot.slane %v3829, 2
        %v3876 = vrot.slane %v3829, 3
        %v3877 = vrot.slane %v3829, 4
        %v3878 = vrot.slane %v3829, 5
        %v3879 = vrot.slane %v3829, 6
        %v3880 = vrot.slane %v3829, 7
        %v3881 = vrot.slane %v3830, 1
        %v3882 = vrot.slane %v3830, 2
        %v3883 = vrot.slane %v3831, 1
        %v3884 = vrot.slane %v3831, 2
        %v3885 = vrot.slane %v3831, 3
        %v3886 = vrot.slane %v3831, 4
        %v3887 = vrot.slane %v3831, 5
        %v3888 = vrot.slane %v3831, 6
        %v3889 = vrot.slane %v3831, 7
        %v3890 = vrot.slane %v3832, 1
        %v3891 = vrot.slane %v3832, 2
        %v3892 = vrot.slane %v3833, 1
        %v3893 = vrot.slane %v3833, 2
        %v3894 = vrot.slane %v3833, 3
        %v3895 = vrot.slane %v3833, 4
        %v3896 = vrot.slane %v3833, 5
        %v3897 = vrot.slane %v3833, 6
        %v3898 = vrot.slane %v3833, 7
        %v3899 = vrot.slane %v3834, 1
        %v3900 = vrot.slane %v3834, 2
        %v3901 = vld [vmem:[%s1 + $0x10] sm:$0xff]
        %v3902 = vld [vmem:[%s1 + $0x18] sm:$0xff]
        %v3903 = vld [vmem:[%s1 + $0x20] sm:$0xff]
        %v3904 = vld [vmem:[%s1 + $0x28] sm:$0xff]
        %v3905 = vld [vmem:[%s1 + $0x30] sm:$0xf]
        %3906 = vst [vmem:[#allocation1] ss:$9 sm:$0xff] %v3823
        %s3907 = scalar_lea.vmem [#allocation1], 1
        %3908 = vst [vmem:[%s3907] ss:$9 sm:$0xff] %v3847
        %s3909 = scalar_lea.vmem [#allocation1], 2
        %3910 = vst [vmem:[%s3909] ss:$9 sm:$0xff] %v3848
        %s3911 = scalar_lea.vmem [#allocation1], 3
        %3912 = vst [vmem:[%s3911] ss:$9 sm:$0xff] %v3849
        %s3913 = scalar_lea.vmem [#allocation1], 4
        %3914 = vst [vmem:[%s3913] ss:$9 sm:$0xff] %v3850
        %s3915 = scalar_lea.vmem [#allocation1], 5
        %3916 = vst [vmem:[%s3915] ss:$9 sm:$0xff] %v3851
        %s3917 = scalar_lea.vmem [#allocation1], 6
        %3918 = vst [vmem:[%s3917] ss:$9 sm:$0xff] %v3852
        %s3919 = scalar_lea.vmem [#allocation1], 7
        %3920 = vst [vmem:[%s3919] ss:$9 sm:$0xff] %v3853
        %v3921 = vld [vmem:[#allocation1] sm:$0xff]
        %3922 = vst [vmem:[#allocation1] ss:$9 sm:$0xff] %v3824
        %3923 = vst [vmem:[%s3907] ss:$9 sm:$0xff] %v3854
        %3924 = vst [vmem:[%s3909] ss:$9 sm:$0xff] %v3855
        %3925 = vst [vmem:[%s3911] ss:$9 sm:$0xff] %v3825
        %3926 = vst [vmem:[%s3913] ss:$9 sm:$0xff] %v3856
        %3927 = vst [vmem:[%s3915] ss:$9 sm:$0xff] %v3857
        %3928 = vst [vmem:[%s3917] ss:$9 sm:$0xff] %v3858
        %3929 = vst [vmem:[%s3919] ss:$9 sm:$0xff] %v3859
        %v3930 = vld [vmem:[#allocation1] sm:$0xff]
        %3931 = vst [vmem:[#allocation1] ss:$9 sm:$0xff] %v3860
        %3932 = vst [vmem:[%s3907] ss:$9 sm:$0xff] %v3861
        %3933 = vst [vmem:[%s3909] ss:$9 sm:$0xff] %v3862
        %3934 = vst [vmem:[%s3911] ss:$9 sm:$0xff] %v3826
        %3935 = vst [vmem:[%s3913] ss:$9 sm:$0xff] %v3863
        %3936 = vst [vmem:[%s3915] ss:$9 sm:$0xff] %v3864
        %3937 = vst [vmem:[%s3917] ss:$9 sm:$0xff] %v3827
        %3938 = vst [vmem:[%s3919] ss:$9 sm:$0xff] %v3865
        %v3939 = vld [vmem:[#allocation1] sm:$0xff]
        %3940 = vst [vmem:[#allocation1] ss:$9 sm:$0xff] %v3866
        %3941 = vst [vmem:[%s3907] ss:$9 sm:$0xff] %v3867
        %3942 = vst [vmem:[%s3909] ss:$9 sm:$0xff] %v3868
        %3943 = vst [vmem:[%s3911] ss:$9 sm:$0xff] %v3869
        %3944 = vst [vmem:[%s3913] ss:$9 sm:$0xff] %v3870
        %3945 = vst [vmem:[%s3915] ss:$9 sm:$0xff] %v3871
        %3946 = vst [vmem:[%s3917] ss:$9 sm:$0xff] %v3828
        %3947 = vst [vmem:[%s3919] ss:$9 sm:$0xff] %v3872
        %v3948 = vld [vmem:[#allocation1] sm:$0xff]
        %3949 = vst [vmem:[#allocation1] ss:$9 sm:$0xff] %v3873
        %3950 = vst [vmem:[%s3907] ss:$9 sm:$0xff] %v3829
        %3951 = vst [vmem:[%s3909] ss:$9 sm:$0xff] %v3874
        %3952 = vst [vmem:[%s3911] ss:$9 sm:$0xff] %v3875
        %3953 = vst [vmem:[%s3913] ss:$9 sm:$0xff] %v3876
        %3954 = vst [vmem:[%s3915] ss:$9 sm:$0xff] %v3877
        %3955 = vst [vmem:[%s3917] ss:$9 sm:$0xff] %v3878
        %3956 = vst [vmem:[%s3919] ss:$9 sm:$0xff] %v3879
        %v3957 = vld [vmem:[#allocation1] sm:$0xff]
        %3958 = vst [vmem:[#allocation1] ss:$9 sm:$0xff] %v3880
        %3959 = vst [vmem:[%s3907] ss:$9 sm:$0xff] %v3830
        %3960 = vst [vmem:[%s3909] ss:$9 sm:$0xff] %v3881
        %3961 = vst [vmem:[%s3911] ss:$9 sm:$0xff] %v3882
        %3962 = vst [vmem:[%s3913] ss:$9 sm:$0xff] %v3831
        %3963 = vst [vmem:[%s3915] ss:$9 sm:$0xff] %v3883
        %3964 = vst [vmem:[%s3917] ss:$9 sm:$0xff] %v3884
        %3965 = vst [vmem:[%s3919] ss:$9 sm:$0xff] %v3885
        %v3966 = vld [vmem:[#allocation1] sm:$0xff]
        %3967 = vst [vmem:[#allocation1] ss:$9 sm:$0xff] %v3886
        %3968 = vst [vmem:[%s3907] ss:$9 sm:$0xff] %v3887
        %3969 = vst [vmem:[%s3909] ss:$9 sm:$0xff] %v3888
        %3970 = vst [vmem:[%s3911] ss:$9 sm:$0xff] %v3889
        %3971 = vst [vmem:[%s3913] ss:$9 sm:$0xff] %v3832
        %3972 = vst [vmem:[%s3915] ss:$9 sm:$0xff] %v3890
        %3973 = vst [vmem:[%s3917] ss:$9 sm:$0xff] %v3891
        %3974 = vst [vmem:[%s3919] ss:$9 sm:$0xff] %v3833
        %v3975 = vld [vmem:[#allocation1] sm:$0xff]
        %3976 = vst [vmem:[#allocation1] ss:$9 sm:$0xff] %v3892
        %3977 = vst [vmem:[%s3907] ss:$9 sm:$0xff] %v3893
        %3978 = vst [vmem:[%s3909] ss:$9 sm:$0xff] %v3894
        %3979 = vst [vmem:[%s3911] ss:$9 sm:$0xff] %v3895
        %3980 = vst [vmem:[%s3913] ss:$9 sm:$0xff] %v3896
        %3981 = vst [vmem:[%s3915] ss:$9 sm:$0xff] %v3897
        %3982 = vst [vmem:[%s3917] ss:$9 sm:$0xff] %v3898
        %3983 = vst [vmem:[%s3919] ss:$9 sm:$0xff] %v3834
        %v3984 = vld [vmem:[#allocation1] sm:$0xff]
        %3985 = vst [vmem:[#allocation1] ss:$9 sm:$0xff] %v3899
        %3986 = vst [vmem:[%s3907] ss:$9 sm:$0xff] %v3900
        %v3987 = vld [vmem:[#allocation1] sm:$0xff]
        %vm3988 = vcmask 293888
        %v3989 = vsel %vm3988, %v3921, 0
        %v3991 = vsel %vm3988, %v3930, 0
        %v3993 = vsel %vm3988, %v3939, 0
        %v3995 = vsel %vm3988, %v3948, 0
        %v3997 = vsel %vm3988, %v3957, 0
        %v3999 = vsel %vm3988, %v3966, 0
        %v4001 = vsel %vm3988, %v3975, 0
        %v4003 = vsel %vm3988, %v3984, 0
        %v4005 = vsel %vm3988, %v3987, 0
        %vm4007 = vcmask 1043456
        %v4009 = vsel %vm4007, %v3905, 0
        %4011 = vmatpush.msra.mxu0 0.0
        %4012 = vmatpush.msra.mxu0 0.0
        %4013 = vmatpush.msra.mxu0 0.0
        %4014 = vmatpush.msra.mxu0 0.0
        %4015 = vmatpush.msra.mxu0 0.0
        %4016 = vmatpush.msra.mxu0 0.0
        %4017 = vmatpush.msra.mxu0 0.0
        %4018 = vmatpush.msra.mxu0 0.0
        %4019 = vmatpush.msra.mxu0 0.0
        %4020 = vmatpush.msra.mxu0 0.0
        %4021 = vmatpush.msra.mxu0 0.0
        %4022 = vmatpush.msra.mxu0 %v4009
        %4023 = vmatpush.msra.mxu0 %v3904
        %4024 = vmatpush.msra.mxu0 %v3903
        %4025 = vmatpush.msra.mxu0 %v3902
        %4026 = vmatpush.msra.mxu0 %v3901
        %4027 = vmatmul.f32.gmra.mxu0 %v3989
        %v4028 = vpop.f32.mrf.mxu0
        %v4029 = vadd.f32 0.0, %v4028
        %4030 = vmatmul.f32.gmra.mxu0 %v3991
        %v4031 = vpop.f32.mrf.mxu0
        %v4032 = vadd.f32 0.0, %v4031
        %4033 = vmatmul.f32.gmra.mxu0 %v3993
        %v4034 = vpop.f32.mrf.mxu0
        %v4035 = vadd.f32 0.0, %v4034
        %4036 = vmatmul.f32.gmra.mxu0 %v3995
        %v4037 = vpop.f32.mrf.mxu0
        %v4038 = vadd.f32 0.0, %v4037
        %4039 = vmatmul.f32.gmra.mxu0 %v3997
        %v4040 = vpop.f32.mrf.mxu0
        %v4041 = vadd.f32 0.0, %v4040
        %4042 = vmatmul.f32.gmra.mxu0 %v3999
        %v4043 = vpop.f32.mrf.mxu0
        %v4044 = vadd.f32 0.0, %v4043
        %4045 = vmatmul.f32.gmra.mxu0 %v4001
        %v4046 = vpop.f32.mrf.mxu0
        %v4047 = vadd.f32 0.0, %v4046
        %4048 = vmatmul.f32.gmra.mxu0 %v4003
        %v4049 = vpop.f32.mrf.mxu0
        %v4050 = vadd.f32 0.0, %v4049
        %4051 = vmatmul.f32.gmra.mxu0 %v4005
        %v4052 = vpop.f32.mrf.mxu0
        %v4053 = vadd.f32 0.0, %v4052
        %4054 = vdwg.mxu0
        %v4055 = vmax.f32 %v4029, 0.0
        %v4056 = vmax.f32 %v4032, 0.0
        %v4057 = vmax.f32 %v4035, 0.0
        %v4058 = vmax.f32 %v4038, 0.0
        %v4059 = vmax.f32 %v4041, 0.0
        %v4060 = vmax.f32 %v4044, 0.0
        %v4061 = vmax.f32 %v4047, 0.0
        %v4062 = vmax.f32 %v4050, 0.0
        %v4063 = vmax.f32 %v4053, 0.0
        %v4073 = vrot.slane %v4055, 1
        %v4074 = vrot.slane %v4055, 2
        %v4075 = vrot.slane %v4055, 3
        %v4076 = vrot.slane %v4055, 4
        %v4077 = vrot.slane %v4055, 5
        %v4078 = vrot.slane %v4055, 6
        %v4079 = vrot.slane %v4055, 7
        %v4080 = vrot.slane %v4056, 1
        %v4081 = vrot.slane %v4056, 2
        %v4082 = vrot.slane %v4056, 3
        %v4083 = vrot.slane %v4056, 4
        %v4084 = vrot.slane %v4056, 5
        %v4085 = vrot.slane %v4056, 6
        %v4086 = vrot.slane %v4056, 7
        %v4087 = vrot.slane %v4057, 1
        %v4088 = vrot.slane %v4057, 2
        %v4089 = vrot.slane %v4057, 3
        %v4090 = vrot.slane %v4057, 4
        %v4091 = vrot.slane %v4057, 5
        %v4092 = vrot.slane %v4057, 6
        %v4093 = vrot.slane %v4057, 7
        %v4094 = vrot.slane %v4058, 1
        %v4095 = vrot.slane %v4058, 2
        %v4096 = vrot.slane %v4058, 3
        %v4097 = vrot.slane %v4058, 4
        %v4098 = vrot.slane %v4058, 5
        %v4099 = vrot.slane %v4058, 6
        %v4100 = vrot.slane %v4058, 7
        %v4101 = vrot.slane %v4059, 1
        %v4102 = vrot.slane %v4059, 2
        %v4103 = vrot.slane %v4059, 3
        %v4104 = vrot.slane %v4059, 4
        %v4105 = vrot.slane %v4059, 5
        %v4106 = vrot.slane %v4059, 6
        %v4107 = vrot.slane %v4059, 7
        %v4108 = vrot.slane %v4060, 1
        %v4109 = vrot.slane %v4060, 2
        %v4110 = vrot.slane %v4060, 3
        %v4111 = vrot.slane %v4060, 4
        %v4112 = vrot.slane %v4060, 5
        %v4113 = vrot.slane %v4060, 6
        %v4114 = vrot.slane %v4060, 7
        %v4115 = vrot.slane %v4061, 1
        %v4116 = vrot.slane %v4061, 2
        %v4117 = vrot.slane %v4061, 3
        %v4118 = vrot.slane %v4061, 4
        %v4119 = vrot.slane %v4061, 5
        %v4120 = vrot.slane %v4061, 6
        %v4121 = vrot.slane %v4061, 7
        %v4122 = vrot.slane %v4062, 1
        %v4123 = vrot.slane %v4062, 2
        %v4124 = vrot.slane %v4062, 3
        %v4125 = vrot.slane %v4062, 4
        %v4126 = vrot.slane %v4062, 5
        %v4127 = vrot.slane %v4062, 6
        %v4128 = vrot.slane %v4062, 7
        %v4129 = vrot.slane %v4063, 1
        %4130 = vst [vmem:[#allocation1] ss:$9 sm:$0xff] %v4055
        %s4131 = scalar_lea.vmem [#allocation1], 1
        %4132 = vst [vmem:[%s4131] ss:$9 sm:$0xff] %v4073
        %s4133 = scalar_lea.vmem [#allocation1], 2
        %4134 = vst [vmem:[%s4133] ss:$9 sm:$0xff] %v4074
        %s4135 = scalar_lea.vmem [#allocation1], 3
        %4136 = vst [vmem:[%s4135] ss:$9 sm:$0xff] %v4075
        %s4137 = scalar_lea.vmem [#allocation1], 4
        %4138 = vst [vmem:[%s4137] ss:$9 sm:$0xff] %v4076
        %s4139 = scalar_lea.vmem [#allocation1], 5
        %4140 = vst [vmem:[%s4139] ss:$9 sm:$0xff] %v4077
        %s4141 = scalar_lea.vmem [#allocation1], 6
        %4142 = vst [vmem:[%s4141] ss:$9 sm:$0xff] %v4078
        %s4143 = scalar_lea.vmem [#allocation1], 7
        %4144 = vst [vmem:[%s4143] ss:$9 sm:$0xff] %v4079
        %v4145 = vld [vmem:[#allocation1] sm:$0xff]
        %4146 = vst [vmem:[#allocation1] ss:$9 sm:$0xff] %v4092
        %4147 = vst [vmem:[%s4131] ss:$9 sm:$0xff] %v4093
        %4148 = vst [vmem:[%s4133] ss:$9 sm:$0xff] %v4058
        %4149 = vst [vmem:[%s4135] ss:$9 sm:$0xff] %v4094
        %4150 = vst [vmem:[%s4137] ss:$9 sm:$0xff] %v4095
        %4151 = vst [vmem:[%s4139] ss:$9 sm:$0xff] %v4096
        %4152 = vst [vmem:[%s4141] ss:$9 sm:$0xff] %v4097
        %4153 = vst [vmem:[%s4143] ss:$9 sm:$0xff] %v4098
        %v4154 = vld [vmem:[#allocation1] sm:$0xff]
        %4157 = vst [vmem:[#allocation1] ss:$9 sm:$0xff] %v4073
        %s4158 = scalar_lea.vmem [#allocation1], 1
        %4159 = vst [vmem:[%s4158] ss:$9 sm:$0xff] %v4074
        %s4160 = scalar_lea.vmem [#allocation1], 2
        %4161 = vst [vmem:[%s4160] ss:$9 sm:$0xff] %v4075
        %s4162 = scalar_lea.vmem [#allocation1], 3
        %4163 = vst [vmem:[%s4162] ss:$9 sm:$0xff] %v4076
        %s4164 = scalar_lea.vmem [#allocation1], 4
        %4165 = vst [vmem:[%s4164] ss:$9 sm:$0xff] %v4077
        %s4166 = scalar_lea.vmem [#allocation1], 5
        %4167 = vst [vmem:[%s4166] ss:$9 sm:$0xff] %v4078
        %s4168 = scalar_lea.vmem [#allocation1], 6
        %4169 = vst [vmem:[%s4168] ss:$9 sm:$0xff] %v4079
        %s4170 = scalar_lea.vmem [#allocation1], 7
        %4171 = vst [vmem:[%s4170] ss:$9 sm:$0xff] %v4056
        %v4172 = vld [vmem:[#allocation1] sm:$0xff]
        %4173 = vst [vmem:[#allocation1] ss:$9 sm:$0xff] %v4093
        %4174 = vst [vmem:[%s4158] ss:$9 sm:$0xff] %v4058
        %4175 = vst [vmem:[%s4160] ss:$9 sm:$0xff] %v4094
        %4176 = vst [vmem:[%s4162] ss:$9 sm:$0xff] %v4095
        %4177 = vst [vmem:[%s4164] ss:$9 sm:$0xff] %v4096
        %4178 = vst [vmem:[%s4166] ss:$9 sm:$0xff] %v4097
        %4179 = vst [vmem:[%s4168] ss:$9 sm:$0xff] %v4098
        %4180 = vst [vmem:[%s4170] ss:$9 sm:$0xff] %v4099
        %v4181 = vld [vmem:[#allocation1] sm:$0xff]
        %4182 = vrot.lane.b32.xlu0 %v4172, 8
        %v4183 = vpop.permute.xlu0 %4182
        %4184 = vrot.lane.b32.xlu0 %v4181, 8
        %v4185 = vpop.permute.xlu0 %4184
        %4188 = vst [vmem:[#allocation1] ss:$9 sm:$0xff] %v4074
        %s4189 = scalar_lea.vmem [#allocation1], 1
        %4190 = vst [vmem:[%s4189] ss:$9 sm:$0xff] %v4075
        %s4191 = scalar_lea.vmem [#allocation1], 2
        %4192 = vst [vmem:[%s4191] ss:$9 sm:$0xff] %v4076
        %s4193 = scalar_lea.vmem [#allocation1], 3
        %4194 = vst [vmem:[%s4193] ss:$9 sm:$0xff] %v4077
        %s4195 = scalar_lea.vmem [#allocation1], 4
        %4196 = vst [vmem:[%s4195] ss:$9 sm:$0xff] %v4078
        %s4197 = scalar_lea.vmem [#allocation1], 5
        %4198 = vst [vmem:[%s4197] ss:$9 sm:$0xff] %v4079
        %s4199 = scalar_lea.vmem [#allocation1], 6
        %4200 = vst [vmem:[%s4199] ss:$9 sm:$0xff] %v4056
        %s4201 = scalar_lea.vmem [#allocation1], 7
        %4202 = vst [vmem:[%s4201] ss:$9 sm:$0xff] %v4080
        %v4203 = vld [vmem:[#allocation1] sm:$0xff]
        %4204 = vst [vmem:[#allocation1] ss:$9 sm:$0xff] %v4058
        %4205 = vst [vmem:[%s4189] ss:$9 sm:$0xff] %v4094
        %4206 = vst [vmem:[%s4191] ss:$9 sm:$0xff] %v4095
        %4207 = vst [vmem:[%s4193] ss:$9 sm:$0xff] %v4096
        %4208 = vst [vmem:[%s4195] ss:$9 sm:$0xff] %v4097
        %4209 = vst [vmem:[%s4197] ss:$9 sm:$0xff] %v4098
        %4210 = vst [vmem:[%s4199] ss:$9 sm:$0xff] %v4099
        %4211 = vst [vmem:[%s4201] ss:$9 sm:$0xff] %v4100
        %v4212 = vld [vmem:[#allocation1] sm:$0xff]
        %4213 = vrot.lane.b32.xlu0 %v4203, 16
        %v4214 = vpop.permute.xlu0 %4213
        %4215 = vrot.lane.b32.xlu0 %v4212, 16
        %v4216 = vpop.permute.xlu0 %4215
        %4219 = vst [vmem:[#allocation1] ss:$9 sm:$0xff] %v4075
        %s4220 = scalar_lea.vmem [#allocation1], 1
        %4221 = vst [vmem:[%s4220] ss:$9 sm:$0xff] %v4076
        %s4222 = scalar_lea.vmem [#allocation1], 2
        %4223 = vst [vmem:[%s4222] ss:$9 sm:$0xff] %v4077
        %s4224 = scalar_lea.vmem [#allocation1], 3
        %4225 = vst [vmem:[%s4224] ss:$9 sm:$0xff] %v4078
        %s4226 = scalar_lea.vmem [#allocation1], 4
        %4227 = vst [vmem:[%s4226] ss:$9 sm:$0xff] %v4079
        %s4228 = scalar_lea.vmem [#allocation1], 5
        %4229 = vst [vmem:[%s4228] ss:$9 sm:$0xff] %v4056
        %s4230 = scalar_lea.vmem [#allocation1], 6
        %4231 = vst [vmem:[%s4230] ss:$9 sm:$0xff] %v4080
        %s4232 = scalar_lea.vmem [#allocation1], 7
        %4233 = vst [vmem:[%s4232] ss:$9 sm:$0xff] %v4081
        %v4234 = vld [vmem:[#allocation1] sm:$0xff]
        %4235 = vst [vmem:[#allocation1] ss:$9 sm:$0xff] %v4094
        %4236 = vst [vmem:[%s4220] ss:$9 sm:$0xff] %v4095
        %4237 = vst [vmem:[%s4222] ss:$9 sm:$0xff] %v4096
        %4238 = vst [vmem:[%s4224] ss:$9 sm:$0xff] %v4097
        %4239 = vst [vmem:[%s4226] ss:$9 sm:$0xff] %v4098
        %4240 = vst [vmem:[%s4228] ss:$9 sm:$0xff] %v4099
        %4241 = vst [vmem:[%s4230] ss:$9 sm:$0xff] %v4100
        %4242 = vst [vmem:[%s4232] ss:$9 sm:$0xff] %v4059
        %v4243 = vld [vmem:[#allocation1] sm:$0xff]
        %4244 = vrot.lane.b32.xlu0 %v4234, 24
        %v4245 = vpop.permute.xlu0 %4244
        %4246 = vrot.lane.b32.xlu0 %v4243, 24
        %v4247 = vpop.permute.xlu0 %4246
        %4250 = vst [vmem:[#allocation1] ss:$9 sm:$0xff] %v4082
        %s4251 = scalar_lea.vmem [#allocation1], 1
        %4252 = vst [vmem:[%s4251] ss:$9 sm:$0xff] %v4083
        %s4253 = scalar_lea.vmem [#allocation1], 2
        %4254 = vst [vmem:[%s4253] ss:$9 sm:$0xff] %v4084
        %s4255 = scalar_lea.vmem [#allocation1], 3
        %4256 = vst [vmem:[%s4255] ss:$9 sm:$0xff] %v4085
        %s4257 = scalar_lea.vmem [#allocation1], 4
        %4258 = vst [vmem:[%s4257] ss:$9 sm:$0xff] %v4086
        %s4259 = scalar_lea.vmem [#allocation1], 5
        %4260 = vst [vmem:[%s4259] ss:$9 sm:$0xff] %v4057
        %s4261 = scalar_lea.vmem [#allocation1], 6
        %4262 = vst [vmem:[%s4261] ss:$9 sm:$0xff] %v4087
        %s4263 = scalar_lea.vmem [#allocation1], 7
        %4264 = vst [vmem:[%s4263] ss:$9 sm:$0xff] %v4088
        %v4265 = vld [vmem:[#allocation1] sm:$0xff]
        %4266 = vst [vmem:[#allocation1] ss:$9 sm:$0xff] %v4101
        %4267 = vst [vmem:[%s4251] ss:$9 sm:$0xff] %v4102
        %4268 = vst [vmem:[%s4253] ss:$9 sm:$0xff] %v4103
        %4269 = vst [vmem:[%s4255] ss:$9 sm:$0xff] %v4104
        %4270 = vst [vmem:[%s4257] ss:$9 sm:$0xff] %v4105
        %4271 = vst [vmem:[%s4259] ss:$9 sm:$0xff] %v4106
        %4272 = vst [vmem:[%s4261] ss:$9 sm:$0xff] %v4107
        %4273 = vst [vmem:[%s4263] ss:$9 sm:$0xff] %v4060
        %v4274 = vld [vmem:[#allocation1] sm:$0xff]
        %4275 = vrot.lane.b32.xlu0 %v4265, 32
        %v4276 = vpop.permute.xlu0 %4275
        %4277 = vrot.lane.b32.xlu0 %v4274, 32
        %v4278 = vpop.permute.xlu0 %4277
        %4281 = vst [vmem:[#allocation1] ss:$9 sm:$0xff] %v4083
        %s4282 = scalar_lea.vmem [#allocation1], 1
        %4283 = vst [vmem:[%s4282] ss:$9 sm:$0xff] %v4084
        %s4284 = scalar_lea.vmem [#allocation1], 2
        %4285 = vst [vmem:[%s4284] ss:$9 sm:$0xff] %v4085
        %s4286 = scalar_lea.vmem [#allocation1], 3
        %4287 = vst [vmem:[%s4286] ss:$9 sm:$0xff] %v4086
        %s4288 = scalar_lea.vmem [#allocation1], 4
        %4289 = vst [vmem:[%s4288] ss:$9 sm:$0xff] %v4057
        %s4290 = scalar_lea.vmem [#allocation1], 5
        %4291 = vst [vmem:[%s4290] ss:$9 sm:$0xff] %v4087
        %s4292 = scalar_lea.vmem [#allocation1], 6
        %4293 = vst [vmem:[%s4292] ss:$9 sm:$0xff] %v4088
        %s4294 = scalar_lea.vmem [#allocation1], 7
        %4295 = vst [vmem:[%s4294] ss:$9 sm:$0xff] %v4089
        %v4296 = vld [vmem:[#allocation1] sm:$0xff]
        %4297 = vst [vmem:[#allocation1] ss:$9 sm:$0xff] %v4102
        %4298 = vst [vmem:[%s4282] ss:$9 sm:$0xff] %v4103
        %4299 = vst [vmem:[%s4284] ss:$9 sm:$0xff] %v4104
        %4300 = vst [vmem:[%s4286] ss:$9 sm:$0xff] %v4105
        %4301 = vst [vmem:[%s4288] ss:$9 sm:$0xff] %v4106
        %4302 = vst [vmem:[%s4290] ss:$9 sm:$0xff] %v4107
        %4303 = vst [vmem:[%s4292] ss:$9 sm:$0xff] %v4060
        %4304 = vst [vmem:[%s4294] ss:$9 sm:$0xff] %v4108
        %v4305 = vld [vmem:[#allocation1] sm:$0xff]
        %4306 = vrot.lane.b32.xlu0 %v4296, 40
        %v4307 = vpop.permute.xlu0 %4306
        %4308 = vrot.lane.b32.xlu0 %v4305, 40
        %v4309 = vpop.permute.xlu0 %4308
        %4312 = vst [vmem:[#allocation1] ss:$9 sm:$0xff] %v4084
        %s4313 = scalar_lea.vmem [#allocation1], 1
        %4314 = vst [vmem:[%s4313] ss:$9 sm:$0xff] %v4085
        %s4315 = scalar_lea.vmem [#allocation1], 2
        %4316 = vst [vmem:[%s4315] ss:$9 sm:$0xff] %v4086
        %s4317 = scalar_lea.vmem [#allocation1], 3
        %4318 = vst [vmem:[%s4317] ss:$9 sm:$0xff] %v4057
        %s4319 = scalar_lea.vmem [#allocation1], 4
        %4320 = vst [vmem:[%s4319] ss:$9 sm:$0xff] %v4087
        %s4321 = scalar_lea.vmem [#allocation1], 5
        %4322 = vst [vmem:[%s4321] ss:$9 sm:$0xff] %v4088
        %s4323 = scalar_lea.vmem [#allocation1], 6
        %4324 = vst [vmem:[%s4323] ss:$9 sm:$0xff] %v4089
        %s4325 = scalar_lea.vmem [#allocation1], 7
        %4326 = vst [vmem:[%s4325] ss:$9 sm:$0xff] %v4090
        %v4327 = vld [vmem:[#allocation1] sm:$0xff]
        %4328 = vst [vmem:[#allocation1] ss:$9 sm:$0xff] %v4103
        %4329 = vst [vmem:[%s4313] ss:$9 sm:$0xff] %v4104
        %4330 = vst [vmem:[%s4315] ss:$9 sm:$0xff] %v4105
        %4331 = vst [vmem:[%s4317] ss:$9 sm:$0xff] %v4106
        %4332 = vst [vmem:[%s4319] ss:$9 sm:$0xff] %v4107
        %4333 = vst [vmem:[%s4321] ss:$9 sm:$0xff] %v4060
        %4334 = vst [vmem:[%s4323] ss:$9 sm:$0xff] %v4108
        %4335 = vst [vmem:[%s4325] ss:$9 sm:$0xff] %v4109
        %v4336 = vld [vmem:[#allocation1] sm:$0xff]
        %4337 = vrot.lane.b32.xlu0 %v4327, 48
        %v4338 = vpop.permute.xlu0 %4337
        %4339 = vrot.lane.b32.xlu0 %v4336, 48
        %v4340 = vpop.permute.xlu0 %4339
        %4343 = vst [vmem:[#allocation1] ss:$9 sm:$0xff] %v4085
        %s4344 = scalar_lea.vmem [#allocation1], 1
        %4345 = vst [vmem:[%s4344] ss:$9 sm:$0xff] %v4086
        %s4346 = scalar_lea.vmem [#allocation1], 2
        %4347 = vst [vmem:[%s4346] ss:$9 sm:$0xff] %v4057
        %s4348 = scalar_lea.vmem [#allocation1], 3
        %4349 = vst [vmem:[%s4348] ss:$9 sm:$0xff] %v4087
        %s4350 = scalar_lea.vmem [#allocation1], 4
        %4351 = vst [vmem:[%s4350] ss:$9 sm:$0xff] %v4088
        %s4352 = scalar_lea.vmem [#allocation1], 5
        %4353 = vst [vmem:[%s4352] ss:$9 sm:$0xff] %v4089
        %s4354 = scalar_lea.vmem [#allocation1], 6
        %4355 = vst [vmem:[%s4354] ss:$9 sm:$0xff] %v4090
        %s4356 = scalar_lea.vmem [#allocation1], 7
        %4357 = vst [vmem:[%s4356] ss:$9 sm:$0xff] %v4091
        %v4358 = vld [vmem:[#allocation1] sm:$0xff]
        %4359 = vst [vmem:[#allocation1] ss:$9 sm:$0xff] %v4104
        %4360 = vst [vmem:[%s4344] ss:$9 sm:$0xff] %v4105
        %4361 = vst [vmem:[%s4346] ss:$9 sm:$0xff] %v4106
        %4362 = vst [vmem:[%s4348] ss:$9 sm:$0xff] %v4107
        %4363 = vst [vmem:[%s4350] ss:$9 sm:$0xff] %v4060
        %4364 = vst [vmem:[%s4352] ss:$9 sm:$0xff] %v4108
        %4365 = vst [vmem:[%s4354] ss:$9 sm:$0xff] %v4109
        %4366 = vst [vmem:[%s4356] ss:$9 sm:$0xff] %v4110
        %v4367 = vld [vmem:[#allocation1] sm:$0xff]
        %4368 = vrot.lane.b32.xlu0 %v4358, 56
        %v4369 = vpop.permute.xlu0 %4368
        %4370 = vrot.lane.b32.xlu0 %v4367, 56
        %v4371 = vpop.permute.xlu0 %4370
        %4374 = vst [vmem:[#allocation1] ss:$9 sm:$0xff] %v4092
        %s4375 = scalar_lea.vmem [#allocation1], 1
        %4376 = vst [vmem:[%s4375] ss:$9 sm:$0xff] %v4093
        %s4377 = scalar_lea.vmem [#allocation1], 2
        %4378 = vst [vmem:[%s4377] ss:$9 sm:$0xff] %v4058
        %s4379 = scalar_lea.vmem [#allocation1], 3
        %4380 = vst [vmem:[%s4379] ss:$9 sm:$0xff] %v4094
        %s4381 = scalar_lea.vmem [#allocation1], 4
        %4382 = vst [vmem:[%s4381] ss:$9 sm:$0xff] %v4095
        %s4383 = scalar_lea.vmem [#allocation1], 5
        %4384 = vst [vmem:[%s4383] ss:$9 sm:$0xff] %v4096
        %s4385 = scalar_lea.vmem [#allocation1], 6
        %4386 = vst [vmem:[%s4385] ss:$9 sm:$0xff] %v4097
        %s4387 = scalar_lea.vmem [#allocation1], 7
        %4388 = vst [vmem:[%s4387] ss:$9 sm:$0xff] %v4098
        %v4389 = vld [vmem:[#allocation1] sm:$0xff]
        %4390 = vst [vmem:[#allocation1] ss:$9 sm:$0xff] %v4111
        %4391 = vst [vmem:[%s4375] ss:$9 sm:$0xff] %v4112
        %4392 = vst [vmem:[%s4377] ss:$9 sm:$0xff] %v4113
        %4393 = vst [vmem:[%s4379] ss:$9 sm:$0xff] %v4114
        %4394 = vst [vmem:[%s4381] ss:$9 sm:$0xff] %v4061
        %4395 = vst [vmem:[%s4383] ss:$9 sm:$0xff] %v4115
        %4396 = vst [vmem:[%s4385] ss:$9 sm:$0xff] %v4116
        %4397 = vst [vmem:[%s4387] ss:$9 sm:$0xff] %v4117
        %v4398 = vld [vmem:[#allocation1] sm:$0xff]
        %4399 = vrot.lane.b32.xlu0 %v4389, 64
        %v4400 = vpop.permute.xlu0 %4399
        %4401 = vrot.lane.b32.xlu0 %v4398, 64
        %v4402 = vpop.permute.xlu0 %4401
        %4405 = vst [vmem:[#allocation1] ss:$9 sm:$0xff] %v4093
        %s4406 = scalar_lea.vmem [#allocation1], 1
        %4407 = vst [vmem:[%s4406] ss:$9 sm:$0xff] %v4058
        %s4408 = scalar_lea.vmem [#allocation1], 2
        %4409 = vst [vmem:[%s4408] ss:$9 sm:$0xff] %v4094
        %s4410 = scalar_lea.vmem [#allocation1], 3
        %4411 = vst [vmem:[%s4410] ss:$9 sm:$0xff] %v4095
        %s4412 = scalar_lea.vmem [#allocation1], 4
        %4413 = vst [vmem:[%s4412] ss:$9 sm:$0xff] %v4096
        %s4414 = scalar_lea.vmem [#allocation1], 5
        %4415 = vst [vmem:[%s4414] ss:$9 sm:$0xff] %v4097
        %s4416 = scalar_lea.vmem [#allocation1], 6
        %4417 = vst [vmem:[%s4416] ss:$9 sm:$0xff] %v4098
        %s4418 = scalar_lea.vmem [#allocation1], 7
        %4419 = vst [vmem:[%s4418] ss:$9 sm:$0xff] %v4099
        %v4420 = vld [vmem:[#allocation1] sm:$0xff]
        %4421 = vst [vmem:[#allocation1] ss:$9 sm:$0xff] %v4112
        %4422 = vst [vmem:[%s4406] ss:$9 sm:$0xff] %v4113
        %4423 = vst [vmem:[%s4408] ss:$9 sm:$0xff] %v4114
        %4424 = vst [vmem:[%s4410] ss:$9 sm:$0xff] %v4061
        %4425 = vst [vmem:[%s4412] ss:$9 sm:$0xff] %v4115
        %4426 = vst [vmem:[%s4414] ss:$9 sm:$0xff] %v4116
        %4427 = vst [vmem:[%s4416] ss:$9 sm:$0xff] %v4117
        %4428 = vst [vmem:[%s4418] ss:$9 sm:$0xff] %v4118
        %v4429 = vld [vmem:[#allocation1] sm:$0xff]
        %4430 = vrot.lane.b32.xlu0 %v4420, 72
        %v4431 = vpop.permute.xlu0 %4430
        %4432 = vrot.lane.b32.xlu0 %v4429, 72
        %v4433 = vpop.permute.xlu0 %4432
        %4436 = vst [vmem:[#allocation1] ss:$9 sm:$0xff] %v4058
        %s4437 = scalar_lea.vmem [#allocation1], 1
        %4438 = vst [vmem:[%s4437] ss:$9 sm:$0xff] %v4094
        %s4439 = scalar_lea.vmem [#allocation1], 2
        %4440 = vst [vmem:[%s4439] ss:$9 sm:$0xff] %v4095
        %s4441 = scalar_lea.vmem [#allocation1], 3
        %4442 = vst [vmem:[%s4441] ss:$9 sm:$0xff] %v4096
        %s4443 = scalar_lea.vmem [#allocation1], 4
        %4444 = vst [vmem:[%s4443] ss:$9 sm:$0xff] %v4097
        %s4445 = scalar_lea.vmem [#allocation1], 5
        %4446 = vst [vmem:[%s4445] ss:$9 sm:$0xff] %v4098
        %s4447 = scalar_lea.vmem [#allocation1], 6
        %4448 = vst [vmem:[%s4447] ss:$9 sm:$0xff] %v4099
        %s4449 = scalar_lea.vmem [#allocation1], 7
        %4450 = vst [vmem:[%s4449] ss:$9 sm:$0xff] %v4100
        %v4451 = vld [vmem:[#allocation1] sm:$0xff]
        %4452 = vst [vmem:[#allocation1] ss:$9 sm:$0xff] %v4113
        %4453 = vst [vmem:[%s4437] ss:$9 sm:$0xff] %v4114
        %4454 = vst [vmem:[%s4439] ss:$9 sm:$0xff] %v4061
        %4455 = vst [vmem:[%s4441] ss:$9 sm:$0xff] %v4115
        %4456 = vst [vmem:[%s4443] ss:$9 sm:$0xff] %v4116
        %4457 = vst [vmem:[%s4445] ss:$9 sm:$0xff] %v4117
        %4458 = vst [vmem:[%s4447] ss:$9 sm:$0xff] %v4118
        %4459 = vst [vmem:[%s4449] ss:$9 sm:$0xff] %v4119
        %v4460 = vld [vmem:[#allocation1] sm:$0xff]
        %4461 = vrot.lane.b32.xlu0 %v4451, 80
        %v4462 = vpop.permute.xlu0 %4461
        %4463 = vrot.lane.b32.xlu0 %v4460, 80
        %v4464 = vpop.permute.xlu0 %4463
        %4467 = vst [vmem:[#allocation1] ss:$9 sm:$0xff] %v4094
        %s4468 = scalar_lea.vmem [#allocation1], 1
        %4469 = vst [vmem:[%s4468] ss:$9 sm:$0xff] %v4095
        %s4470 = scalar_lea.vmem [#allocation1], 2
        %4471 = vst [vmem:[%s4470] ss:$9 sm:$0xff] %v4096
        %s4472 = scalar_lea.vmem [#allocation1], 3
        %4473 = vst [vmem:[%s4472] ss:$9 sm:$0xff] %v4097
        %s4474 = scalar_lea.vmem [#allocation1], 4
        %4475 = vst [vmem:[%s4474] ss:$9 sm:$0xff] %v4098
        %s4476 = scalar_lea.vmem [#allocation1], 5
        %4477 = vst [vmem:[%s4476] ss:$9 sm:$0xff] %v4099
        %s4478 = scalar_lea.vmem [#allocation1], 6
        %4479 = vst [vmem:[%s4478] ss:$9 sm:$0xff] %v4100
        %s4480 = scalar_lea.vmem [#allocation1], 7
        %4481 = vst [vmem:[%s4480] ss:$9 sm:$0xff] %v4059
        %v4482 = vld [vmem:[#allocation1] sm:$0xff]
        %4483 = vst [vmem:[#allocation1] ss:$9 sm:$0xff] %v4114
        %4484 = vst [vmem:[%s4468] ss:$9 sm:$0xff] %v4061
        %4485 = vst [vmem:[%s4470] ss:$9 sm:$0xff] %v4115
        %4486 = vst [vmem:[%s4472] ss:$9 sm:$0xff] %v4116
        %4487 = vst [vmem:[%s4474] ss:$9 sm:$0xff] %v4117
        %4488 = vst [vmem:[%s4476] ss:$9 sm:$0xff] %v4118
        %4489 = vst [vmem:[%s4478] ss:$9 sm:$0xff] %v4119
        %4490 = vst [vmem:[%s4480] ss:$9 sm:$0xff] %v4120
        %v4491 = vld [vmem:[#allocation1] sm:$0xff]
        %4492 = vrot.lane.b32.xlu0 %v4482, 88
        %v4493 = vpop.permute.xlu0 %4492
        %4494 = vrot.lane.b32.xlu0 %v4491, 88
        %v4495 = vpop.permute.xlu0 %4494
        %4498 = vst [vmem:[#allocation1] ss:$9 sm:$0xff] %v4101
        %s4499 = scalar_lea.vmem [#allocation1], 1
        %4500 = vst [vmem:[%s4499] ss:$9 sm:$0xff] %v4102
        %s4501 = scalar_lea.vmem [#allocation1], 2
        %4502 = vst [vmem:[%s4501] ss:$9 sm:$0xff] %v4103
        %s4503 = scalar_lea.vmem [#allocation1], 3
        %4504 = vst [vmem:[%s4503] ss:$9 sm:$0xff] %v4104
        %s4505 = scalar_lea.vmem [#allocation1], 4
        %4506 = vst [vmem:[%s4505] ss:$9 sm:$0xff] %v4105
        %s4507 = scalar_lea.vmem [#allocation1], 5
        %4508 = vst [vmem:[%s4507] ss:$9 sm:$0xff] %v4106
        %s4509 = scalar_lea.vmem [#allocation1], 6
        %4510 = vst [vmem:[%s4509] ss:$9 sm:$0xff] %v4107
        %s4511 = scalar_lea.vmem [#allocation1], 7
        %4512 = vst [vmem:[%s4511] ss:$9 sm:$0xff] %v4060
        %v4513 = vld [vmem:[#allocation1] sm:$0xff]
        %4514 = vst [vmem:[#allocation1] ss:$9 sm:$0xff] %v4121
        %4515 = vst [vmem:[%s4499] ss:$9 sm:$0xff] %v4062
        %4516 = vst [vmem:[%s4501] ss:$9 sm:$0xff] %v4122
        %4517 = vst [vmem:[%s4503] ss:$9 sm:$0xff] %v4123
        %4518 = vst [vmem:[%s4505] ss:$9 sm:$0xff] %v4124
        %4519 = vst [vmem:[%s4507] ss:$9 sm:$0xff] %v4125
        %4520 = vst [vmem:[%s4509] ss:$9 sm:$0xff] %v4126
        %4521 = vst [vmem:[%s4511] ss:$9 sm:$0xff] %v4127
        %v4522 = vld [vmem:[#allocation1] sm:$0xff]
        %4523 = vrot.lane.b32.xlu0 %v4513, 96
        %v4524 = vpop.permute.xlu0 %4523
        %4525 = vrot.lane.b32.xlu0 %v4522, 96
        %v4526 = vpop.permute.xlu0 %4525
        %4529 = vst [vmem:[#allocation1] ss:$9 sm:$0xff] %v4102
        %s4530 = scalar_lea.vmem [#allocation1], 1
        %4531 = vst [vmem:[%s4530] ss:$9 sm:$0xff] %v4103
        %s4532 = scalar_lea.vmem [#allocation1], 2
        %4533 = vst [vmem:[%s4532] ss:$9 sm:$0xff] %v4104
        %s4534 = scalar_lea.vmem [#allocation1], 3
        %4535 = vst [vmem:[%s4534] ss:$9 sm:$0xff] %v4105
        %s4536 = scalar_lea.vmem [#allocation1], 4
        %4537 = vst [vmem:[%s4536] ss:$9 sm:$0xff] %v4106
        %s4538 = scalar_lea.vmem [#allocation1], 5
        %4539 = vst [vmem:[%s4538] ss:$9 sm:$0xff] %v4107
        %s4540 = scalar_lea.vmem [#allocation1], 6
        %4541 = vst [vmem:[%s4540] ss:$9 sm:$0xff] %v4060
        %s4542 = scalar_lea.vmem [#allocation1], 7
        %4543 = vst [vmem:[%s4542] ss:$9 sm:$0xff] %v4108
        %v4544 = vld [vmem:[#allocation1] sm:$0xff]
        %4545 = vst [vmem:[#allocation1] ss:$9 sm:$0xff] %v4062
        %4546 = vst [vmem:[%s4530] ss:$9 sm:$0xff] %v4122
        %4547 = vst [vmem:[%s4532] ss:$9 sm:$0xff] %v4123
        %4548 = vst [vmem:[%s4534] ss:$9 sm:$0xff] %v4124
        %4549 = vst [vmem:[%s4536] ss:$9 sm:$0xff] %v4125
        %4550 = vst [vmem:[%s4538] ss:$9 sm:$0xff] %v4126
        %4551 = vst [vmem:[%s4540] ss:$9 sm:$0xff] %v4127
        %4552 = vst [vmem:[%s4542] ss:$9 sm:$0xff] %v4128
        %v4553 = vld [vmem:[#allocation1] sm:$0xff]
        %4554 = vrot.lane.b32.xlu0 %v4544, 104
        %v4555 = vpop.permute.xlu0 %4554
        %4556 = vrot.lane.b32.xlu0 %v4553, 104
        %v4557 = vpop.permute.xlu0 %4556
        %4560 = vst [vmem:[#allocation1] ss:$9 sm:$0xff] %v4103
        %s4561 = scalar_lea.vmem [#allocation1], 1
        %4562 = vst [vmem:[%s4561] ss:$9 sm:$0xff] %v4104
        %s4563 = scalar_lea.vmem [#allocation1], 2
        %4564 = vst [vmem:[%s4563] ss:$9 sm:$0xff] %v4105
        %s4565 = scalar_lea.vmem [#allocation1], 3
        %4566 = vst [vmem:[%s4565] ss:$9 sm:$0xff] %v4106
        %s4567 = scalar_lea.vmem [#allocation1], 4
        %4568 = vst [vmem:[%s4567] ss:$9 sm:$0xff] %v4107
        %s4569 = scalar_lea.vmem [#allocation1], 5
        %4570 = vst [vmem:[%s4569] ss:$9 sm:$0xff] %v4060
        %s4571 = scalar_lea.vmem [#allocation1], 6
        %4572 = vst [vmem:[%s4571] ss:$9 sm:$0xff] %v4108
        %s4573 = scalar_lea.vmem [#allocation1], 7
        %4574 = vst [vmem:[%s4573] ss:$9 sm:$0xff] %v4109
        %v4575 = vld [vmem:[#allocation1] sm:$0xff]
        %4576 = vst [vmem:[#allocation1] ss:$9 sm:$0xff] %v4122
        %4577 = vst [vmem:[%s4561] ss:$9 sm:$0xff] %v4123
        %4578 = vst [vmem:[%s4563] ss:$9 sm:$0xff] %v4124
        %4579 = vst [vmem:[%s4565] ss:$9 sm:$0xff] %v4125
        %4580 = vst [vmem:[%s4567] ss:$9 sm:$0xff] %v4126
        %4581 = vst [vmem:[%s4569] ss:$9 sm:$0xff] %v4127
        %4582 = vst [vmem:[%s4571] ss:$9 sm:$0xff] %v4128
        %4583 = vst [vmem:[%s4573] ss:$9 sm:$0xff] %v4063
        %v4584 = vld [vmem:[#allocation1] sm:$0xff]
        %4585 = vrot.lane.b32.xlu0 %v4575, 112
        %v4586 = vpop.permute.xlu0 %4585
        %4587 = vrot.lane.b32.xlu0 %v4584, 112
        %v4588 = vpop.permute.xlu0 %4587
        %4591 = vst [vmem:[#allocation1] ss:$9 sm:$0xff] %v4104
        %s4592 = scalar_lea.vmem [#allocation1], 1
        %4593 = vst [vmem:[%s4592] ss:$9 sm:$0xff] %v4105
        %s4594 = scalar_lea.vmem [#allocation1], 2
        %4595 = vst [vmem:[%s4594] ss:$9 sm:$0xff] %v4106
        %s4596 = scalar_lea.vmem [#allocation1], 3
        %4597 = vst [vmem:[%s4596] ss:$9 sm:$0xff] %v4107
        %s4598 = scalar_lea.vmem [#allocation1], 4
        %4599 = vst [vmem:[%s4598] ss:$9 sm:$0xff] %v4060
        %s4600 = scalar_lea.vmem [#allocation1], 5
        %4601 = vst [vmem:[%s4600] ss:$9 sm:$0xff] %v4108
        %s4602 = scalar_lea.vmem [#allocation1], 6
        %4603 = vst [vmem:[%s4602] ss:$9 sm:$0xff] %v4109
        %s4604 = scalar_lea.vmem [#allocation1], 7
        %4605 = vst [vmem:[%s4604] ss:$9 sm:$0xff] %v4110
        %v4606 = vld [vmem:[#allocation1] sm:$0xff]
        %4607 = vst [vmem:[#allocation1] ss:$9 sm:$0xff] %v4123
        %4608 = vst [vmem:[%s4592] ss:$9 sm:$0xff] %v4124
        %4609 = vst [vmem:[%s4594] ss:$9 sm:$0xff] %v4125
        %4610 = vst [vmem:[%s4596] ss:$9 sm:$0xff] %v4126
        %4611 = vst [vmem:[%s4598] ss:$9 sm:$0xff] %v4127
        %4612 = vst [vmem:[%s4600] ss:$9 sm:$0xff] %v4128
        %4613 = vst [vmem:[%s4602] ss:$9 sm:$0xff] %v4063
        %4614 = vst [vmem:[%s4604] ss:$9 sm:$0xff] %v4129
        %v4615 = vld [vmem:[#allocation1] sm:$0xff]
        %4616 = vrot.lane.b32.xlu0 %v4606, 120
        %v4617 = vpop.permute.xlu0 %4616
        %4618 = vrot.lane.b32.xlu0 %v4615, 120
        %v4619 = vpop.permute.xlu0 %4618
        %v4622 = vsel %vm1766, %v4145, %v4183
        %v4623 = vsel %vm1766, %v4154, %v4185
        %v4624 = vsel %vm2351, %v4622, %v4214
        %v4625 = vsel %vm2351, %v4623, %v4216
        %v4626 = vsel %vm3796, %v4624, %v4245
        %v4627 = vsel %vm3796, %v4625, %v4247
        %v4628 = vsel %vm3822, %v4626, %v4276
        %v4629 = vsel %vm3822, %v4627, %v4278
        %vm4630 = vcmask 326656
        %v4631 = vsel %vm4630, %v4628, %v4307
        %v4632 = vsel %vm4630, %v4629, %v4309
        %vm4633 = vcmask 392192
        %v4634 = vsel %vm4633, %v4631, %v4338
        %v4635 = vsel %vm4633, %v4632, %v4340
        %vm4636 = vcmask 457728
        %v4637 = vsel %vm4636, %v4634, %v4369
        %v4638 = vsel %vm4636, %v4635, %v4371
        %vm4639 = vcmask 523264
        %v4640 = vsel %vm4639, %v4637, %v4400
        %v4641 = vsel %vm4639, %v4638, %v4402
        %vm4642 = vcmask 588800
        %v4643 = vsel %vm4642, %v4640, %v4431
        %v4644 = vsel %vm4642, %v4641, %v4433
        %vm4645 = vcmask 654336
        %v4646 = vsel %vm4645, %v4643, %v4462
        %v4647 = vsel %vm4645, %v4644, %v4464
        %vm4648 = vcmask 719872
        %v4649 = vsel %vm4648, %v4646, %v4493
        %v4650 = vsel %vm4648, %v4647, %v4495
        %vm4651 = vcmask 785408
        %v4652 = vsel %vm4651, %v4649, %v4524
        %v4653 = vsel %vm4651, %v4650, %v4526
        %vm4654 = vcmask 850944
        %v4655 = vsel %vm4654, %v4652, %v4555
        %v4656 = vsel %vm4654, %v4653, %v4557
        %vm4657 = vcmask 916480
        %v4658 = vsel %vm4657, %v4655, %v4586
        %v4659 = vsel %vm4657, %v4656, %v4588
        %vm4660 = vcmask 982016
        %v4661 = vsel %vm4660, %v4658, %v4617
        %v4662 = vsel %vm4660, %v4659, %v4619
        %v4663 = vld [vmem:[%s1 + $0x40] sm:$0xff]
        %v4664 = vld [vmem:[%s1 + $0x48] sm:$0xff]
        %v4665 = vld [vmem:[%s1 + $0x50] sm:$0xff]
        %v4666 = vld [vmem:[%s1 + $0x58] sm:$0xff]
        %v4667 = vld [vmem:[%s1 + $0x60] sm:$0xff]
        %v4668 = vld [vmem:[%s1 + $0x68] sm:$0xff]
        %v4669 = vld [vmem:[%s1 + $0x70] sm:$0xff]
        %v4670 = vld [vmem:[%s1 + $0x78] sm:$0xff]
        %v4671 = vld [vmem:[%s1 + $0x80] sm:$0xff]
        %v4672 = vld [vmem:[%s1 + $0x88] sm:$0xff]
        %v4673 = vld [vmem:[%s1 + $0x90] sm:$0xff]
        %v4674 = vld [vmem:[%s1 + $0x98] sm:$0xff]
        %v4675 = vld [vmem:[%s1 + $0xa0] sm:$0xff]
        %v4676 = vld [vmem:[%s1 + $0xa8] sm:$0xff]
        %v4677 = vld [vmem:[%s1 + $0xb0] sm:$0xff]
        %v4678 = vld [vmem:[%s1 + $0xb8] sm:$0xff]
        %4679 = vmatpush.msra.mxu0 %v4678
        %4680 = vmatpush.msra.mxu0 %v4677
        %4681 = vmatpush.msra.mxu0 %v4676
        %4682 = vmatpush.msra.mxu0 %v4675
        %4683 = vmatpush.msra.mxu0 %v4674
        %4684 = vmatpush.msra.mxu0 %v4673
        %4685 = vmatpush.msra.mxu0 %v4672
        %4686 = vmatpush.msra.mxu0 %v4671
        %4687 = vmatpush.msra.mxu0 %v4670
        %4688 = vmatpush.msra.mxu0 %v4669
        %4689 = vmatpush.msra.mxu0 %v4668
        %4690 = vmatpush.msra.mxu0 %v4667
        %4691 = vmatpush.msra.mxu0 %v4666
        %4692 = vmatpush.msra.mxu0 %v4665
        %4693 = vmatpush.msra.mxu0 %v4664
        %4694 = vmatpush.msra.mxu0 %v4663
        %4695 = vmatmul.f32.gmra.mxu0 %v4661
        %v4696 = vpop.f32.mrf.mxu0
        %v4697 = vadd.f32 0.0, %v4696
        %4698 = vmatmul.f32.gmra.mxu0 %v4662
        %v4699 = vpop.f32.mrf.mxu0
        %v4700 = vadd.f32 0.0, %v4699
        %4701 = vdwg.mxu0
        %v4702 = vmax.f32 %v4697, 0.0
        %v4703 = vmax.f32 %v4700, 0.0
        %v4705 = vrot.slane %v4702, 1
        %4706 = vrot.lane.b32.xlu0 %v4705, 16
        %v4707 = vpop.permute.xlu0 %4706
        %4710 = vrot.lane.b32.xlu0 %v4703, 32
        %v4711 = vpop.permute.xlu0 %4710
        %v4713 = vrot.slane %v4703, 1
        %4714 = vrot.lane.b32.xlu0 %v4713, 48
        %v4715 = vpop.permute.xlu0 %4714
        %v4717 = vsel %vm2351, %v4702, %v4707
        %v4718 = vsel %vm3822, %v4717, %v4711
        %v4719 = vsel %vm4633, %v4718, %v4715
        %v4720 = vld [vmem:[%s2] sm:$0x1]
        %v4722 = vperm.slane %v4720, 0
        %v4724 = vmul.f32 %v4719, %v4722
        %vm4725 = vcmask 522240
        %v4726 = vsel %vm4725, %v4724, 0.0
        %4727 = vadd.xlane.f32.xlu0 %v4726
        %v4728 = vpop.xlane.xlu0 %4727
        %s4729 = sld [smem:[#allocation2]]
        %v4730 = vstv %s4729
        %v4731 = vadd.f32 %v4728, %v4730
        %v4733 = vlaneseq
        %v4734 = vand.u32 %v4733, 127
        %v4735 = vperm.slane %v4731, %v4734
        %vm4737 = vcmask 49152
        %4738 = vst.msk [vmem:[%s190] sm:$0x1] %vm4737, %v4735
        %s4739 = sand.u32 %s116, 1
        %s4740 = scalar_lea.sflag [#allocation4], %s4739
        %s4741 = sand.u32 %s116, 1
        %s4742 = scalar_lea.vmem [#allocation3], %s4741
        // Predicated region
        $region37: #{forward.1} parent=35 // pred_check
          %p4743 = pneg %p126
        $region38: #{forward.1} parent=35 // pred_check_branch
          %4745 = sbr.rel (%p4743) target = $region40
        $region39: #{forward.1} parent=35 // pred_region
          %4747 = vsyncadd %s4740, 0
          %s4748 = scalar_lea.hbm %s4, %s19
          %s4750 = sshll.u32 %s4742, 4
          %s4751 = int_to_ptr.vmem [resolvable:$true] %s4750
          %s4752 = sshll.u32 %s4748, 4
          %s4753 = int_to_ptr.hbm [resolvable:$true] %s4752
          %4755 = dma.vmem_to_hbm [thread:$0]  %s4751, 16, %s4753, %s4740
        $region40: #{forward.1} parent=35 // pred_fallthru
          _
      $region36: #{forward.1} parent=5 // pred_fallthru
        _
      %p4756 = scmp.le.s32.totalorder 2, %s14
      // Predicated region
      $region41: #{forward.1} parent=5 // pred_check
        %p4757 = pneg %p4756
      $region42: #{forward.1} parent=5 // pred_check_branch
        %4759 = sbr.rel (%p4757) target = $region44
      $region43: #{forward.1} parent=5 // pred_region
        %s4760 = ssub.s32 %s14, 2
        // Predicated region
        $region45: #{forward.1} parent=43 // pred_check
          %p4761 = pneg %p132
        $region46: #{forward.1} parent=43 // pred_check_branch
          %4763 = sbr.rel (%p4761) target = $region48
        $region47: #{forward.1} parent=43 // pred_region
          %s4764 = sand.u32 %s117, 1
          %s4765 = scalar_lea.sflag [#allocation4], %s4764
          %s4766 = sand.u32 %s117, 1
          %s4767 = scalar_lea.vmem [#allocation3], %s4766
          %4769 = dma.done %s4765, 16
        $region48: #{forward.1} parent=43 // pred_fallthru
          _
      $region44: #{forward.1} parent=5 // pred_fallthru
        _
    $region6: #{forward.1} parent=1 // loop_footer
      %s18 = sadd.s32 1, %s14
    $region7: #{forward.1} parent=1 // loop_footer_branch
      %13 = sbr.rel target = $region3
    $region8: #{forward.1} parent=1 // loop_exit
      _
    %4770 = vsyncpa [#allocation4], 1
    %s4771 = scalar_lea.sflag [#allocation4], 1
    %4772 = vsyncpa %s4771, 1

</llo_original>
